<compile_context>
chip_gen: v5e
topology: v5e:2x2
jax: 0.10.0
libtpu: 0.0.40
codegen_flags: <defaults>
</compile_context>

<pallas_src>
import functools

import numpy as np
import jax
import jax.numpy as jnp
from jax.experimental import pallas as pl
from jax.experimental.pallas import tpu as pltpu

LANES = 128  # channel slab width (vreg lane count)


def _pad_to(n, m):
    return ((n + m - 1) // m) * m


# ----------------------------------------------------------------------------
# Fused whole-network kernel (one grid step == one graph)
# ----------------------------------------------------------------------------
def sgcn_fused_kernel(*refs, n_conv, n_mlp, n_sh):
    """Entire SGCN forward for one graph.

    ref order (leading graph dim squeezed away by BlockSpec):
      src  [E_pad, 1]      int32  source node per edge (pad rows = N_pad)
      dst  [1, E_pad]      int32  dest   node per edge (pad rows = N_pad)
      ea   [E_pad, S*128]  bf16   lane-dense pre-broadcast spherical harmonics
      x    [N_pad, 128]    f32    node features (lane-padded)
      per conv layer: w_flat [S*128, 128] bf16, w_self [128, 128] bf16, b [1, 128] f32
      per mlp  layer: w      [128, 128]   bf16, b [1, 128] f32
      out  [N_pad, 128]    f32
    """
    src_ref, dst_ref, ea_ref, x_ref = refs[:4]
    pos = 4
    conv_refs = [refs[pos + 3 * l: pos + 3 * l + 3] for l in range(n_conv)]
    pos += 3 * n_conv
    mlp_refs = [refs[pos + 2 * l: pos + 2 * l + 2] for l in range(n_mlp)]
    pos += 2 * n_mlp
    o_ref = refs[pos]

    n_pad = x_ref.shape[0]
    e_pad = ea_ref.shape[0]

    # One-hot gather / scatter operators, built once (hoisted out of the layer
    # loop) from compact int32 edge lists, directly in bf16 (0/1 exact).
    # Padded edges carry index == n_pad which never matches the iota.
    src = src_ref[...]                                          # [E_pad, 1]
    dst = dst_ref[...]                                          # [1, E_pad]
    gat = (jax.lax.broadcasted_iota(jnp.int32, (e_pad, n_pad), 1) == src
           ).astype(jnp.bfloat16)                               # [E_pad, N_pad]
    sca = (jax.lax.broadcasted_iota(jnp.int32, (n_pad, e_pad), 0) == dst
           ).astype(jnp.bfloat16)                               # [N_pad, E_pad]

    ea = ea_ref[...]                                            # [E_pad, S*128] bf16
    x = x_ref[...]                                              # [N_pad, 128] f32

    # ---- spherical conv layers (layer relu == fused F.relu, applied once) ---
    for w_ref, ws_ref, b_ref in conv_refs:
        xb = x.astype(jnp.bfloat16)
        # gather source-node features: xj[e, :] = x[src[e], :] (exact select)
        xj = jnp.dot(gat, xb, preferred_element_type=jnp.float32
                     ).astype(jnp.bfloat16)                     # [E, C]
        # lane-dense bf16 harmonic scaling, then ONE wide MXU dot (K = S*128)
        scaled = jnp.concatenate([xj] * n_sh, axis=1) * ea      # [E, S*C] bf16
        msg = jnp.dot(scaled, w_ref[...],
                      preferred_element_type=jnp.float32)       # [E, C]
        # scatter-add over destination nodes
        agg = jnp.dot(sca, msg.astype(jnp.bfloat16),
                      preferred_element_type=jnp.float32)       # [N, C]
        self_t = jnp.dot(xb, ws_ref[...],
                         preferred_element_type=jnp.float32)    # [N, C]
        # TODO(synk): dropout is identity at inference, omitted.
        x = jnp.maximum(agg + self_t + b_ref[...], 0.0)

    # ---- MLP (eval mode: Linear -> BN(identity) -> ReLU; last layer plain) --
    for i, (w_ref, b_ref) in enumerate(mlp_refs):
        y = jnp.dot(x.astype(jnp.bfloat16), w_ref[...],
                    preferred_element_type=jnp.float32) + b_ref[...]
        if i < n_mlp - 1:
            y = jnp.maximum(y, 0.0)
        x = y

    o_ref[...] = x


# ----------------------------------------------------------------------------
# Host-side wrapper: pad to lane-dense slabs, one pallas_call per graph batch
# ----------------------------------------------------------------------------
def sgcn_forward(conv_params, mlp_params, x, edge_index, edge_attr, n_sh,
                 out_channels):
    """x: [G, N, C_in], edge_index: [G, 2, E] (int32, entries must be < N),
    edge_attr: [G, E, S].  Returns [G, N, out_channels] f32."""
    g, n, c_in = x.shape
    e = edge_index.shape[2]
    n_pad = _pad_to(max(n, 16), 16)        # bf16 sublane packing (pairs of rows)
    e_pad = _pad_to(max(e, 128), 128)

    # Lane-padded node features.
    x_p = jnp.zeros((g, n_pad, LANES), jnp.float32).at[:, :n, :c_in].set(x)
    # Lane-dense pre-broadcast bf16 edge attributes: slab[g, e, s*128+c] = Y_s(e).
    ea_rep = jnp.repeat(edge_attr.astype(jnp.bfloat16), LANES, axis=-1)
    ea_p = jnp.zeros((g, e_pad, n_sh * LANES), jnp.bfloat16).at[:, :e, :].set(ea_rep)
    # Padded edges point at row n_pad (never matches any node's iota).
    src_p = jnp.full((g, e_pad, 1), n_pad, jnp.int32).at[:, :e, 0].set(
        edge_index[:, 0, :])
    dst_p = jnp.full((g, 1, e_pad), n_pad, jnp.int32).at[:, 0, :e].set(
        edge_index[:, 1, :])

    ins = [src_p, dst_p, ea_p, x_p]
    in_specs = [
        pl.BlockSpec((None, e_pad, 1), lambda gi: (gi, 0, 0)),
        pl.BlockSpec((None, 1, e_pad), lambda gi: (gi, 0, 0)),
        pl.BlockSpec((None, e_pad, n_sh * LANES), lambda gi: (gi, 0, 0)),
        pl.BlockSpec((None, n_pad, LANES), lambda gi: (gi, 0, 0)),
    ]
    for (wf, ws, b) in conv_params:
        ins += [wf, ws, b]
        in_specs += [pl.BlockSpec(wf.shape, lambda gi: (0, 0)),
                     pl.BlockSpec(ws.shape, lambda gi: (0, 0)),
                     pl.BlockSpec(b.shape, lambda gi: (0, 0))]
    for (w, b) in mlp_params:
        ins += [w, b]
        in_specs += [pl.BlockSpec(w.shape, lambda gi: (0, 0)),
                     pl.BlockSpec(b.shape, lambda gi: (0, 0))]

    # Advisory cost estimate (per graph, times G).
    flops_per_graph = 0
    for _ in conv_params:
        flops_per_graph += 2 * e_pad * n_pad * LANES               # gather
        flops_per_graph += 2 * e_pad * n_sh * LANES * LANES        # message dot
        flops_per_graph += 2 * n_pad * e_pad * LANES               # scatter-add
        flops_per_graph += 2 * n_pad * LANES * LANES               # self transform
    for _ in mlp_params:
        flops_per_graph += 2 * n_pad * LANES * LANES
    bytes_accessed = (sum(int(a.size) * a.dtype.itemsize for a in ins)
                      + g * n_pad * LANES * 4)
    cost = pl.CostEstimate(flops=g * flops_per_graph, transcendentals=0,
                           bytes_accessed=bytes_accessed)

    out = pl.pallas_call(
        functools.partial(sgcn_fused_kernel, n_conv=len(conv_params),
                          n_mlp=len(mlp_params), n_sh=n_sh),
        out_shape=jax.ShapeDtypeStruct((g, n_pad, LANES), jnp.float32),
        grid=(g,),
        in_specs=in_specs,
        out_specs=pl.BlockSpec((None, n_pad, LANES), lambda gi: (gi, 0, 0)),
        compiler_params=pltpu.CompilerParams(
            dimension_semantics=("parallel",),      # shard graphs across TCs
            vmem_limit_bytes=32 * 1024 * 1024),     # safe on all generations
        cost_estimate=cost,
    )(*ins)
    return out[:, :n, :out_channels]


# ----------------------------------------------------------------------------
# Parameters (logical init) + packing to 128-lane bf16 slabs
# ----------------------------------------------------------------------------
def init_sgcn_params(key, in_channels, hidden_channels_list, mlp_channels_list,
                     order):
    n_sh = (order + 1) ** 2
    params = {"convs": [], "mlp": []}
    chans = [in_channels] + list(hidden_channels_list)
    for c_in, c_out in zip(chans[:-1], chans[1:]):
        key, k1, k2 = jax.random.split(key, 3)
        w = jax.random.normal(k1, (n_sh, c_in, c_out), jnp.float32)
        w = w * (1.0 / (n_sh * c_in) ** 0.5)
        w_self = jax.random.normal(k2, (c_in, c_out), jnp.float32)
        w_self = w_self * (1.0 / c_in ** 0.5)
        b = jnp.zeros((c_out,), jnp.float32)
        params["convs"].append((w, w_self, b))
    if not (len(mlp_channels_list) == 1 and mlp_channels_list[0] == 0):
        for c_in, c_out in zip(mlp_channels_list[:-1], mlp_channels_list[1:]):
            key, k1 = jax.random.split(key)
            w = jax.random.normal(k1, (c_in, c_out), jnp.float32)
            w = w * (1.0 / c_in ** 0.5)
            b = jnp.zeros((c_out,), jnp.float32)
            params["mlp"].append((w, b))
    return params


def pack_params(params, n_sh):
    """Pad every layer to a 128-lane slab; cast MXU operands to bf16."""
    conv_packed = []
    for (w, w_self, b) in params["convs"]:
        c_in, c_out = w_self.shape
        wf = jnp.zeros((n_sh, LANES, LANES), jnp.float32)
        wf = wf.at[:, :c_in, :c_out].set(w)
        wf = wf.reshape(n_sh * LANES, LANES).astype(jnp.bfloat16)
        ws = jnp.zeros((LANES, LANES), jnp.float32)
        ws = ws.at[:c_in, :c_out].set(w_self).astype(jnp.bfloat16)
        bp = jnp.zeros((1, LANES), jnp.float32).at[0, :c_out].set(b)
        conv_packed.append((wf, ws, bp))
    mlp_packed = []
    for (w, b) in params["mlp"]:
        c_in, c_out = w.shape
        wp = jnp.zeros((LANES, LANES), jnp.float32)
        wp = wp.at[:c_in, :c_out].set(w).astype(jnp.bfloat16)
        bp = jnp.zeros((1, LANES), jnp.float32).at[0, :c_out].set(b)
        mlp_packed.append((wp, bp))
    return conv_packed, mlp_packed


# ----------------------------------------------------------------------------
# Pure-JAX reference (bf16-quantized weights/edge_attr to isolate activation
# rounding introduced by the kernel's bf16 MXU operands)
# ----------------------------------------------------------------------------
def sgcn_reference(params, x, edge_index, edge_attr):
    bf = lambda a: a.astype(jnp.bfloat16).astype(jnp.float32)
    h = x
    src, dst = edge_index[0], edge_index[1]
    ea = bf(edge_attr)
    for (w, w_self, b) in params["convs"]:
        xj = h[src]                                               # [E, C_in]
        msg = jnp.einsum("ei,es,sio->eo", xj, ea, bf(w))
        agg = jax.ops.segment_sum(msg, dst, num_segments=h.shape[0])
        h = jax.nn.relu(agg + h @ bf(w_self) + b)
    n_mlp = len(params["mlp"])
    for i, (w, b) in enumerate(params["mlp"]):
        h = h @ bf(w) + b
        if i < n_mlp - 1:
            h = jax.nn.relu(h)
    return h


# ----------------------------------------------------------------------------
if __name__ == "__main__":
    key = jax.random.PRNGKey(0)

    # small, module-consistent shapes; two graphs batched per pallas_call
    n_graphs = 2
    n_nodes = 32
    n_edges = 64
    in_channels = 8
    hidden_channels_list = [16, 32]
    mlp_channels_list = [32, 16, 4]
    order = 2                      # -> (order+1)^2 = 9 harmonics per edge
    dropout = 0.2                  # inference => identity
    non_linearity = "relu"
    n_sh = (order + 1) ** 2

    key, kx, ke, ka, kp = jax.random.split(key, 5)
    x = jax.random.normal(kx, (n_graphs, n_nodes, in_channels), jnp.float32)
    edge_index = jax.random.randint(ke, (n_graphs, 2, n_edges), 0, n_nodes,
                                    dtype=jnp.int32)
    # synthetic "spherical harmonics" edge attributes, shape [G, E, (order+1)^2]
    edge_attr = jax.random.normal(ka, (n_graphs, n_edges, n_sh), jnp.float32)

    params = init_sgcn_params(kp, in_channels, hidden_channels_list,
                              mlp_channels_list, order)
    conv_packed, mlp_packed = pack_params(params, n_sh)

    out_channels = (mlp_channels_list[-1] if params["mlp"]
                    else hidden_channels_list[-1])
    out = sgcn_forward(conv_packed, mlp_packed, x, edge_index, edge_attr,
                       n_sh, out_channels)
    out = jax.block_until_ready(out)
    assert out.shape == (n_graphs, n_nodes, out_channels)
    assert out.dtype == jnp.float32

    # correctness check vs. pure-JAX reference (bf16-rounded activations in
    # the kernel -> loose tolerance)
    for gi in range(n_graphs):
        ref = sgcn_reference(params, x[gi], edge_index[gi], edge_attr[gi])
        np.testing.assert_allclose(np.asarray(out[gi]), np.asarray(ref),
                                   rtol=5e-2, atol=5e-2)

    print("KERNEL_OK")
</pallas_src>

<mosaic_0001>
module attributes {stable_mosaic.version = 11 : i64} {
  func.func @sgcn_fused_kernel(%arg0: i32, %arg1: memref<1x128x1xi32, #tpu.memory_space<vmem>>, %arg2: memref<1x1x128xi32, #tpu.memory_space<vmem>>, %arg3: memref<1x128x1152xbf16, #tpu.memory_space<vmem>>, %arg4: memref<1x32x128xf32, #tpu.memory_space<vmem>>, %arg5: memref<1152x128xbf16, #tpu.memory_space<vmem>>, %arg6: memref<128x128xbf16, #tpu.memory_space<vmem>>, %arg7: memref<1x128xf32, #tpu.memory_space<vmem>>, %arg8: memref<1152x128xbf16, #tpu.memory_space<vmem>>, %arg9: memref<128x128xbf16, #tpu.memory_space<vmem>>, %arg10: memref<1x128xf32, #tpu.memory_space<vmem>>, %arg11: memref<128x128xbf16, #tpu.memory_space<vmem>>, %arg12: memref<1x128xf32, #tpu.memory_space<vmem>>, %arg13: memref<128x128xbf16, #tpu.memory_space<vmem>>, %arg14: memref<1x128xf32, #tpu.memory_space<vmem>>, %arg15: memref<1x32x128xf32, #tpu.memory_space<vmem>>) attributes {dimension_semantics = [#tpu.dimension_semantics<parallel>], iteration_bounds = array<i64: 2>, scalar_prefetch = 0 : i64, scratch_operands = 0 : i64, tpu.core_type = #tpu.core_type<tc>, window_params = [{transform_indices = @transform_0, window_bounds = array<i64: 1, 128, 1>}, {transform_indices = @transform_1, window_bounds = array<i64: 1, 1, 128>}, {transform_indices = @transform_2, window_bounds = array<i64: 1, 128, 1152>}, {transform_indices = @transform_3, window_bounds = array<i64: 1, 32, 128>}, {pipeline_mode = #tpu.pipeline_mode<synchronous>, transform_indices = @transform_4, window_bounds = array<i64: 1152, 128>}, {pipeline_mode = #tpu.pipeline_mode<synchronous>, transform_indices = @transform_5, window_bounds = array<i64: 128, 128>}, {pipeline_mode = #tpu.pipeline_mode<synchronous>, transform_indices = @transform_6, window_bounds = array<i64: 1, 128>}, {pipeline_mode = #tpu.pipeline_mode<synchronous>, transform_indices = @transform_7, window_bounds = array<i64: 1152, 128>}, {pipeline_mode = #tpu.pipeline_mode<synchronous>, transform_indices = @transform_8, window_bounds = array<i64: 128, 128>}, {pipeline_mode = #tpu.pipeline_mode<synchronous>, transform_indices = @transform_9, window_bounds = array<i64: 1, 128>}, {pipeline_mode = #tpu.pipeline_mode<synchronous>, transform_indices = @transform_10, window_bounds = array<i64: 128, 128>}, {pipeline_mode = #tpu.pipeline_mode<synchronous>, transform_indices = @transform_11, window_bounds = array<i64: 1, 128>}, {pipeline_mode = #tpu.pipeline_mode<synchronous>, transform_indices = @transform_12, window_bounds = array<i64: 128, 128>}, {pipeline_mode = #tpu.pipeline_mode<synchronous>, transform_indices = @transform_13, window_bounds = array<i64: 1, 128>}, {transform_indices = @transform_14, window_bounds = array<i64: 1, 32, 128>}]} {
    %c0 = arith.constant 0 : index
    %c0_0 = arith.constant 0 : index
    %c0_1 = arith.constant 0 : index
    %0 = vector.load %arg1[%c0, %c0_0, %c0_1] : memref<1x128x1xi32, #tpu.memory_space<vmem>>, vector<1x128x1xi32>
    %1 = vector.shape_cast %0 : vector<1x128x1xi32> to vector<128x1xi32>
    %c0_2 = arith.constant 0 : index
    %c0_3 = arith.constant 0 : index
    %c0_4 = arith.constant 0 : index
    %2 = vector.load %arg2[%c0_2, %c0_3, %c0_4] : memref<1x1x128xi32, #tpu.memory_space<vmem>>, vector<1x1x128xi32>
    %3 = vector.shape_cast %2 : vector<1x1x128xi32> to vector<1x128xi32>
    %4 = tpu.iota {dimensions = array<i32: 1>} : vector<128x32xi32>
    %5 = vector.broadcast %1 : vector<128x1xi32> to vector<128x32xi32>
    %6 = arith.cmpi eq, %4, %5 : vector<128x32xi32>
    %7 = arith.extui %6 : vector<128x32xi1> to vector<128x32xi32>
    %8 = arith.sitofp %7 : vector<128x32xi32> to vector<128x32xf32>
    %9 = arith.truncf %8 : vector<128x32xf32> to vector<128x32xbf16>
    %10 = tpu.iota {dimensions = array<i32: 0>} : vector<32x128xi32>
    %11 = vector.broadcast %3 : vector<1x128xi32> to vector<32x128xi32>
    %12 = arith.cmpi eq, %10, %11 : vector<32x128xi32>
    %13 = arith.extui %12 : vector<32x128xi1> to vector<32x128xi32>
    %14 = arith.sitofp %13 : vector<32x128xi32> to vector<32x128xf32>
    %15 = arith.truncf %14 : vector<32x128xf32> to vector<32x128xbf16>
    %c0_5 = arith.constant 0 : index
    %c0_6 = arith.constant 0 : index
    %c0_7 = arith.constant 0 : index
    %16 = vector.load %arg3[%c0_5, %c0_6, %c0_7] : memref<1x128x1152xbf16, #tpu.memory_space<vmem>>, vector<1x128x1152xbf16>
    %17 = vector.shape_cast %16 : vector<1x128x1152xbf16> to vector<128x1152xbf16>
    %c0_8 = arith.constant 0 : index
    %c0_9 = arith.constant 0 : index
    %c0_10 = arith.constant 0 : index
    %18 = vector.load %arg4[%c0_8, %c0_9, %c0_10] : memref<1x32x128xf32, #tpu.memory_space<vmem>>, vector<1x32x128xf32>
    %19 = vector.shape_cast %18 : vector<1x32x128xf32> to vector<32x128xf32>
    %20 = arith.truncf %19 : vector<32x128xf32> to vector<32x128xbf16>
    %cst = arith.constant dense<0.000000e+00> : vector<128x128xf32>
    %21 = tpu.matmul %9, %20, %cst {dimension_numbers = #tpu.dot_dimension_numbers<[1], [0], [0], [1], [0, 0, 1, 1], [], []>} : vector<128x32xbf16>, vector<32x128xbf16>, vector<128x128xf32> -> vector<128x128xf32>
    %22 = arith.truncf %21 : vector<128x128xf32> to vector<128x128xbf16>
    %23 = tpu.concatenate %22, %22, %22, %22, %22, %22, %22, %22, %22 in 1 : vector<128x128xbf16>, vector<128x128xbf16>, vector<128x128xbf16>, vector<128x128xbf16>, vector<128x128xbf16>, vector<128x128xbf16>, vector<128x128xbf16>, vector<128x128xbf16>, vector<128x128xbf16> -> vector<128x1152xbf16>
    %24 = arith.mulf %23, %17 : vector<128x1152xbf16>
    %c0_11 = arith.constant 0 : index
    %c0_12 = arith.constant 0 : index
    %25 = vector.load %arg5[%c0_11, %c0_12] : memref<1152x128xbf16, #tpu.memory_space<vmem>>, vector<1152x128xbf16>
    %cst_13 = arith.constant dense<0.000000e+00> : vector<128x128xf32>
    %26 = tpu.matmul %24, %25, %cst_13 {dimension_numbers = #tpu.dot_dimension_numbers<[1], [0], [0], [1], [0, 0, 1, 1], [], []>} : vector<128x1152xbf16>, vector<1152x128xbf16>, vector<128x128xf32> -> vector<128x128xf32>
    %27 = arith.truncf %26 : vector<128x128xf32> to vector<128x128xbf16>
    %cst_14 = arith.constant dense<0.000000e+00> : vector<32x128xf32>
    %28 = tpu.matmul %15, %27, %cst_14 {dimension_numbers = #tpu.dot_dimension_numbers<[1], [0], [0], [1], [0, 0, 1, 1], [], []>} : vector<32x128xbf16>, vector<128x128xbf16>, vector<32x128xf32> -> vector<32x128xf32>
    %c0_15 = arith.constant 0 : index
    %c0_16 = arith.constant 0 : index
    %29 = vector.load %arg6[%c0_15, %c0_16] : memref<128x128xbf16, #tpu.memory_space<vmem>>, vector<128x128xbf16>
    %cst_17 = arith.constant dense<0.000000e+00> : vector<32x128xf32>
    %30 = tpu.matmul %20, %29, %cst_17 {dimension_numbers = #tpu.dot_dimension_numbers<[1], [0], [0], [1], [0, 0, 1, 1], [], []>} : vector<32x128xbf16>, vector<128x128xbf16>, vector<32x128xf32> -> vector<32x128xf32>
    %31 = arith.addf %28, %30 : vector<32x128xf32>
    %c0_18 = arith.constant 0 : index
    %c0_19 = arith.constant 0 : index
    %32 = vector.load %arg7[%c0_18, %c0_19] : memref<1x128xf32, #tpu.memory_space<vmem>>, vector<1x128xf32>
    %33 = vector.broadcast %32 : vector<1x128xf32> to vector<32x128xf32>
    %34 = arith.addf %31, %33 : vector<32x128xf32>
    %cst_20 = arith.constant 0.000000e+00 : f32
    %35 = vector.broadcast %cst_20 : f32 to vector<32x128xf32>
    %36 = arith.maximumf %34, %35 : vector<32x128xf32>
    %37 = arith.truncf %36 : vector<32x128xf32> to vector<32x128xbf16>
    %cst_21 = arith.constant dense<0.000000e+00> : vector<128x128xf32>
    %38 = tpu.matmul %9, %37, %cst_21 {dimension_numbers = #tpu.dot_dimension_numbers<[1], [0], [0], [1], [0, 0, 1, 1], [], []>} : vector<128x32xbf16>, vector<32x128xbf16>, vector<128x128xf32> -> vector<128x128xf32>
    %39 = arith.truncf %38 : vector<128x128xf32> to vector<128x128xbf16>
    %40 = tpu.concatenate %39, %39, %39, %39, %39, %39, %39, %39, %39 in 1 : vector<128x128xbf16>, vector<128x128xbf16>, vector<128x128xbf16>, vector<128x128xbf16>, vector<128x128xbf16>, vector<128x128xbf16>, vector<128x128xbf16>, vector<128x128xbf16>, vector<128x128xbf16> -> vector<128x1152xbf16>
    %41 = arith.mulf %40, %17 : vector<128x1152xbf16>
    %c0_22 = arith.constant 0 : index
    %c0_23 = arith.constant 0 : index
    %42 = vector.load %arg8[%c0_22, %c0_23] : memref<1152x128xbf16, #tpu.memory_space<vmem>>, vector<1152x128xbf16>
    %cst_24 = arith.constant dense<0.000000e+00> : vector<128x128xf32>
    %43 = tpu.matmul %41, %42, %cst_24 {dimension_numbers = #tpu.dot_dimension_numbers<[1], [0], [0], [1], [0, 0, 1, 1], [], []>} : vector<128x1152xbf16>, vector<1152x128xbf16>, vector<128x128xf32> -> vector<128x128xf32>
    %44 = arith.truncf %43 : vector<128x128xf32> to vector<128x128xbf16>
    %cst_25 = arith.constant dense<0.000000e+00> : vector<32x128xf32>
    %45 = tpu.matmul %15, %44, %cst_25 {dimension_numbers = #tpu.dot_dimension_numbers<[1], [0], [0], [1], [0, 0, 1, 1], [], []>} : vector<32x128xbf16>, vector<128x128xbf16>, vector<32x128xf32> -> vector<32x128xf32>
    %c0_26 = arith.constant 0 : index
    %c0_27 = arith.constant 0 : index
    %46 = vector.load %arg9[%c0_26, %c0_27] : memref<128x128xbf16, #tpu.memory_space<vmem>>, vector<128x128xbf16>
    %cst_28 = arith.constant dense<0.000000e+00> : vector<32x128xf32>
    %47 = tpu.matmul %37, %46, %cst_28 {dimension_numbers = #tpu.dot_dimension_numbers<[1], [0], [0], [1], [0, 0, 1, 1], [], []>} : vector<32x128xbf16>, vector<128x128xbf16>, vector<32x128xf32> -> vector<32x128xf32>
    %48 = arith.addf %45, %47 : vector<32x128xf32>
    %c0_29 = arith.constant 0 : index
    %c0_30 = arith.constant 0 : index
    %49 = vector.load %arg10[%c0_29, %c0_30] : memref<1x128xf32, #tpu.memory_space<vmem>>, vector<1x128xf32>
    %50 = vector.broadcast %49 : vector<1x128xf32> to vector<32x128xf32>
    %51 = arith.addf %48, %50 : vector<32x128xf32>
    %cst_31 = arith.constant 0.000000e+00 : f32
    %52 = vector.broadcast %cst_31 : f32 to vector<32x128xf32>
    %53 = arith.maximumf %51, %52 : vector<32x128xf32>
    %54 = arith.truncf %53 : vector<32x128xf32> to vector<32x128xbf16>
    %c0_32 = arith.constant 0 : index
    %c0_33 = arith.constant 0 : index
    %55 = vector.load %arg11[%c0_32, %c0_33] : memref<128x128xbf16, #tpu.memory_space<vmem>>, vector<128x128xbf16>
    %cst_34 = arith.constant dense<0.000000e+00> : vector<32x128xf32>
    %56 = tpu.matmul %54, %55, %cst_34 {dimension_numbers = #tpu.dot_dimension_numbers<[1], [0], [0], [1], [0, 0, 1, 1], [], []>} : vector<32x128xbf16>, vector<128x128xbf16>, vector<32x128xf32> -> vector<32x128xf32>
    %c0_35 = arith.constant 0 : index
    %c0_36 = arith.constant 0 : index
    %57 = vector.load %arg12[%c0_35, %c0_36] : memref<1x128xf32, #tpu.memory_space<vmem>>, vector<1x128xf32>
    %58 = vector.broadcast %57 : vector<1x128xf32> to vector<32x128xf32>
    %59 = arith.addf %56, %58 : vector<32x128xf32>
    %cst_37 = arith.constant 0.000000e+00 : f32
    %60 = vector.broadcast %cst_37 : f32 to vector<32x128xf32>
    %61 = arith.maximumf %59, %60 : vector<32x128xf32>
    %62 = arith.truncf %61 : vector<32x128xf32> to vector<32x128xbf16>
    %c0_38 = arith.constant 0 : index
    %c0_39 = arith.constant 0 : index
    %63 = vector.load %arg13[%c0_38, %c0_39] : memref<128x128xbf16, #tpu.memory_space<vmem>>, vector<128x128xbf16>
    %cst_40 = arith.constant dense<0.000000e+00> : vector<32x128xf32>
    %64 = tpu.matmul %62, %63, %cst_40 {dimension_numbers = #tpu.dot_dimension_numbers<[1], [0], [0], [1], [0, 0, 1, 1], [], []>} : vector<32x128xbf16>, vector<128x128xbf16>, vector<32x128xf32> -> vector<32x128xf32>
    %c0_41 = arith.constant 0 : index
    %c0_42 = arith.constant 0 : index
    %65 = vector.load %arg14[%c0_41, %c0_42] : memref<1x128xf32, #tpu.memory_space<vmem>>, vector<1x128xf32>
    %66 = vector.broadcast %65 : vector<1x128xf32> to vector<32x128xf32>
    %67 = arith.addf %64, %66 : vector<32x128xf32>
    %c0_43 = arith.constant 0 : index
    %c0_44 = arith.constant 0 : index
    %c0_45 = arith.constant 0 : index
    %68 = vector.load %arg15[%c0_43, %c0_44, %c0_45] : memref<1x32x128xf32, #tpu.memory_space<vmem>>, vector<1x32x128xf32>
    %69 = vector.shape_cast %68 : vector<1x32x128xf32> to vector<32x128xf32>
    %70 = vector.shape_cast %67 : vector<32x128xf32> to vector<1x32x128xf32>
    tpu.vector_store %arg15[%c0_43, %c0_44, %c0_45], %70 {strides = array<i32>} : memref<1x32x128xf32, #tpu.memory_space<vmem>>, vector<1x32x128xf32>,
    return
  }
  func.func @transform_0(%arg0: i32) -> (i32, i32, i32) {
    %c0_i32 = arith.constant 0 : i32
    %c0_i32_0 = arith.constant 0 : i32
    %c0_i32_1 = arith.constant 0 : i32
    return %arg0, %c0_i32, %c0_i32_0 : i32, i32, i32
  }
  func.func @transform_1(%arg0: i32) -> (i32, i32, i32) {
    %c0_i32 = arith.constant 0 : i32
    %c0_i32_0 = arith.constant 0 : i32
    %c0_i32_1 = arith.constant 0 : i32
    return %arg0, %c0_i32, %c0_i32_0 : i32, i32, i32
  }
  func.func @transform_2(%arg0: i32) -> (i32, i32, i32) {
    %c0_i32 = arith.constant 0 : i32
    %c0_i32_0 = arith.constant 0 : i32
    %c0_i32_1 = arith.constant 0 : i32
    return %arg0, %c0_i32, %c0_i32_0 : i32, i32, i32
  }
  func.func @transform_3(%arg0: i32) -> (i32, i32, i32) {
    %c0_i32 = arith.constant 0 : i32
    %c0_i32_0 = arith.constant 0 : i32
    %c0_i32_1 = arith.constant 0 : i32
    return %arg0, %c0_i32, %c0_i32_0 : i32, i32, i32
  }
  func.func @transform_4(%arg0: i32) -> (i32, i32) {
    %c0_i32 = arith.constant 0 : i32
    %c0_i32_0 = arith.constant 0 : i32
    %c0_i32_1 = arith.constant 0 : i32
    return %c0_i32, %c0_i32_0 : i32, i32
  }
  func.func @transform_5(%arg0: i32) -> (i32, i32) {
    %c0_i32 = arith.constant 0 : i32
    %c0_i32_0 = arith.constant 0 : i32
    %c0_i32_1 = arith.constant 0 : i32
    return %c0_i32, %c0_i32_0 : i32, i32
  }
  func.func @transform_6(%arg0: i32) -> (i32, i32) {
    %c0_i32 = arith.constant 0 : i32
    %c0_i32_0 = arith.constant 0 : i32
    %c0_i32_1 = arith.constant 0 : i32
    return %c0_i32, %c0_i32_0 : i32, i32
  }
  func.func @transform_7(%arg0: i32) -> (i32, i32) {
    %c0_i32 = arith.constant 0 : i32
    %c0_i32_0 = arith.constant 0 : i32
    %c0_i32_1 = arith.constant 0 : i32
    return %c0_i32, %c0_i32_0 : i32, i32
  }
  func.func @transform_8(%arg0: i32) -> (i32, i32) {
    %c0_i32 = arith.constant 0 : i32
    %c0_i32_0 = arith.constant 0 : i32
    %c0_i32_1 = arith.constant 0 : i32
    return %c0_i32, %c0_i32_0 : i32, i32
  }
  func.func @transform_9(%arg0: i32) -> (i32, i32) {
    %c0_i32 = arith.constant 0 : i32
    %c0_i32_0 = arith.constant 0 : i32
    %c0_i32_1 = arith.constant 0 : i32
    return %c0_i32, %c0_i32_0 : i32, i32
  }
  func.func @transform_10(%arg0: i32) -> (i32, i32) {
    %c0_i32 = arith.constant 0 : i32
    %c0_i32_0 = arith.constant 0 : i32
    %c0_i32_1 = arith.constant 0 : i32
    return %c0_i32, %c0_i32_0 : i32, i32
  }
  func.func @transform_11(%arg0: i32) -> (i32, i32) {
    %c0_i32 = arith.constant 0 : i32
    %c0_i32_0 = arith.constant 0 : i32
    %c0_i32_1 = arith.constant 0 : i32
    return %c0_i32, %c0_i32_0 : i32, i32
  }
  func.func @transform_12(%arg0: i32) -> (i32, i32) {
    %c0_i32 = arith.constant 0 : i32
    %c0_i32_0 = arith.constant 0 : i32
    %c0_i32_1 = arith.constant 0 : i32
    return %c0_i32, %c0_i32_0 : i32, i32
  }
  func.func @transform_13(%arg0: i32) -> (i32, i32) {
    %c0_i32 = arith.constant 0 : i32
    %c0_i32_0 = arith.constant 0 : i32
    %c0_i32_1 = arith.constant 0 : i32
    return %c0_i32, %c0_i32_0 : i32, i32
  }
  func.func @transform_14(%arg0: i32) -> (i32, i32, i32) {
    %c0_i32 = arith.constant 0 : i32
    %c0_i32_0 = arith.constant 0 : i32
    %c0_i32_1 = arith.constant 0 : i32
    return %arg0, %c0_i32, %c0_i32_0 : i32, i32, i32
  }
}

</mosaic_0001>

<llo_original>
// kernel: tpu_custom_call.1
$region0: #{tpu_custom_call.1}
  #allocation0 [shape = 'u32[]', space=smem, size = 0x4, offset = 0x4, fixed_abs, tag = 'smem constant byte address 0x4 - core index']
  #allocation1 [shape = 'u32[72,128]{1,0:T(1,128)}', space=vmem, size = 0x9000, scoped, tag = 'internal scratch']
  %s0 = inlined_call_operand.vmem [shape: s32[2,128,1], index: 0, kind: input, shape index: {}]
  %s1 = inlined_call_operand.vmem [shape: s32[2,1,128], index: 1, kind: input, shape index: {}]
  %s2 = inlined_call_operand.hbm [shape: bf16[2,128,1152], index: 2, kind: input, shape index: {}]
  %s3 = inlined_call_operand.vmem [shape: f32[2,32,128], index: 3, kind: input, shape index: {}]
  %s4 = inlined_call_operand.hbm [shape: bf16[1152,128], index: 4, kind: input, shape index: {}]
  %s5 = inlined_call_operand.vmem [shape: bf16[128,128], index: 5, kind: input, shape index: {}]
  %s6 = inlined_call_operand.vmem [shape: f32[1,128], index: 6, kind: input, shape index: {}]
  %s7 = inlined_call_operand.hbm [shape: bf16[1152,128], index: 7, kind: input, shape index: {}]
  %s8 = inlined_call_operand.vmem [shape: bf16[128,128], index: 8, kind: input, shape index: {}]
  %s9 = inlined_call_operand.vmem [shape: f32[1,128], index: 9, kind: input, shape index: {}]
  %s10 = inlined_call_operand.vmem [shape: bf16[128,128], index: 10, kind: input, shape index: {}]
  %s11 = inlined_call_operand.vmem [shape: f32[1,128], index: 11, kind: input, shape index: {}]
  %s12 = inlined_call_operand.hbm [shape: bf16[128,128], index: 12, kind: input, shape index: {}]
  %s13 = inlined_call_operand.vmem [shape: f32[1,128], index: 13, kind: input, shape index: {}]
  %s14 = inlined_call_operand.hbm [shape: f32[2,32,128], index: 14, kind: output, shape index: {}]
  %s15 = sld [smem:[#allocation0]]
  $region105: #{tpu_custom_call.1} parent=0
    _
  %s17 = ssub.s32 1, %s15
  %s18 = scalar_select 0, %s17, %s15
  $region1: #{tpu_custom_call.1} parent=0
    #allocation2 [shape = 'u8[589824]{0}', space=vmem, size = 0x90000, scoped, tag = 'input window, operand 2']
    #allocation3 [shape = 's32[2]{0}', space=sflag, size = 0x8, scoped, tag = 'scoped memory for tpu_custom_call.1']
    #allocation4 [shape = 's32[2]{0}', space=sflag, size = 0x8, scoped, tag = 'scoped memory for tpu_custom_call.1']
    #allocation5 [shape = 'u8[294912]{0}', space=vmem, size = 0x48000, scoped, tag = 'input window, operand 4, single buffered']
    #allocation6 [shape = 's32[1]{0}', space=sflag, size = 0x4, scoped, tag = 'scoped memory for tpu_custom_call.1']
    #allocation7 [shape = 'u8[294912]{0}', space=vmem, size = 0x48000, scoped, tag = 'input window, operand 7, single buffered']
    #allocation8 [shape = 'u8[32768]{0}', space=vmem, size = 0x8000, scoped, tag = 'input window, operand 12, single buffered']
    #allocation9 [shape = 's32[1]{0}', space=sflag, size = 0x4, scoped, tag = 'scoped memory for tpu_custom_call.1']
    #allocation10 [shape = 'u8[32768]{0}', space=vmem, size = 0x8000, scoped, tag = 'output window, operand 0']
    %19 = vsyncpa [#allocation3], 0
    %s20 = scalar_lea.sflag [#allocation3], 1
    %21 = vsyncpa %s20, 0
    %22 = vsyncpa [#allocation6], 0
    %23 = vsyncpa [#allocation9], 0
    %24 = vsyncpa [#allocation4], 0
    %s25 = scalar_lea.sflag [#allocation4], 1
    %26 = vsyncpa %s25, 0
    loop: start=0, step=1, limit=4
    $region2: #{tpu_custom_call.1} parent=1 // loop_pre_header
      _
    $region3: #{tpu_custom_call.1} parent=1 // loop_header
      %s28 = sphi 0, %s32
      %p29 = scmp.ge.s32.totalorder %s28, 4
      %s38 = sphi 0, %s40
      %s41 = sphi 0, %s38
      %s42 = sphi 0, %s41
      %s58 = sphi 0, %s42
      %s64 = sphi 0, %s66
      %s67 = sphi 0, %s64
      %s68 = sphi 0, %s67
      %s84 = sphi 0, %s68
      %s90 = sphi 0, %s92
      %s93 = sphi 0, %s90
      %s94 = sphi 0, %s93
      %s110 = sphi 0, %s94
      %s116 = sphi 0, %s118
      %s119 = sphi 0, %s116
      %s120 = sphi 0, %s119
      %s136 = sphi 0, %s120
      %s140 = sphi 0, %s140
      %s142 = sphi 0, %s140
      %s143 = sphi 0, %s142
      %s157 = sphi 0, %s143
      %s161 = sphi 0, %s161
      %s163 = sphi 0, %s161
      %s164 = sphi 0, %s163
      %s178 = sphi 0, %s164
      %s182 = sphi 0, %s182
      %s184 = sphi 0, %s182
      %s185 = sphi 0, %s184
      %s199 = sphi 0, %s185
      %s203 = sphi 0, %s203
      %s205 = sphi 0, %s203
      %s206 = sphi 0, %s205
      %s220 = sphi 0, %s206
      %s224 = sphi 0, %s224
      %s226 = sphi 0, %s224
      %s227 = sphi 0, %s226
      %s241 = sphi 0, %s227
      %s245 = sphi 0, %s245
      %s247 = sphi 0, %s245
      %s248 = sphi 0, %s247
      %s262 = sphi 0, %s248
      %s266 = sphi 0, %s266
      %s268 = sphi 0, %s266
      %s269 = sphi 0, %s268
      %s283 = sphi 0, %s269
      %s287 = sphi 0, %s287
      %s289 = sphi 0, %s287
      %s290 = sphi 0, %s289
      %s304 = sphi 0, %s290
      %s308 = sphi 0, %s308
      %s310 = sphi 0, %s308
      %s311 = sphi 0, %s310
      %s325 = sphi 0, %s311
      %s329 = sphi 0, %s329
      %s331 = sphi 0, %s329
      %s332 = sphi 0, %s331
      %s346 = sphi 0, %s332
      %s352 = sphi 0, %s354
      %s355 = sphi 0, %s352
      %s356 = sphi 0, %s355
      %s372 = sphi 0, %s356
    $region4: #{tpu_custom_call.1} parent=1 // loop_header_branch
      %31 = sbr.rel (%p29) target = $region8
    $region5: #{tpu_custom_call.1} parent=1 // loop_body
      %s33 = ssub.s32 %s28, 1
      %s34 = ssub.s32 %s28, 2
      %s35 = sadd.s32 %s28, 1
      %s36 = ssub.s32 %s28, %s35
      %p37 = scmp.eq.s32.totalorder %s36, 0
      %s39 = sadd.s32 %s38, 1
      %s40 = scalar_select %p37, %s38, %s39
      %p43 = pneg %p37
      %p44 = scmp.eq.s32.totalorder %s28, 1
      %p45 = por %p43, %p44
      %p46 = scmp.ne.s32.totalorder %s38, %s41
      %p47 = scmp.eq.s32.totalorder %s28, 0
      %p48 = por %p46, %p47
      %p49 = scmp.ne.s32.totalorder %s38, %s41
      %p50 = scmp.eq.s32.totalorder %s33, 1
      %p51 = por %p49, %p50
      %p52 = scmp.ne.s32.totalorder %s41, %s42
      %p53 = scmp.eq.s32.totalorder %s33, 0
      %p54 = por %p52, %p53
      %p55 = scmp.ne.s32.totalorder %s41, %s42
      %p56 = scmp.eq.s32.totalorder %s34, 1
      %p57 = por %p55, %p56
      %p59 = scmp.ne.s32.totalorder %s42, %s58
      %p60 = scmp.eq.s32.totalorder %s34, 0
      %p61 = por %p59, %p60
      %s62 = ssub.s32 %s28, %s35
      %p63 = scmp.eq.s32.totalorder %s62, 0
      %s65 = sadd.s32 %s64, 1
      %s66 = scalar_select %p63, %s64, %s65
      %p69 = pneg %p63
      %p70 = scmp.eq.s32.totalorder %s28, 1
      %p71 = por %p69, %p70
      %p72 = scmp.ne.s32.totalorder %s64, %s67
      %p73 = scmp.eq.s32.totalorder %s28, 0
      %p74 = por %p72, %p73
      %p75 = scmp.ne.s32.totalorder %s64, %s67
      %p76 = scmp.eq.s32.totalorder %s33, 1
      %p77 = por %p75, %p76
      %p78 = scmp.ne.s32.totalorder %s67, %s68
      %p79 = scmp.eq.s32.totalorder %s33, 0
      %p80 = por %p78, %p79
      %p81 = scmp.ne.s32.totalorder %s67, %s68
      %p82 = scmp.eq.s32.totalorder %s34, 1
      %p83 = por %p81, %p82
      %p85 = scmp.ne.s32.totalorder %s68, %s84
      %p86 = scmp.eq.s32.totalorder %s34, 0
      %p87 = por %p85, %p86
      %s88 = ssub.s32 %s28, %s35
      %p89 = scmp.eq.s32.totalorder %s88, 0
      %s91 = sadd.s32 %s90, 1
      %s92 = scalar_select %p89, %s90, %s91
      %p95 = pneg %p89
      %p96 = scmp.eq.s32.totalorder %s28, 1
      %p97 = por %p95, %p96
      %p98 = scmp.ne.s32.totalorder %s90, %s93
      %p99 = scmp.eq.s32.totalorder %s28, 0
      %p100 = por %p98, %p99
      %p101 = scmp.ne.s32.totalorder %s90, %s93
      %p102 = scmp.eq.s32.totalorder %s33, 1
      %p103 = por %p101, %p102
      %p104 = scmp.ne.s32.totalorder %s93, %s94
      %p105 = scmp.eq.s32.totalorder %s33, 0
      %p106 = por %p104, %p105
      %p107 = scmp.ne.s32.totalorder %s93, %s94
      %p108 = scmp.eq.s32.totalorder %s34, 1
      %p109 = por %p107, %p108
      %p111 = scmp.ne.s32.totalorder %s94, %s110
      %p112 = scmp.eq.s32.totalorder %s34, 0
      %p113 = por %p111, %p112
      %s114 = ssub.s32 %s28, %s35
      %p115 = scmp.eq.s32.totalorder %s114, 0
      %s117 = sadd.s32 %s116, 1
      %s118 = scalar_select %p115, %s116, %s117
      %p121 = pneg %p115
      %p122 = scmp.eq.s32.totalorder %s28, 1
      %p123 = por %p121, %p122
      %p124 = scmp.ne.s32.totalorder %s116, %s119
      %p125 = scmp.eq.s32.totalorder %s28, 0
      %p126 = por %p124, %p125
      %p127 = scmp.ne.s32.totalorder %s116, %s119
      %p128 = scmp.eq.s32.totalorder %s33, 1
      %p129 = por %p127, %p128
      %p130 = scmp.ne.s32.totalorder %s119, %s120
      %p131 = scmp.eq.s32.totalorder %s33, 0
      %p132 = por %p130, %p131
      %p133 = scmp.ne.s32.totalorder %s119, %s120
      %p134 = scmp.eq.s32.totalorder %s34, 1
      %p135 = por %p133, %p134
      %p137 = scmp.ne.s32.totalorder %s120, %s136
      %p138 = scmp.eq.s32.totalorder %s34, 0
      %p139 = por %p137, %p138
      %s141 = sadd.s32 %s140, 1
      %p144 = scmp.eq.s32.totalorder %s28, 1
      %p145 = scmp.ne.s32.totalorder %s140, %s142
      %p146 = scmp.eq.s32.totalorder %s28, 0
      %p147 = por %p145, %p146
      %p148 = scmp.ne.s32.totalorder %s140, %s142
      %p149 = scmp.eq.s32.totalorder %s33, 1
      %p150 = por %p148, %p149
      %p151 = scmp.ne.s32.totalorder %s142, %s143
      %p152 = scmp.eq.s32.totalorder %s33, 0
      %p153 = por %p151, %p152
      %p154 = scmp.ne.s32.totalorder %s142, %s143
      %p155 = scmp.eq.s32.totalorder %s34, 1
      %p156 = por %p154, %p155
      %p158 = scmp.ne.s32.totalorder %s143, %s157
      %p159 = scmp.eq.s32.totalorder %s34, 0
      %p160 = por %p158, %p159
      %s162 = sadd.s32 %s161, 1
      %p165 = scmp.eq.s32.totalorder %s28, 1
      %p166 = scmp.ne.s32.totalorder %s161, %s163
      %p167 = scmp.eq.s32.totalorder %s28, 0
      %p168 = por %p166, %p167
      %p169 = scmp.ne.s32.totalorder %s161, %s163
      %p170 = scmp.eq.s32.totalorder %s33, 1
      %p171 = por %p169, %p170
      %p172 = scmp.ne.s32.totalorder %s163, %s164
      %p173 = scmp.eq.s32.totalorder %s33, 0
      %p174 = por %p172, %p173
      %p175 = scmp.ne.s32.totalorder %s163, %s164
      %p176 = scmp.eq.s32.totalorder %s34, 1
      %p177 = por %p175, %p176
      %p179 = scmp.ne.s32.totalorder %s164, %s178
      %p180 = scmp.eq.s32.totalorder %s34, 0
      %p181 = por %p179, %p180
      %s183 = sadd.s32 %s182, 1
      %p186 = scmp.eq.s32.totalorder %s28, 1
      %p187 = scmp.ne.s32.totalorder %s182, %s184
      %p188 = scmp.eq.s32.totalorder %s28, 0
      %p189 = por %p187, %p188
      %p190 = scmp.ne.s32.totalorder %s182, %s184
      %p191 = scmp.eq.s32.totalorder %s33, 1
      %p192 = por %p190, %p191
      %p193 = scmp.ne.s32.totalorder %s184, %s185
      %p194 = scmp.eq.s32.totalorder %s33, 0
      %p195 = por %p193, %p194
      %p196 = scmp.ne.s32.totalorder %s184, %s185
      %p197 = scmp.eq.s32.totalorder %s34, 1
      %p198 = por %p196, %p197
      %p200 = scmp.ne.s32.totalorder %s185, %s199
      %p201 = scmp.eq.s32.totalorder %s34, 0
      %p202 = por %p200, %p201
      %s204 = sadd.s32 %s203, 1
      %p207 = scmp.eq.s32.totalorder %s28, 1
      %p208 = scmp.ne.s32.totalorder %s203, %s205
      %p209 = scmp.eq.s32.totalorder %s28, 0
      %p210 = por %p208, %p209
      %p211 = scmp.ne.s32.totalorder %s203, %s205
      %p212 = scmp.eq.s32.totalorder %s33, 1
      %p213 = por %p211, %p212
      %p214 = scmp.ne.s32.totalorder %s205, %s206
      %p215 = scmp.eq.s32.totalorder %s33, 0
      %p216 = por %p214, %p215
      %p217 = scmp.ne.s32.totalorder %s205, %s206
      %p218 = scmp.eq.s32.totalorder %s34, 1
      %p219 = por %p217, %p218
      %p221 = scmp.ne.s32.totalorder %s206, %s220
      %p222 = scmp.eq.s32.totalorder %s34, 0
      %p223 = por %p221, %p222
      %s225 = sadd.s32 %s224, 1
      %p228 = scmp.eq.s32.totalorder %s28, 1
      %p229 = scmp.ne.s32.totalorder %s224, %s226
      %p230 = scmp.eq.s32.totalorder %s28, 0
      %p231 = por %p229, %p230
      %p232 = scmp.ne.s32.totalorder %s224, %s226
      %p233 = scmp.eq.s32.totalorder %s33, 1
      %p234 = por %p232, %p233
      %p235 = scmp.ne.s32.totalorder %s226, %s227
      %p236 = scmp.eq.s32.totalorder %s33, 0
      %p237 = por %p235, %p236
      %p238 = scmp.ne.s32.totalorder %s226, %s227
      %p239 = scmp.eq.s32.totalorder %s34, 1
      %p240 = por %p238, %p239
      %p242 = scmp.ne.s32.totalorder %s227, %s241
      %p243 = scmp.eq.s32.totalorder %s34, 0
      %p244 = por %p242, %p243
      %s246 = sadd.s32 %s245, 1
      %p249 = scmp.eq.s32.totalorder %s28, 1
      %p250 = scmp.ne.s32.totalorder %s245, %s247
      %p251 = scmp.eq.s32.totalorder %s28, 0
      %p252 = por %p250, %p251
      %p253 = scmp.ne.s32.totalorder %s245, %s247
      %p254 = scmp.eq.s32.totalorder %s33, 1
      %p255 = por %p253, %p254
      %p256 = scmp.ne.s32.totalorder %s247, %s248
      %p257 = scmp.eq.s32.totalorder %s33, 0
      %p258 = por %p256, %p257
      %p259 = scmp.ne.s32.totalorder %s247, %s248
      %p260 = scmp.eq.s32.totalorder %s34, 1
      %p261 = por %p259, %p260
      %p263 = scmp.ne.s32.totalorder %s248, %s262
      %p264 = scmp.eq.s32.totalorder %s34, 0
      %p265 = por %p263, %p264
      %s267 = sadd.s32 %s266, 1
      %p270 = scmp.eq.s32.totalorder %s28, 1
      %p271 = scmp.ne.s32.totalorder %s266, %s268
      %p272 = scmp.eq.s32.totalorder %s28, 0
      %p273 = por %p271, %p272
      %p274 = scmp.ne.s32.totalorder %s266, %s268
      %p275 = scmp.eq.s32.totalorder %s33, 1
      %p276 = por %p274, %p275
      %p277 = scmp.ne.s32.totalorder %s268, %s269
      %p278 = scmp.eq.s32.totalorder %s33, 0
      %p279 = por %p277, %p278
      %p280 = scmp.ne.s32.totalorder %s268, %s269
      %p281 = scmp.eq.s32.totalorder %s34, 1
      %p282 = por %p280, %p281
      %p284 = scmp.ne.s32.totalorder %s269, %s283
      %p285 = scmp.eq.s32.totalorder %s34, 0
      %p286 = por %p284, %p285
      %s288 = sadd.s32 %s287, 1
      %p291 = scmp.eq.s32.totalorder %s28, 1
      %p292 = scmp.ne.s32.totalorder %s287, %s289
      %p293 = scmp.eq.s32.totalorder %s28, 0
      %p294 = por %p292, %p293
      %p295 = scmp.ne.s32.totalorder %s287, %s289
      %p296 = scmp.eq.s32.totalorder %s33, 1
      %p297 = por %p295, %p296
      %p298 = scmp.ne.s32.totalorder %s289, %s290
      %p299 = scmp.eq.s32.totalorder %s33, 0
      %p300 = por %p298, %p299
      %p301 = scmp.ne.s32.totalorder %s289, %s290
      %p302 = scmp.eq.s32.totalorder %s34, 1
      %p303 = por %p301, %p302
      %p305 = scmp.ne.s32.totalorder %s290, %s304
      %p306 = scmp.eq.s32.totalorder %s34, 0
      %p307 = por %p305, %p306
      %s309 = sadd.s32 %s308, 1
      %p312 = scmp.eq.s32.totalorder %s28, 1
      %p313 = scmp.ne.s32.totalorder %s308, %s310
      %p314 = scmp.eq.s32.totalorder %s28, 0
      %p315 = por %p313, %p314
      %p316 = scmp.ne.s32.totalorder %s308, %s310
      %p317 = scmp.eq.s32.totalorder %s33, 1
      %p318 = por %p316, %p317
      %p319 = scmp.ne.s32.totalorder %s310, %s311
      %p320 = scmp.eq.s32.totalorder %s33, 0
      %p321 = por %p319, %p320
      %p322 = scmp.ne.s32.totalorder %s310, %s311
      %p323 = scmp.eq.s32.totalorder %s34, 1
      %p324 = por %p322, %p323
      %p326 = scmp.ne.s32.totalorder %s311, %s325
      %p327 = scmp.eq.s32.totalorder %s34, 0
      %p328 = por %p326, %p327
      %s330 = sadd.s32 %s329, 1
      %p333 = scmp.eq.s32.totalorder %s28, 1
      %p334 = scmp.ne.s32.totalorder %s329, %s331
      %p335 = scmp.eq.s32.totalorder %s28, 0
      %p336 = por %p334, %p335
      %p337 = scmp.ne.s32.totalorder %s329, %s331
      %p338 = scmp.eq.s32.totalorder %s33, 1
      %p339 = por %p337, %p338
      %p340 = scmp.ne.s32.totalorder %s331, %s332
      %p341 = scmp.eq.s32.totalorder %s33, 0
      %p342 = por %p340, %p341
      %p343 = scmp.ne.s32.totalorder %s331, %s332
      %p344 = scmp.eq.s32.totalorder %s34, 1
      %p345 = por %p343, %p344
      %p347 = scmp.ne.s32.totalorder %s332, %s346
      %p348 = scmp.eq.s32.totalorder %s34, 0
      %p349 = por %p347, %p348
      %s350 = ssub.s32 %s28, %s35
      %p351 = scmp.eq.s32.totalorder %s350, 0
      %s353 = sadd.s32 %s352, 1
      %s354 = scalar_select %p351, %s352, %s353
      %p357 = pneg %p351
      %p358 = scmp.eq.s32.totalorder %s28, 1
      %p359 = por %p357, %p358
      %p360 = scmp.ne.s32.totalorder %s352, %s355
      %p361 = scmp.eq.s32.totalorder %s28, 0
      %p362 = por %p360, %p361
      %p363 = scmp.ne.s32.totalorder %s352, %s355
      %p364 = scmp.eq.s32.totalorder %s33, 1
      %p365 = por %p363, %p364
      %p366 = scmp.ne.s32.totalorder %s355, %s356
      %p367 = scmp.eq.s32.totalorder %s33, 0
      %p368 = por %p366, %p367
      %p369 = scmp.ne.s32.totalorder %s355, %s356
      %p370 = scmp.eq.s32.totalorder %s34, 1
      %p371 = por %p369, %p370
      %p373 = scmp.ne.s32.totalorder %s356, %s372
      %p374 = scmp.eq.s32.totalorder %s34, 0
      %p375 = por %p373, %p374
      %p376 = scmp.le.s32.totalorder 1, %s28
      %p377 = scmp.lt.s32.totalorder %s28, 3
      %p378 = pnand %p376, %p377
      %p379 = pneg %p378
      // Predicated region
      $region9: #{tpu_custom_call.1} parent=5 // pred_check
        _
      $region10: #{tpu_custom_call.1} parent=5 // pred_check_branch
        %381 = sbr.rel (%p378) target = $region12
      $region11: #{tpu_custom_call.1} parent=5 // pred_region
        %s382 = ssub.s32 %s28, 1
        // Predicated region
        $region13: #{tpu_custom_call.1} parent=11 // pred_check
          %p383 = pneg %p153
        $region14: #{tpu_custom_call.1} parent=11 // pred_check_branch
          %385 = sbr.rel (%p383) target = $region16
        $region15: #{tpu_custom_call.1} parent=11 // pred_region
          %387 = vsyncadd [#allocation6], 0
          %s388 = sshll.u32 %s4, 4
          %s389 = int_to_ptr.hbm [resolvable:$true] %s388
          %s390 = sshll.u32 [#allocation5], 4
          %s391 = int_to_ptr.vmem [resolvable:$true] %s390
          %396 = dma.hbm_to_vmem [thread:$0]  %s389, 9216, %s391, [#allocation6], 64, 64, 4
        $region16: #{tpu_custom_call.1} parent=11 // pred_fallthru
          _
        // Predicated region
        $region17: #{tpu_custom_call.1} parent=11 // pred_check
          %p397 = pneg %p174
        $region18: #{tpu_custom_call.1} parent=11 // pred_check_branch
          %399 = sbr.rel (%p397) target = $region20
        $region19: #{tpu_custom_call.1} parent=11 // pred_region
          _
        $region20: #{tpu_custom_call.1} parent=11 // pred_fallthru
          _
        // Predicated region
        $region21: #{tpu_custom_call.1} parent=11 // pred_check
          %p400 = pneg %p195
        $region22: #{tpu_custom_call.1} parent=11 // pred_check_branch
          %402 = sbr.rel (%p400) target = $region24
        $region23: #{tpu_custom_call.1} parent=11 // pred_region
          _
        $region24: #{tpu_custom_call.1} parent=11 // pred_fallthru
          _
        // Predicated region
        $region25: #{tpu_custom_call.1} parent=11 // pred_check
          %p403 = pneg %p216
        $region26: #{tpu_custom_call.1} parent=11 // pred_check_branch
          %405 = sbr.rel (%p403) target = $region28
        $region27: #{tpu_custom_call.1} parent=11 // pred_region
          %407 = vsyncadd [#allocation6], 0
          %s408 = sshll.u32 %s7, 4
          %s409 = int_to_ptr.hbm [resolvable:$true] %s408
          %s410 = sshll.u32 [#allocation7], 4
          %s411 = int_to_ptr.vmem [resolvable:$true] %s410
          %416 = dma.hbm_to_vmem [thread:$0]  %s409, 9216, %s411, [#allocation6], 64, 64, 4
        $region28: #{tpu_custom_call.1} parent=11 // pred_fallthru
          _
        // Predicated region
        $region29: #{tpu_custom_call.1} parent=11 // pred_check
          %p417 = pneg %p237
        $region30: #{tpu_custom_call.1} parent=11 // pred_check_branch
          %419 = sbr.rel (%p417) target = $region32
        $region31: #{tpu_custom_call.1} parent=11 // pred_region
          _
        $region32: #{tpu_custom_call.1} parent=11 // pred_fallthru
          _
        // Predicated region
        $region33: #{tpu_custom_call.1} parent=11 // pred_check
          %p420 = pneg %p258
        $region34: #{tpu_custom_call.1} parent=11 // pred_check_branch
          %422 = sbr.rel (%p420) target = $region36
        $region35: #{tpu_custom_call.1} parent=11 // pred_region
          _
        $region36: #{tpu_custom_call.1} parent=11 // pred_fallthru
          _
        // Predicated region
        $region37: #{tpu_custom_call.1} parent=11 // pred_check
          %p423 = pneg %p279
        $region38: #{tpu_custom_call.1} parent=11 // pred_check_branch
          %425 = sbr.rel (%p423) target = $region40
        $region39: #{tpu_custom_call.1} parent=11 // pred_region
          _
        $region40: #{tpu_custom_call.1} parent=11 // pred_fallthru
          _
        // Predicated region
        $region41: #{tpu_custom_call.1} parent=11 // pred_check
          %p426 = pneg %p300
        $region42: #{tpu_custom_call.1} parent=11 // pred_check_branch
          %428 = sbr.rel (%p426) target = $region44
        $region43: #{tpu_custom_call.1} parent=11 // pred_region
          _
        $region44: #{tpu_custom_call.1} parent=11 // pred_fallthru
          _
        // Predicated region
        $region45: #{tpu_custom_call.1} parent=11 // pred_check
          %p429 = pneg %p321
        $region46: #{tpu_custom_call.1} parent=11 // pred_check_branch
          %431 = sbr.rel (%p429) target = $region48
        $region47: #{tpu_custom_call.1} parent=11 // pred_region
          %433 = vsyncadd [#allocation9], 0
          %s434 = sshll.u32 %s12, 4
          %s435 = int_to_ptr.hbm [resolvable:$true] %s434
          %s436 = sshll.u32 [#allocation8], 4
          %s437 = int_to_ptr.vmem [resolvable:$true] %s436
          %442 = dma.hbm_to_vmem [thread:$0]  %s435, 1024, %s437, [#allocation9], 64, 64, 4
        $region48: #{tpu_custom_call.1} parent=11 // pred_fallthru
          _
        // Predicated region
        $region49: #{tpu_custom_call.1} parent=11 // pred_check
          %p443 = pneg %p342
        $region50: #{tpu_custom_call.1} parent=11 // pred_check_branch
          %445 = sbr.rel (%p443) target = $region52
        $region51: #{tpu_custom_call.1} parent=11 // pred_region
          _
        $region52: #{tpu_custom_call.1} parent=11 // pred_fallthru
          _
      $region12: #{tpu_custom_call.1} parent=5 // pred_fallthru
        _
      %p446 = scmp.lt.s32.totalorder %s28, 2
      // Predicated region
      $region53: #{tpu_custom_call.1} parent=5 // pred_check
        %p447 = pneg %p446
      $region54: #{tpu_custom_call.1} parent=5 // pred_check_branch
        %449 = sbr.rel (%p447) target = $region56
      $region55: #{tpu_custom_call.1} parent=5 // pred_region
        // Predicated region
        $region57: #{tpu_custom_call.1} parent=55 // pred_check
          %p450 = pneg %p48
        $region58: #{tpu_custom_call.1} parent=55 // pred_check_branch
          %452 = sbr.rel (%p450) target = $region60
        $region59: #{tpu_custom_call.1} parent=55 // pred_region
          %p453 = scmp.lt.s32.totalorder %s28, 1
          %s454 = scalar_select %p453, %s28, 1
          %s455 = smul.addr %s454, 16
          %s456 = smul.addr %s455, 8
          %s457 = scalar_lea.vmem %s0, %s456
        $region60: #{tpu_custom_call.1} parent=55 // pred_fallthru
          _
        // Predicated region
        $region61: #{tpu_custom_call.1} parent=55 // pred_check
          %p458 = pneg %p74
        $region62: #{tpu_custom_call.1} parent=55 // pred_check_branch
          %460 = sbr.rel (%p458) target = $region64
        $region63: #{tpu_custom_call.1} parent=55 // pred_region
          %p461 = scmp.lt.s32.totalorder %s28, 1
          %s462 = scalar_select %p461, %s28, 1
          %s463 = scalar_lea.vmem %s1, %s462
        $region64: #{tpu_custom_call.1} parent=55 // pred_fallthru
          _
        // Predicated region
        $region65: #{tpu_custom_call.1} parent=55 // pred_check
          %p464 = pneg %p100
        $region66: #{tpu_custom_call.1} parent=55 // pred_check_branch
          %466 = sbr.rel (%p464) target = $region68
        $region67: #{tpu_custom_call.1} parent=55 // pred_region
          %s467 = sand.u32 %s90, 1
          %s468 = scalar_lea.sflag [#allocation3], %s467
          %s469 = sand.u32 %s90, 1
          %s470 = smul.addr %s469, 576
          %s471 = scalar_lea.vmem [#allocation2], %s470
          %473 = vsyncadd %s468, 0
          %s474 = smul.addr %s28, 144
          %s475 = smul.addr %s474, 4
          %s476 = scalar_lea.hbm %s2, %s475
          %s477 = sshll.u32 %s476, 4
          %s478 = int_to_ptr.hbm [resolvable:$true] %s477
          %s479 = sshll.u32 %s471, 4
          %s480 = int_to_ptr.vmem [resolvable:$true] %s479
          %485 = dma.hbm_to_vmem [thread:$0]  %s478, 9216, %s480, %s468, 576, 576, 36
        $region68: #{tpu_custom_call.1} parent=55 // pred_fallthru
          _
        // Predicated region
        $region69: #{tpu_custom_call.1} parent=55 // pred_check
          %p486 = pneg %p126
        $region70: #{tpu_custom_call.1} parent=55 // pred_check_branch
          %488 = sbr.rel (%p486) target = $region72
        $region71: #{tpu_custom_call.1} parent=55 // pred_region
          %p489 = scmp.lt.s32.totalorder %s28, 1
          %s490 = scalar_select %p489, %s28, 1
          %s491 = smul.addr %s490, 4
          %s492 = smul.addr %s491, 8
          %s493 = scalar_lea.vmem %s3, %s492
        $region72: #{tpu_custom_call.1} parent=55 // pred_fallthru
          _
      $region56: #{tpu_custom_call.1} parent=5 // pred_fallthru
        _
      %p494 = scmp.le.s32.totalorder 1, %s28
      %p495 = scmp.lt.s32.totalorder %s28, 3
      %p496 = pnand %p494, %p495
      %p497 = pneg %p496
      // Predicated region
      $region73: #{tpu_custom_call.1} parent=5 // pred_check
        _
      $region74: #{tpu_custom_call.1} parent=5 // pred_check_branch
        %499 = sbr.rel (%p496) target = $region76
      $region75: #{tpu_custom_call.1} parent=5 // pred_region
        %s500 = ssub.s32 %s28, 1
        %s501 = sand.u32 %s93, 1
        %s502 = scalar_lea.sflag [#allocation3], %s501
        %s503 = sand.u32 %s93, 1
        %s504 = smul.addr %s503, 576
        %s505 = scalar_lea.vmem [#allocation2], %s504
        // Predicated region
        $region77: #{tpu_custom_call.1} parent=75 // pred_check
          %p506 = pneg %p106
        $region78: #{tpu_custom_call.1} parent=75 // pred_check_branch
          %508 = sbr.rel (%p506) target = $region80
        $region79: #{tpu_custom_call.1} parent=75 // pred_region
          %510 = dma.done %s502, 9216
        $region80: #{tpu_custom_call.1} parent=75 // pred_fallthru
          _
        // Predicated region
        $region81: #{tpu_custom_call.1} parent=75 // pred_check
          %p511 = pneg %p153
        $region82: #{tpu_custom_call.1} parent=75 // pred_check_branch
          %513 = sbr.rel (%p511) target = $region84
        $region83: #{tpu_custom_call.1} parent=75 // pred_region
          %515 = dma.done [#allocation6], 9216
        $region84: #{tpu_custom_call.1} parent=75 // pred_fallthru
          _
        // Predicated region
        $region85: #{tpu_custom_call.1} parent=75 // pred_check
          %p516 = pneg %p216
        $region86: #{tpu_custom_call.1} parent=75 // pred_check_branch
          %518 = sbr.rel (%p516) target = $region88
        $region87: #{tpu_custom_call.1} parent=75 // pred_region
          %520 = dma.done [#allocation6], 9216
        $region88: #{tpu_custom_call.1} parent=75 // pred_fallthru
          _
        // Predicated region
        $region89: #{tpu_custom_call.1} parent=75 // pred_check
          %p521 = pneg %p321
        $region90: #{tpu_custom_call.1} parent=75 // pred_check_branch
          %523 = sbr.rel (%p521) target = $region92
        $region91: #{tpu_custom_call.1} parent=75 // pred_region
          %525 = dma.done [#allocation9], 1024
        $region92: #{tpu_custom_call.1} parent=75 // pred_fallthru
          _
        %p526 = scmp.lt.s32.totalorder %s33, 1
        %s527 = scalar_select %p526, %s33, 1
        %s528 = smul.addr %s527, 16
        %s529 = smul.addr %s528, 8
        %s530 = scalar_lea.vmem %s0, %s529
        %p531 = pneg %p54
        %p532 = pneg %p51
        %p533 = scmp.lt.s32.totalorder %s33, 1
        %s534 = scalar_select %p533, %s33, 1
        %s535 = scalar_lea.vmem %s1, %s534
        %p536 = pneg %p80
        %p537 = pneg %p77
        %s538 = sand.u32 %s93, 1
        %s539 = scalar_lea.sflag [#allocation3], %s538
        %s540 = sand.u32 %s93, 1
        %s541 = smul.addr %s540, 576
        %s542 = scalar_lea.vmem [#allocation2], %s541
        %p543 = pneg %p106
        %p544 = pneg %p103
        %p545 = scmp.lt.s32.totalorder %s33, 1
        %s546 = scalar_select %p545, %s33, 1
        %s547 = smul.addr %s546, 4
        %s548 = smul.addr %s547, 8
        %s549 = scalar_lea.vmem %s3, %s548
        %p550 = pneg %p132
        %p551 = pneg %p129
        %p552 = pneg %p153
        %p553 = pneg %p150
        %p554 = pneg %p174
        %p555 = pneg %p171
        %p556 = pneg %p195
        %p557 = pneg %p192
        %p558 = pneg %p216
        %p559 = pneg %p213
        %p560 = pneg %p237
        %p561 = pneg %p234
        %p562 = pneg %p258
        %p563 = pneg %p255
        %p564 = pneg %p279
        %p565 = pneg %p276
        %p566 = pneg %p300
        %p567 = pneg %p297
        %p568 = pneg %p321
        %p569 = pneg %p318
        %p570 = pneg %p342
        %p571 = pneg %p339
        %p572 = pneg %p368
        %p573 = pneg %p365
        %s574 = sand.u32 %s355, 1
        %s575 = scalar_lea.sflag [#allocation4], %s574
        %s576 = sand.u32 %s355, 1
        %s577 = smul.addr %s576, 32
        %s578 = scalar_lea.vmem [#allocation10], %s577
        %p579 = scmp.lt.s32.totalorder %s33, 1
        %s580 = scalar_select %p579, %s33, 1
        %s581 = smul.addr %s580, 16
        %s582 = smul.addr %s581, 8
        %s583 = scalar_lea.vmem %s0, %s582
        %p584 = scmp.lt.s32.totalorder %s33, 1
        %s585 = scalar_select %p584, %s33, 1
        %s586 = scalar_lea.vmem %s1, %s585
        %p587 = scmp.lt.s32.totalorder %s33, 1
        %s588 = scalar_select %p587, %s33, 1
        %s589 = smul.addr %s588, 4
        %s590 = smul.addr %s589, 8
        %s591 = scalar_lea.vmem %s3, %s590
        %v593 = vld [vmem:[%s583] sm:$0xff]
        %v594 = vld [vmem:[%s583 + $0x8] sm:$0xff]
        %v595 = vld [vmem:[%s583 + $0x10] sm:$0xff]
        %v596 = vld [vmem:[%s583 + $0x18] sm:$0xff]
        %v597 = vld [vmem:[%s583 + $0x20] sm:$0xff]
        %v598 = vld [vmem:[%s583 + $0x28] sm:$0xff]
        %v599 = vld [vmem:[%s583 + $0x30] sm:$0xff]
        %v600 = vld [vmem:[%s583 + $0x38] sm:$0xff]
        %v601 = vld [vmem:[%s583 + $0x40] sm:$0xff]
        %v602 = vld [vmem:[%s583 + $0x48] sm:$0xff]
        %v603 = vld [vmem:[%s583 + $0x50] sm:$0xff]
        %v604 = vld [vmem:[%s583 + $0x58] sm:$0xff]
        %v605 = vld [vmem:[%s583 + $0x60] sm:$0xff]
        %v606 = vld [vmem:[%s583 + $0x68] sm:$0xff]
        %v607 = vld [vmem:[%s583 + $0x70] sm:$0xff]
        %v608 = vld [vmem:[%s583 + $0x78] sm:$0xff]
        %v609 = vld [vmem:[%s586] sm:$0x1]
        %v610 = vlaneseq
        %v611 = vand.u32 %v610, 127
        %612 = vset.pattern.permute.xlu0 0
        %613 = vperm.xlu0 %612, %v593
        %v614 = vpop.permute.xlu0 %613
        %615 = vset.pattern.permute.xlu0 0
        %616 = vperm.xlu0 %615, %v594
        %v617 = vpop.permute.xlu0 %616
        %618 = vset.pattern.permute.xlu0 0
        %619 = vperm.xlu0 %618, %v595
        %v620 = vpop.permute.xlu0 %619
        %621 = vset.pattern.permute.xlu0 0
        %622 = vperm.xlu0 %621, %v596
        %v623 = vpop.permute.xlu0 %622
        %624 = vset.pattern.permute.xlu0 0
        %625 = vperm.xlu0 %624, %v597
        %v626 = vpop.permute.xlu0 %625
        %627 = vset.pattern.permute.xlu0 0
        %628 = vperm.xlu0 %627, %v598
        %v629 = vpop.permute.xlu0 %628
        %630 = vset.pattern.permute.xlu0 0
        %631 = vperm.xlu0 %630, %v599
        %v632 = vpop.permute.xlu0 %631
        %633 = vset.pattern.permute.xlu0 0
        %634 = vperm.xlu0 %633, %v600
        %v635 = vpop.permute.xlu0 %634
        %636 = vset.pattern.permute.xlu0 0
        %637 = vperm.xlu0 %636, %v601
        %v638 = vpop.permute.xlu0 %637
        %639 = vset.pattern.permute.xlu0 0
        %640 = vperm.xlu0 %639, %v602
        %v641 = vpop.permute.xlu0 %640
        %642 = vset.pattern.permute.xlu0 0
        %643 = vperm.xlu0 %642, %v603
        %v644 = vpop.permute.xlu0 %643
        %645 = vset.pattern.permute.xlu0 0
        %646 = vperm.xlu0 %645, %v604
        %v647 = vpop.permute.xlu0 %646
        %648 = vset.pattern.permute.xlu0 0
        %649 = vperm.xlu0 %648, %v605
        %v650 = vpop.permute.xlu0 %649
        %651 = vset.pattern.permute.xlu0 0
        %652 = vperm.xlu0 %651, %v606
        %v653 = vpop.permute.xlu0 %652
        %654 = vset.pattern.permute.xlu0 0
        %655 = vperm.xlu0 %654, %v607
        %v656 = vpop.permute.xlu0 %655
        %657 = vset.pattern.permute.xlu0 0
        %658 = vperm.xlu0 %657, %v608
        %v659 = vpop.permute.xlu0 %658
        %vm660 = vcmp.eq.s32.totalorder %v611, %v614
        %vm661 = vcmp.eq.s32.totalorder %v611, %v617
        %vm662 = vcmp.eq.s32.totalorder %v611, %v620
        %vm663 = vcmp.eq.s32.totalorder %v611, %v623
        %vm664 = vcmp.eq.s32.totalorder %v611, %v626
        %vm665 = vcmp.eq.s32.totalorder %v611, %v629
        %vm666 = vcmp.eq.s32.totalorder %v611, %v632
        %vm667 = vcmp.eq.s32.totalorder %v611, %v635
        %vm668 = vcmp.eq.s32.totalorder %v611, %v638
        %vm669 = vcmp.eq.s32.totalorder %v611, %v641
        %vm670 = vcmp.eq.s32.totalorder %v611, %v644
        %vm671 = vcmp.eq.s32.totalorder %v611, %v647
        %vm672 = vcmp.eq.s32.totalorder %v611, %v650
        %vm673 = vcmp.eq.s32.totalorder %v611, %v653
        %vm674 = vcmp.eq.s32.totalorder %v611, %v656
        %vm675 = vcmp.eq.s32.totalorder %v611, %v659
        %v676 = vsel %vm660, 1, 0
        %v677 = vsel %vm661, 1, 0
        %v678 = vsel %vm662, 1, 0
        %v679 = vsel %vm663, 1, 0
        %v680 = vsel %vm664, 1, 0
        %v681 = vsel %vm665, 1, 0
        %v682 = vsel %vm666, 1, 0
        %v683 = vsel %vm667, 1, 0
        %v684 = vsel %vm668, 1, 0
        %v685 = vsel %vm669, 1, 0
        %v686 = vsel %vm670, 1, 0
        %v687 = vsel %vm671, 1, 0
        %v688 = vsel %vm672, 1, 0
        %v689 = vsel %vm673, 1, 0
        %v690 = vsel %vm674, 1, 0
        %v691 = vsel %vm675, 1, 0
        %v692 = vcvt.s32.f32 %v676
        %v693 = vcvt.s32.f32 %v677
        %v694 = vcvt.s32.f32 %v678
        %v695 = vcvt.s32.f32 %v679
        %v696 = vcvt.s32.f32 %v680
        %v697 = vcvt.s32.f32 %v681
        %v698 = vcvt.s32.f32 %v682
        %v699 = vcvt.s32.f32 %v683
        %v700 = vcvt.s32.f32 %v684
        %v701 = vcvt.s32.f32 %v685
        %v702 = vcvt.s32.f32 %v686
        %v703 = vcvt.s32.f32 %v687
        %v704 = vcvt.s32.f32 %v688
        %v705 = vcvt.s32.f32 %v689
        %v706 = vcvt.s32.f32 %v690
        %v707 = vcvt.s32.f32 %v691
        %v708 = vpack.c.bf16 %v693, %v692
        %v709 = vpack.c.bf16 %v695, %v694
        %v710 = vpack.c.bf16 %v697, %v696
        %v711 = vpack.c.bf16 %v699, %v698
        %v712 = vpack.c.bf16 %v701, %v700
        %v713 = vpack.c.bf16 %v703, %v702
        %v714 = vpack.c.bf16 %v705, %v704
        %v715 = vpack.c.bf16 %v707, %v706
        %v716 = vlaneseq
        %v717 = vshrl.u32 %v716, 7
        %v718 = vadd.s32 %v717, 8
        %v719 = vadd.s32 %v717, 16
        %v720 = vadd.s32 %v717, 24
        %v721 = vperm.slane %v609, 0
        %vm722 = vcmp.eq.s32.totalorder %v717, %v721
        %vm723 = vcmp.eq.s32.totalorder %v718, %v721
        %vm724 = vcmp.eq.s32.totalorder %v719, %v721
        %vm725 = vcmp.eq.s32.totalorder %v720, %v721
        %v726 = vsel %vm722, 1, 0
        %v727 = vsel %vm723, 1, 0
        %v728 = vsel %vm724, 1, 0
        %v729 = vsel %vm725, 1, 0
        %v730 = vcvt.s32.f32 %v726
        %v731 = vcvt.s32.f32 %v727
        %v732 = vcvt.s32.f32 %v728
        %v733 = vcvt.s32.f32 %v729
        %v734 = vpack.c.bf16 %v731, %v730
        %v735 = vpack.c.bf16 %v733, %v732
        %v736 = vld [vmem:[%s505] sm:$0xff]
        %v737 = vld [vmem:[%s505 + $0x8] sm:$0xff]
        %v738 = vld [vmem:[%s505 + $0x10] sm:$0xff]
        %v739 = vld [vmem:[%s505 + $0x18] sm:$0xff]
        %v740 = vld [vmem:[%s505 + $0x20] sm:$0xf]
        %v741 = vld [vmem:[%s505 + $0x24] sm:$0xff]
        %v742 = vld [vmem:[%s505 + $0x2c] sm:$0xff]
        %v743 = vld [vmem:[%s505 + $0x34] sm:$0xff]
        %v744 = vld [vmem:[%s505 + $0x3c] sm:$0xff]
        %v745 = vld [vmem:[%s505 + $0x44] sm:$0xf]
        %v746 = vld [vmem:[%s505 + $0x48] sm:$0xff]
        %v747 = vld [vmem:[%s505 + $0x50] sm:$0xff]
        %v748 = vld [vmem:[%s505 + $0x58] sm:$0xff]
        %v749 = vld [vmem:[%s505 + $0x60] sm:$0xff]
        %v750 = vld [vmem:[%s505 + $0x68] sm:$0xf]
        %v751 = vld [vmem:[%s505 + $0x6c] sm:$0xff]
        %v752 = vld [vmem:[%s505 + $0x74] sm:$0xff]
        %v753 = vld [vmem:[%s505 + $0x7c] sm:$0xff]
        %v754 = vld [vmem:[%s505 + $0x84] sm:$0xff]
        %v755 = vld [vmem:[%s505 + $0x8c] sm:$0xf]
        %v756 = vld [vmem:[%s505 + $0x90] sm:$0xff]
        %v757 = vld [vmem:[%s505 + $0x98] sm:$0xff]
        %v758 = vld [vmem:[%s505 + $0xa0] sm:$0xff]
        %v759 = vld [vmem:[%s505 + $0xa8] sm:$0xff]
        %v760 = vld [vmem:[%s505 + $0xb0] sm:$0xf]
        %v761 = vld [vmem:[%s505 + $0xb4] sm:$0xff]
        %v762 = vld [vmem:[%s505 + $0xbc] sm:$0xff]
        %v763 = vld [vmem:[%s505 + $0xc4] sm:$0xff]
        %v764 = vld [vmem:[%s505 + $0xcc] sm:$0xff]
        %v765 = vld [vmem:[%s505 + $0xd4] sm:$0xf]
        %v766 = vld [vmem:[%s505 + $0xd8] sm:$0xff]
        %v767 = vld [vmem:[%s505 + $0xe0] sm:$0xff]
        %v768 = vld [vmem:[%s505 + $0xe8] sm:$0xff]
        %v769 = vld [vmem:[%s505 + $0xf0] sm:$0xff]
        %v770 = vld [vmem:[%s505 + $0xf8] sm:$0xf]
        %v771 = vld [vmem:[%s505 + $0xfc] sm:$0xff]
        %v772 = vld [vmem:[%s505 + $0x104] sm:$0xff]
        %v773 = vld [vmem:[%s505 + $0x10c] sm:$0xff]
        %v774 = vld [vmem:[%s505 + $0x114] sm:$0xff]
        %v775 = vld [vmem:[%s505 + $0x11c] sm:$0xf]
        %v776 = vld [vmem:[%s505 + $0x120] sm:$0xff]
        %v777 = vld [vmem:[%s505 + $0x128] sm:$0xff]
        %v778 = vld [vmem:[%s505 + $0x130] sm:$0xff]
        %v779 = vld [vmem:[%s505 + $0x138] sm:$0xff]
        %v780 = vld [vmem:[%s505 + $0x140] sm:$0xf]
        %v781 = vld [vmem:[%s505 + $0x144] sm:$0xff]
        %v782 = vld [vmem:[%s505 + $0x14c] sm:$0xff]
        %v783 = vld [vmem:[%s505 + $0x154] sm:$0xff]
        %v784 = vld [vmem:[%s505 + $0x15c] sm:$0xff]
        %v785 = vld [vmem:[%s505 + $0x164] sm:$0xf]
        %v786 = vld [vmem:[%s505 + $0x168] sm:$0xff]
        %v787 = vld [vmem:[%s505 + $0x170] sm:$0xff]
        %v788 = vld [vmem:[%s505 + $0x178] sm:$0xff]
        %v789 = vld [vmem:[%s505 + $0x180] sm:$0xff]
        %v790 = vld [vmem:[%s505 + $0x188] sm:$0xf]
        %v791 = vld [vmem:[%s505 + $0x18c] sm:$0xff]
        %v792 = vld [vmem:[%s505 + $0x194] sm:$0xff]
        %v793 = vld [vmem:[%s505 + $0x19c] sm:$0xff]
        %v794 = vld [vmem:[%s505 + $0x1a4] sm:$0xff]
        %v795 = vld [vmem:[%s505 + $0x1ac] sm:$0xf]
        %v796 = vld [vmem:[%s505 + $0x1b0] sm:$0xff]
        %v797 = vld [vmem:[%s505 + $0x1b8] sm:$0xff]
        %v798 = vld [vmem:[%s505 + $0x1c0] sm:$0xff]
        %v799 = vld [vmem:[%s505 + $0x1c8] sm:$0xff]
        %v800 = vld [vmem:[%s505 + $0x1d0] sm:$0xf]
        %v801 = vld [vmem:[%s505 + $0x1d4] sm:$0xff]
        %v802 = vld [vmem:[%s505 + $0x1dc] sm:$0xff]
        %v803 = vld [vmem:[%s505 + $0x1e4] sm:$0xff]
        %v804 = vld [vmem:[%s505 + $0x1ec] sm:$0xff]
        %v805 = vld [vmem:[%s505 + $0x1f4] sm:$0xf]
        %v806 = vld [vmem:[%s505 + $0x1f8] sm:$0xff]
        %v807 = vld [vmem:[%s505 + $0x200] sm:$0xff]
        %v808 = vld [vmem:[%s505 + $0x208] sm:$0xff]
        %v809 = vld [vmem:[%s505 + $0x210] sm:$0xff]
        %v810 = vld [vmem:[%s505 + $0x218] sm:$0xf]
        %v811 = vld [vmem:[%s505 + $0x21c] sm:$0xff]
        %v812 = vld [vmem:[%s505 + $0x224] sm:$0xff]
        %v813 = vld [vmem:[%s505 + $0x22c] sm:$0xff]
        %v814 = vld [vmem:[%s505 + $0x234] sm:$0xff]
        %v815 = vld [vmem:[%s505 + $0x23c] sm:$0xf]
        %v816 = vld [vmem:[%s591] sm:$0xff]
        %v817 = vld [vmem:[%s591 + $0x8] sm:$0xff]
        %v818 = vld [vmem:[%s591 + $0x10] sm:$0xff]
        %v819 = vld [vmem:[%s591 + $0x18] sm:$0xff]
        %v820 = vpack.c.bf16 %v817, %v816
        %v821 = vpack.c.bf16 %v819, %v818
        %vm822 = vcmask 261120
        %v824 = vsel %vm822, %v708, 0
        %v827 = vsel %vm822, %v709, 0
        %v830 = vsel %vm822, %v710, 0
        %v833 = vsel %vm822, %v711, 0
        %v836 = vsel %vm822, %v712, 0
        %v839 = vsel %vm822, %v713, 0
        %v842 = vsel %vm822, %v714, 0
        %v845 = vsel %vm822, %v715, 0
        %847 = vmatpush.bf16.msra.mxu0 0
        %848 = vmatpush.bf16.msra.mxu0 0
        %849 = vmatpush.bf16.msra.mxu0 0
        %850 = vmatpush.bf16.msra.mxu0 0
        %851 = vmatpush.bf16.msra.mxu0 0
        %852 = vmatpush.bf16.msra.mxu0 0
        %853 = vmatpush.bf16.msra.mxu0 %v821
        %854 = vmatpush.bf16.msra.mxu0 %v820
        %855 = vmatmul.bf16.gmra.mxu0 %v824
        %v856 = vpop.f32.mrf.mxu0
        %v857 = vadd.f32 0.0, %v856
        %v858 = vpop.f32.mrf.mxu0
        %v859 = vadd.f32 0.0, %v858
        %860 = vmatmul.bf16.gmra.mxu0 %v827
        %v861 = vpop.f32.mrf.mxu0
        %v862 = vadd.f32 0.0, %v861
        %v863 = vpop.f32.mrf.mxu0
        %v864 = vadd.f32 0.0, %v863
        %865 = vmatmul.bf16.gmra.mxu0 %v830
        %v866 = vpop.f32.mrf.mxu0
        %v867 = vadd.f32 0.0, %v866
        %v868 = vpop.f32.mrf.mxu0
        %v869 = vadd.f32 0.0, %v868
        %870 = vmatmul.bf16.gmra.mxu0 %v833
        %v871 = vpop.f32.mrf.mxu0
        %v872 = vadd.f32 0.0, %v871
        %v873 = vpop.f32.mrf.mxu0
        %v874 = vadd.f32 0.0, %v873
        %875 = vmatmul.bf16.gmra.mxu0 %v836
        %v876 = vpop.f32.mrf.mxu0
        %v877 = vadd.f32 0.0, %v876
        %v878 = vpop.f32.mrf.mxu0
        %v879 = vadd.f32 0.0, %v878
        %880 = vmatmul.bf16.gmra.mxu0 %v839
        %v881 = vpop.f32.mrf.mxu0
        %v882 = vadd.f32 0.0, %v881
        %v883 = vpop.f32.mrf.mxu0
        %v884 = vadd.f32 0.0, %v883
        %885 = vmatmul.bf16.gmra.mxu0 %v842
        %v886 = vpop.f32.mrf.mxu0
        %v887 = vadd.f32 0.0, %v886
        %v888 = vpop.f32.mrf.mxu0
        %v889 = vadd.f32 0.0, %v888
        %890 = vmatmul.bf16.gmra.mxu0 %v845
        %v891 = vpop.f32.mrf.mxu0
        %v892 = vadd.f32 0.0, %v891
        %v893 = vpop.f32.mrf.mxu0
        %v894 = vadd.f32 0.0, %v893
        %895 = vdwg.mxu0
        %v896 = vpack.c.bf16 %v857, %v857
        %v897 = vpack.c.bf16 %v859, %v859
        %v898 = vpack.c.bf16 %v862, %v862
        %v899 = vpack.c.bf16 %v864, %v864
        %v900 = vpack.c.bf16 %v867, %v867
        %v901 = vpack.c.bf16 %v869, %v869
        %v902 = vpack.c.bf16 %v872, %v872
        %v903 = vpack.c.bf16 %v874, %v874
        %v904 = vpack.c.bf16 %v877, %v877
        %v905 = vpack.c.bf16 %v879, %v879
        %v906 = vpack.c.bf16 %v882, %v882
        %v907 = vpack.c.bf16 %v884, %v884
        %v908 = vpack.c.bf16 %v887, %v887
        %v909 = vpack.c.bf16 %v889, %v889
        %v910 = vpack.c.bf16 %v892, %v892
        %v911 = vpack.c.bf16 %v894, %v894
        %v928 = vunpack.c.l.b16 %v896
        %v929 = vunpack.c.l.b16 %v897
        %v930 = vunpack.c.l.b16 %v898
        %v931 = vunpack.c.l.b16 %v899
        %v932 = vunpack.c.l.b16 %v900
        %v933 = vunpack.c.l.b16 %v901
        %v934 = vunpack.c.l.b16 %v902
        %v935 = vunpack.c.l.b16 %v903
        %v936 = vunpack.c.l.b16 %v904
        %v937 = vunpack.c.l.b16 %v905
        %v938 = vunpack.c.l.b16 %v906
        %v939 = vunpack.c.l.b16 %v907
        %v940 = vunpack.c.l.b16 %v908
        %v941 = vunpack.c.l.b16 %v909
        %v942 = vunpack.c.l.b16 %v910
        %v943 = vunpack.c.l.b16 %v911
        %v944 = vpack.c.b16 %v929, %v928
        %v945 = vpack.c.b16 %v931, %v930
        %v946 = vpack.c.b16 %v933, %v932
        %v947 = vpack.c.b16 %v935, %v934
        %v948 = vpack.c.b16 %v937, %v936
        %v949 = vpack.c.b16 %v939, %v938
        %v950 = vpack.c.b16 %v941, %v940
        %v951 = vpack.c.b16 %v943, %v942
        %v960 = vunpack.c.l.bf16 %v944
        %v961 = vunpack.c.h.bf16 %v944
        %v962 = vunpack.c.l.bf16 %v945
        %v963 = vunpack.c.h.bf16 %v945
        %v964 = vunpack.c.l.bf16 %v946
        %v965 = vunpack.c.h.bf16 %v946
        %v966 = vunpack.c.l.bf16 %v947
        %v967 = vunpack.c.h.bf16 %v947
        %v968 = vunpack.c.l.bf16 %v948
        %v969 = vunpack.c.h.bf16 %v948
        %v970 = vunpack.c.l.bf16 %v949
        %v971 = vunpack.c.h.bf16 %v949
        %v972 = vunpack.c.l.bf16 %v950
        %v973 = vunpack.c.h.bf16 %v950
        %v974 = vunpack.c.l.bf16 %v951
        %v975 = vunpack.c.h.bf16 %v951
        %v976 = vunpack.c.l.bf16 %v736
        %v977 = vunpack.c.h.bf16 %v736
        %v978 = vunpack.c.l.bf16 %v737
        %v979 = vunpack.c.h.bf16 %v737
        %v980 = vunpack.c.l.bf16 %v738
        %v981 = vunpack.c.h.bf16 %v738
        %v982 = vunpack.c.l.bf16 %v739
        %v983 = vunpack.c.h.bf16 %v739
        %v984 = vunpack.c.l.bf16 %v740
        %v985 = vunpack.c.l.bf16 %v741
        %v986 = vunpack.c.h.bf16 %v741
        %v987 = vunpack.c.l.bf16 %v742
        %v988 = vunpack.c.h.bf16 %v742
        %v989 = vunpack.c.l.bf16 %v743
        %v990 = vunpack.c.h.bf16 %v743
        %v991 = vunpack.c.l.bf16 %v744
        %v992 = vunpack.c.h.bf16 %v744
        %v993 = vunpack.c.l.bf16 %v745
        %v994 = vunpack.c.l.bf16 %v746
        %v995 = vunpack.c.h.bf16 %v746
        %v996 = vunpack.c.l.bf16 %v747
        %v997 = vunpack.c.h.bf16 %v747
        %v998 = vunpack.c.l.bf16 %v748
        %v999 = vunpack.c.h.bf16 %v748
        %v1000 = vunpack.c.l.bf16 %v749
        %v1001 = vunpack.c.h.bf16 %v749
        %v1002 = vunpack.c.l.bf16 %v750
        %v1003 = vunpack.c.l.bf16 %v751
        %v1004 = vunpack.c.h.bf16 %v751
        %v1005 = vunpack.c.l.bf16 %v752
        %v1006 = vunpack.c.h.bf16 %v752
        %v1007 = vunpack.c.l.bf16 %v753
        %v1008 = vunpack.c.h.bf16 %v753
        %v1009 = vunpack.c.l.bf16 %v754
        %v1010 = vunpack.c.h.bf16 %v754
        %v1011 = vunpack.c.l.bf16 %v755
        %v1012 = vunpack.c.l.bf16 %v756
        %v1013 = vunpack.c.h.bf16 %v756
        %v1014 = vunpack.c.l.bf16 %v757
        %v1015 = vunpack.c.h.bf16 %v757
        %v1016 = vunpack.c.l.bf16 %v758
        %v1017 = vunpack.c.h.bf16 %v758
        %v1018 = vunpack.c.l.bf16 %v759
        %v1019 = vunpack.c.h.bf16 %v759
        %v1020 = vunpack.c.l.bf16 %v760
        %v1021 = vunpack.c.l.bf16 %v761
        %v1022 = vunpack.c.h.bf16 %v761
        %v1023 = vunpack.c.l.bf16 %v762
        %v1024 = vunpack.c.h.bf16 %v762
        %v1025 = vunpack.c.l.bf16 %v763
        %v1026 = vunpack.c.h.bf16 %v763
        %v1027 = vunpack.c.l.bf16 %v764
        %v1028 = vunpack.c.h.bf16 %v764
        %v1029 = vunpack.c.l.bf16 %v765
        %v1030 = vunpack.c.l.bf16 %v766
        %v1031 = vunpack.c.h.bf16 %v766
        %v1032 = vunpack.c.l.bf16 %v767
        %v1033 = vunpack.c.h.bf16 %v767
        %v1034 = vunpack.c.l.bf16 %v768
        %v1035 = vunpack.c.h.bf16 %v768
        %v1036 = vunpack.c.l.bf16 %v769
        %v1037 = vunpack.c.h.bf16 %v769
        %v1038 = vunpack.c.l.bf16 %v770
        %v1039 = vunpack.c.l.bf16 %v771
        %v1040 = vunpack.c.h.bf16 %v771
        %v1041 = vunpack.c.l.bf16 %v772
        %v1042 = vunpack.c.h.bf16 %v772
        %v1043 = vunpack.c.l.bf16 %v773
        %v1044 = vunpack.c.h.bf16 %v773
        %v1045 = vunpack.c.l.bf16 %v774
        %v1046 = vunpack.c.h.bf16 %v774
        %v1047 = vunpack.c.l.bf16 %v775
        %v1048 = vunpack.c.l.bf16 %v776
        %v1049 = vunpack.c.h.bf16 %v776
        %v1050 = vunpack.c.l.bf16 %v777
        %v1051 = vunpack.c.h.bf16 %v777
        %v1052 = vunpack.c.l.bf16 %v778
        %v1053 = vunpack.c.h.bf16 %v778
        %v1054 = vunpack.c.l.bf16 %v779
        %v1055 = vunpack.c.h.bf16 %v779
        %v1056 = vunpack.c.l.bf16 %v780
        %v1057 = vunpack.c.l.bf16 %v781
        %v1058 = vunpack.c.h.bf16 %v781
        %v1059 = vunpack.c.l.bf16 %v782
        %v1060 = vunpack.c.h.bf16 %v782
        %v1061 = vunpack.c.l.bf16 %v783
        %v1062 = vunpack.c.h.bf16 %v783
        %v1063 = vunpack.c.l.bf16 %v784
        %v1064 = vunpack.c.h.bf16 %v784
        %v1065 = vunpack.c.l.bf16 %v785
        %v1066 = vunpack.c.l.bf16 %v786
        %v1067 = vunpack.c.h.bf16 %v786
        %v1068 = vunpack.c.l.bf16 %v787
        %v1069 = vunpack.c.h.bf16 %v787
        %v1070 = vunpack.c.l.bf16 %v788
        %v1071 = vunpack.c.h.bf16 %v788
        %v1072 = vunpack.c.l.bf16 %v789
        %v1073 = vunpack.c.h.bf16 %v789
        %v1074 = vunpack.c.l.bf16 %v790
        %v1075 = vunpack.c.l.bf16 %v791
        %v1076 = vunpack.c.h.bf16 %v791
        %v1077 = vunpack.c.l.bf16 %v792
        %v1078 = vunpack.c.h.bf16 %v792
        %v1079 = vunpack.c.l.bf16 %v793
        %v1080 = vunpack.c.h.bf16 %v793
        %v1081 = vunpack.c.l.bf16 %v794
        %v1082 = vunpack.c.h.bf16 %v794
        %v1083 = vunpack.c.l.bf16 %v795
        %v1084 = vunpack.c.l.bf16 %v796
        %v1085 = vunpack.c.h.bf16 %v796
        %v1086 = vunpack.c.l.bf16 %v797
        %v1087 = vunpack.c.h.bf16 %v797
        %v1088 = vunpack.c.l.bf16 %v798
        %v1089 = vunpack.c.h.bf16 %v798
        %v1090 = vunpack.c.l.bf16 %v799
        %v1091 = vunpack.c.h.bf16 %v799
        %v1092 = vunpack.c.l.bf16 %v800
        %v1093 = vunpack.c.l.bf16 %v801
        %v1094 = vunpack.c.h.bf16 %v801
        %v1095 = vunpack.c.l.bf16 %v802
        %v1096 = vunpack.c.h.bf16 %v802
        %v1097 = vunpack.c.l.bf16 %v803
        %v1098 = vunpack.c.h.bf16 %v803
        %v1099 = vunpack.c.l.bf16 %v804
        %v1100 = vunpack.c.h.bf16 %v804
        %v1101 = vunpack.c.l.bf16 %v805
        %v1102 = vunpack.c.l.bf16 %v806
        %v1103 = vunpack.c.h.bf16 %v806
        %v1104 = vunpack.c.l.bf16 %v807
        %v1105 = vunpack.c.h.bf16 %v807
        %v1106 = vunpack.c.l.bf16 %v808
        %v1107 = vunpack.c.h.bf16 %v808
        %v1108 = vunpack.c.l.bf16 %v809
        %v1109 = vunpack.c.h.bf16 %v809
        %v1110 = vunpack.c.l.bf16 %v810
        %v1111 = vunpack.c.l.bf16 %v811
        %v1112 = vunpack.c.h.bf16 %v811
        %v1113 = vunpack.c.l.bf16 %v812
        %v1114 = vunpack.c.h.bf16 %v812
        %v1115 = vunpack.c.l.bf16 %v813
        %v1116 = vunpack.c.h.bf16 %v813
        %v1117 = vunpack.c.l.bf16 %v814
        %v1118 = vunpack.c.h.bf16 %v814
        %v1119 = vunpack.c.l.bf16 %v815
        %v1120 = vmul.f32 %v960, %v976
        %v1121 = vmul.f32 %v960, %v977
        %v1122 = vmul.f32 %v960, %v978
        %v1123 = vmul.f32 %v960, %v979
        %v1124 = vmul.f32 %v960, %v980
        %v1125 = vmul.f32 %v960, %v981
        %v1126 = vmul.f32 %v960, %v982
        %v1127 = vmul.f32 %v960, %v983
        %v1128 = vmul.f32 %v960, %v984
        %v1129 = vmul.f32 %v961, %v985
        %v1130 = vmul.f32 %v961, %v986
        %v1131 = vmul.f32 %v961, %v987
        %v1132 = vmul.f32 %v961, %v988
        %v1133 = vmul.f32 %v961, %v989
        %v1134 = vmul.f32 %v961, %v990
        %v1135 = vmul.f32 %v961, %v991
        %v1136 = vmul.f32 %v961, %v992
        %v1137 = vmul.f32 %v961, %v993
        %v1138 = vmul.f32 %v962, %v994
        %v1139 = vmul.f32 %v962, %v995
        %v1140 = vmul.f32 %v962, %v996
        %v1141 = vmul.f32 %v962, %v997
        %v1142 = vmul.f32 %v962, %v998
        %v1143 = vmul.f32 %v962, %v999
        %v1144 = vmul.f32 %v962, %v1000
        %v1145 = vmul.f32 %v962, %v1001
        %v1146 = vmul.f32 %v962, %v1002
        %v1147 = vmul.f32 %v963, %v1003
        %v1148 = vmul.f32 %v963, %v1004
        %v1149 = vmul.f32 %v963, %v1005
        %v1150 = vmul.f32 %v963, %v1006
        %v1151 = vmul.f32 %v963, %v1007
        %v1152 = vmul.f32 %v963, %v1008
        %v1153 = vmul.f32 %v963, %v1009
        %v1154 = vmul.f32 %v963, %v1010
        %v1155 = vmul.f32 %v963, %v1011
        %v1156 = vmul.f32 %v964, %v1012
        %v1157 = vmul.f32 %v964, %v1013
        %v1158 = vmul.f32 %v964, %v1014
        %v1159 = vmul.f32 %v964, %v1015
        %v1160 = vmul.f32 %v964, %v1016
        %v1161 = vmul.f32 %v964, %v1017
        %v1162 = vmul.f32 %v964, %v1018
        %v1163 = vmul.f32 %v964, %v1019
        %v1164 = vmul.f32 %v964, %v1020
        %v1165 = vmul.f32 %v965, %v1021
        %v1166 = vmul.f32 %v965, %v1022
        %v1167 = vmul.f32 %v965, %v1023
        %v1168 = vmul.f32 %v965, %v1024
        %v1169 = vmul.f32 %v965, %v1025
        %v1170 = vmul.f32 %v965, %v1026
        %v1171 = vmul.f32 %v965, %v1027
        %v1172 = vmul.f32 %v965, %v1028
        %v1173 = vmul.f32 %v965, %v1029
        %v1174 = vmul.f32 %v966, %v1030
        %v1175 = vmul.f32 %v966, %v1031
        %v1176 = vmul.f32 %v966, %v1032
        %v1177 = vmul.f32 %v966, %v1033
        %v1178 = vmul.f32 %v966, %v1034
        %v1179 = vmul.f32 %v966, %v1035
        %v1180 = vmul.f32 %v966, %v1036
        %v1181 = vmul.f32 %v966, %v1037
        %v1182 = vmul.f32 %v966, %v1038
        %v1183 = vmul.f32 %v967, %v1039
        %v1184 = vmul.f32 %v967, %v1040
        %v1185 = vmul.f32 %v967, %v1041
        %v1186 = vmul.f32 %v967, %v1042
        %v1187 = vmul.f32 %v967, %v1043
        %v1188 = vmul.f32 %v967, %v1044
        %v1189 = vmul.f32 %v967, %v1045
        %v1190 = vmul.f32 %v967, %v1046
        %v1191 = vmul.f32 %v967, %v1047
        %v1192 = vmul.f32 %v968, %v1048
        %v1193 = vmul.f32 %v968, %v1049
        %v1194 = vmul.f32 %v968, %v1050
        %v1195 = vmul.f32 %v968, %v1051
        %v1196 = vmul.f32 %v968, %v1052
        %v1197 = vmul.f32 %v968, %v1053
        %v1198 = vmul.f32 %v968, %v1054
        %v1199 = vmul.f32 %v968, %v1055
        %v1200 = vmul.f32 %v968, %v1056
        %v1201 = vmul.f32 %v969, %v1057
        %v1202 = vmul.f32 %v969, %v1058
        %v1203 = vmul.f32 %v969, %v1059
        %v1204 = vmul.f32 %v969, %v1060
        %v1205 = vmul.f32 %v969, %v1061
        %v1206 = vmul.f32 %v969, %v1062
        %v1207 = vmul.f32 %v969, %v1063
        %v1208 = vmul.f32 %v969, %v1064
        %v1209 = vmul.f32 %v969, %v1065
        %v1210 = vmul.f32 %v970, %v1066
        %v1211 = vmul.f32 %v970, %v1067
        %v1212 = vmul.f32 %v970, %v1068
        %v1213 = vmul.f32 %v970, %v1069
        %v1214 = vmul.f32 %v970, %v1070
        %v1215 = vmul.f32 %v970, %v1071
        %v1216 = vmul.f32 %v970, %v1072
        %v1217 = vmul.f32 %v970, %v1073
        %v1218 = vmul.f32 %v970, %v1074
        %v1219 = vmul.f32 %v971, %v1075
        %v1220 = vmul.f32 %v971, %v1076
        %v1221 = vmul.f32 %v971, %v1077
        %v1222 = vmul.f32 %v971, %v1078
        %v1223 = vmul.f32 %v971, %v1079
        %v1224 = vmul.f32 %v971, %v1080
        %v1225 = vmul.f32 %v971, %v1081
        %v1226 = vmul.f32 %v971, %v1082
        %v1227 = vmul.f32 %v971, %v1083
        %v1228 = vmul.f32 %v972, %v1084
        %v1229 = vmul.f32 %v972, %v1085
        %v1230 = vmul.f32 %v972, %v1086
        %v1231 = vmul.f32 %v972, %v1087
        %v1232 = vmul.f32 %v972, %v1088
        %v1233 = vmul.f32 %v972, %v1089
        %v1234 = vmul.f32 %v972, %v1090
        %v1235 = vmul.f32 %v972, %v1091
        %v1236 = vmul.f32 %v972, %v1092
        %v1237 = vmul.f32 %v973, %v1093
        %v1238 = vmul.f32 %v973, %v1094
        %v1239 = vmul.f32 %v973, %v1095
        %v1240 = vmul.f32 %v973, %v1096
        %v1241 = vmul.f32 %v973, %v1097
        %v1242 = vmul.f32 %v973, %v1098
        %v1243 = vmul.f32 %v973, %v1099
        %v1244 = vmul.f32 %v973, %v1100
        %v1245 = vmul.f32 %v973, %v1101
        %v1246 = vmul.f32 %v974, %v1102
        %v1247 = vmul.f32 %v974, %v1103
        %v1248 = vmul.f32 %v974, %v1104
        %v1249 = vmul.f32 %v974, %v1105
        %v1250 = vmul.f32 %v974, %v1106
        %v1251 = vmul.f32 %v974, %v1107
        %v1252 = vmul.f32 %v974, %v1108
        %v1253 = vmul.f32 %v974, %v1109
        %v1254 = vmul.f32 %v974, %v1110
        %v1255 = vmul.f32 %v975, %v1111
        %v1256 = vmul.f32 %v975, %v1112
        %v1257 = vmul.f32 %v975, %v1113
        %v1258 = vmul.f32 %v975, %v1114
        %v1259 = vmul.f32 %v975, %v1115
        %v1260 = vmul.f32 %v975, %v1116
        %v1261 = vmul.f32 %v975, %v1117
        %v1262 = vmul.f32 %v975, %v1118
        %v1263 = vmul.f32 %v975, %v1119
        %v1264 = vpack.c.bf16 %v1129, %v1120
        %v1265 = vpack.c.bf16 %v1130, %v1121
        %v1266 = vpack.c.bf16 %v1131, %v1122
        %v1267 = vpack.c.bf16 %v1132, %v1123
        %v1268 = vpack.c.bf16 %v1133, %v1124
        %v1269 = vpack.c.bf16 %v1134, %v1125
        %v1270 = vpack.c.bf16 %v1135, %v1126
        %v1271 = vpack.c.bf16 %v1136, %v1127
        %v1272 = vpack.c.bf16 %v1137, %v1128
        %v1273 = vpack.c.bf16 %v1147, %v1138
        %v1274 = vpack.c.bf16 %v1148, %v1139
        %v1275 = vpack.c.bf16 %v1149, %v1140
        %v1276 = vpack.c.bf16 %v1150, %v1141
        %v1277 = vpack.c.bf16 %v1151, %v1142
        %v1278 = vpack.c.bf16 %v1152, %v1143
        %v1279 = vpack.c.bf16 %v1153, %v1144
        %v1280 = vpack.c.bf16 %v1154, %v1145
        %v1281 = vpack.c.bf16 %v1155, %v1146
        %v1282 = vpack.c.bf16 %v1165, %v1156
        %v1283 = vpack.c.bf16 %v1166, %v1157
        %v1284 = vpack.c.bf16 %v1167, %v1158
        %v1285 = vpack.c.bf16 %v1168, %v1159
        %v1286 = vpack.c.bf16 %v1169, %v1160
        %v1287 = vpack.c.bf16 %v1170, %v1161
        %v1288 = vpack.c.bf16 %v1171, %v1162
        %v1289 = vpack.c.bf16 %v1172, %v1163
        %v1290 = vpack.c.bf16 %v1173, %v1164
        %v1291 = vpack.c.bf16 %v1183, %v1174
        %v1292 = vpack.c.bf16 %v1184, %v1175
        %v1293 = vpack.c.bf16 %v1185, %v1176
        %v1294 = vpack.c.bf16 %v1186, %v1177
        %v1295 = vpack.c.bf16 %v1187, %v1178
        %v1296 = vpack.c.bf16 %v1188, %v1179
        %v1297 = vpack.c.bf16 %v1189, %v1180
        %v1298 = vpack.c.bf16 %v1190, %v1181
        %v1299 = vpack.c.bf16 %v1191, %v1182
        %v1300 = vpack.c.bf16 %v1201, %v1192
        %v1301 = vpack.c.bf16 %v1202, %v1193
        %v1302 = vpack.c.bf16 %v1203, %v1194
        %v1303 = vpack.c.bf16 %v1204, %v1195
        %v1304 = vpack.c.bf16 %v1205, %v1196
        %v1305 = vpack.c.bf16 %v1206, %v1197
        %v1306 = vpack.c.bf16 %v1207, %v1198
        %v1307 = vpack.c.bf16 %v1208, %v1199
        %v1308 = vpack.c.bf16 %v1209, %v1200
        %v1309 = vpack.c.bf16 %v1219, %v1210
        %v1310 = vpack.c.bf16 %v1220, %v1211
        %v1311 = vpack.c.bf16 %v1221, %v1212
        %v1312 = vpack.c.bf16 %v1222, %v1213
        %v1313 = vpack.c.bf16 %v1223, %v1214
        %v1314 = vpack.c.bf16 %v1224, %v1215
        %v1315 = vpack.c.bf16 %v1225, %v1216
        %v1316 = vpack.c.bf16 %v1226, %v1217
        %v1317 = vpack.c.bf16 %v1227, %v1218
        %v1318 = vpack.c.bf16 %v1237, %v1228
        %v1319 = vpack.c.bf16 %v1238, %v1229
        %v1320 = vpack.c.bf16 %v1239, %v1230
        %v1321 = vpack.c.bf16 %v1240, %v1231
        %v1322 = vpack.c.bf16 %v1241, %v1232
        %v1323 = vpack.c.bf16 %v1242, %v1233
        %v1324 = vpack.c.bf16 %v1243, %v1234
        %v1325 = vpack.c.bf16 %v1244, %v1235
        %v1326 = vpack.c.bf16 %v1245, %v1236
        %v1327 = vpack.c.bf16 %v1255, %v1246
        %v1328 = vpack.c.bf16 %v1256, %v1247
        %v1329 = vpack.c.bf16 %v1257, %v1248
        %v1330 = vpack.c.bf16 %v1258, %v1249
        %v1331 = vpack.c.bf16 %v1259, %v1250
        %v1332 = vpack.c.bf16 %v1260, %v1251
        %v1333 = vpack.c.bf16 %v1261, %v1252
        %v1334 = vpack.c.bf16 %v1262, %v1253
        %v1335 = vpack.c.bf16 %v1263, %v1254
        %v1336 = vld [vmem:[#allocation5] sm:$0xf]
        %v1337 = vld [vmem:[#allocation5 + $0x4] sm:$0xf]
        %v1338 = vld [vmem:[#allocation5 + $0x8] sm:$0xf]
        %v1339 = vld [vmem:[#allocation5 + $0xc] sm:$0xf]
        %v1340 = vld [vmem:[#allocation5 + $0x10] sm:$0xf]
        %v1341 = vld [vmem:[#allocation5 + $0x14] sm:$0xf]
        %v1342 = vld [vmem:[#allocation5 + $0x18] sm:$0xf]
        %v1343 = vld [vmem:[#allocation5 + $0x1c] sm:$0xf]
        %v1344 = vld [vmem:[#allocation5 + $0x20] sm:$0xf]
        %v1345 = vld [vmem:[#allocation5 + $0x24] sm:$0xf]
        %v1346 = vld [vmem:[#allocation5 + $0x28] sm:$0xf]
        %v1347 = vld [vmem:[#allocation5 + $0x2c] sm:$0xf]
        %v1348 = vld [vmem:[#allocation5 + $0x30] sm:$0xf]
        %v1349 = vld [vmem:[#allocation5 + $0x34] sm:$0xf]
        %v1350 = vld [vmem:[#allocation5 + $0x38] sm:$0xf]
        %v1351 = vld [vmem:[#allocation5 + $0x3c] sm:$0xf]
        %v1352 = vld [vmem:[#allocation5 + $0x40] sm:$0xf]
        %v1353 = vld [vmem:[#allocation5 + $0x44] sm:$0xf]
        %v1354 = vld [vmem:[#allocation5 + $0x48] sm:$0xf]
        %v1355 = vld [vmem:[#allocation5 + $0x4c] sm:$0xf]
        %v1356 = vld [vmem:[#allocation5 + $0x50] sm:$0xf]
        %v1357 = vld [vmem:[#allocation5 + $0x54] sm:$0xf]
        %v1358 = vld [vmem:[#allocation5 + $0x58] sm:$0xf]
        %v1359 = vld [vmem:[#allocation5 + $0x5c] sm:$0xf]
        %v1360 = vld [vmem:[#allocation5 + $0x60] sm:$0xf]
        %v1361 = vld [vmem:[#allocation5 + $0x64] sm:$0xf]
        %v1362 = vld [vmem:[#allocation5 + $0x68] sm:$0xf]
        %v1363 = vld [vmem:[#allocation5 + $0x6c] sm:$0xf]
        %v1364 = vld [vmem:[#allocation5 + $0x70] sm:$0xf]
        %v1365 = vld [vmem:[#allocation5 + $0x74] sm:$0xf]
        %v1366 = vld [vmem:[#allocation5 + $0x78] sm:$0xf]
        %v1367 = vld [vmem:[#allocation5 + $0x7c] sm:$0xf]
        %v1368 = vld [vmem:[#allocation5 + $0x80] sm:$0xf]
        %v1369 = vld [vmem:[#allocation5 + $0x84] sm:$0xf]
        %v1370 = vld [vmem:[#allocation5 + $0x88] sm:$0xf]
        %v1371 = vld [vmem:[#allocation5 + $0x8c] sm:$0xf]
        %v1372 = vld [vmem:[#allocation5 + $0x90] sm:$0xf]
        %v1373 = vld [vmem:[#allocation5 + $0x94] sm:$0xf]
        %v1374 = vld [vmem:[#allocation5 + $0x98] sm:$0xf]
        %v1375 = vld [vmem:[#allocation5 + $0x9c] sm:$0xf]
        %v1376 = vld [vmem:[#allocation5 + $0xa0] sm:$0xf]
        %v1377 = vld [vmem:[#allocation5 + $0xa4] sm:$0xf]
        %v1378 = vld [vmem:[#allocation5 + $0xa8] sm:$0xf]
        %v1379 = vld [vmem:[#allocation5 + $0xac] sm:$0xf]
        %v1380 = vld [vmem:[#allocation5 + $0xb0] sm:$0xf]
        %v1381 = vld [vmem:[#allocation5 + $0xb4] sm:$0xf]
        %v1382 = vld [vmem:[#allocation5 + $0xb8] sm:$0xf]
        %v1383 = vld [vmem:[#allocation5 + $0xbc] sm:$0xf]
        %v1384 = vld [vmem:[#allocation5 + $0xc0] sm:$0xf]
        %v1385 = vld [vmem:[#allocation5 + $0xc4] sm:$0xf]
        %v1386 = vld [vmem:[#allocation5 + $0xc8] sm:$0xf]
        %v1387 = vld [vmem:[#allocation5 + $0xcc] sm:$0xf]
        %v1388 = vld [vmem:[#allocation5 + $0xd0] sm:$0xf]
        %v1389 = vld [vmem:[#allocation5 + $0xd4] sm:$0xf]
        %v1390 = vld [vmem:[#allocation5 + $0xd8] sm:$0xf]
        %v1391 = vld [vmem:[#allocation5 + $0xdc] sm:$0xf]
        %v1392 = vld [vmem:[#allocation5 + $0xe0] sm:$0xf]
        %v1393 = vld [vmem:[#allocation5 + $0xe4] sm:$0xf]
        %v1394 = vld [vmem:[#allocation5 + $0xe8] sm:$0xf]
        %v1395 = vld [vmem:[#allocation5 + $0xec] sm:$0xf]
        %v1396 = vld [vmem:[#allocation5 + $0xf0] sm:$0xf]
        %v1397 = vld [vmem:[#allocation5 + $0xf4] sm:$0xf]
        %v1398 = vld [vmem:[#allocation5 + $0xf8] sm:$0xf]
        %v1399 = vld [vmem:[#allocation5 + $0xfc] sm:$0xf]
        %v1400 = vld [vmem:[#allocation5 + $0x100] sm:$0xf]
        %v1401 = vld [vmem:[#allocation5 + $0x104] sm:$0xf]
        %v1402 = vld [vmem:[#allocation5 + $0x108] sm:$0xf]
        %v1403 = vld [vmem:[#allocation5 + $0x10c] sm:$0xf]
        %v1404 = vld [vmem:[#allocation5 + $0x110] sm:$0xf]
        %v1405 = vld [vmem:[#allocation5 + $0x114] sm:$0xf]
        %v1406 = vld [vmem:[#allocation5 + $0x118] sm:$0xf]
        %v1407 = vld [vmem:[#allocation5 + $0x11c] sm:$0xf]
        %v1408 = vld [vmem:[#allocation5 + $0x120] sm:$0xf]
        %v1409 = vld [vmem:[#allocation5 + $0x124] sm:$0xf]
        %v1410 = vld [vmem:[#allocation5 + $0x128] sm:$0xf]
        %v1411 = vld [vmem:[#allocation5 + $0x12c] sm:$0xf]
        %v1412 = vld [vmem:[#allocation5 + $0x130] sm:$0xf]
        %v1413 = vld [vmem:[#allocation5 + $0x134] sm:$0xf]
        %v1414 = vld [vmem:[#allocation5 + $0x138] sm:$0xf]
        %v1415 = vld [vmem:[#allocation5 + $0x13c] sm:$0xf]
        %v1416 = vld [vmem:[#allocation5 + $0x140] sm:$0xf]
        %v1417 = vld [vmem:[#allocation5 + $0x144] sm:$0xf]
        %v1418 = vld [vmem:[#allocation5 + $0x148] sm:$0xf]
        %v1419 = vld [vmem:[#allocation5 + $0x14c] sm:$0xf]
        %v1420 = vld [vmem:[#allocation5 + $0x150] sm:$0xf]
        %v1421 = vld [vmem:[#allocation5 + $0x154] sm:$0xf]
        %v1422 = vld [vmem:[#allocation5 + $0x158] sm:$0xf]
        %v1423 = vld [vmem:[#allocation5 + $0x15c] sm:$0xf]
        %v1424 = vld [vmem:[#allocation5 + $0x160] sm:$0xf]
        %v1425 = vld [vmem:[#allocation5 + $0x164] sm:$0xf]
        %v1426 = vld [vmem:[#allocation5 + $0x168] sm:$0xf]
        %v1427 = vld [vmem:[#allocation5 + $0x16c] sm:$0xf]
        %v1428 = vld [vmem:[#allocation5 + $0x170] sm:$0xf]
        %v1429 = vld [vmem:[#allocation5 + $0x174] sm:$0xf]
        %v1430 = vld [vmem:[#allocation5 + $0x178] sm:$0xf]
        %v1431 = vld [vmem:[#allocation5 + $0x17c] sm:$0xf]
        %v1432 = vld [vmem:[#allocation5 + $0x180] sm:$0xf]
        %v1433 = vld [vmem:[#allocation5 + $0x184] sm:$0xf]
        %v1434 = vld [vmem:[#allocation5 + $0x188] sm:$0xf]
        %v1435 = vld [vmem:[#allocation5 + $0x18c] sm:$0xf]
        %v1436 = vld [vmem:[#allocation5 + $0x190] sm:$0xf]
        %v1437 = vld [vmem:[#allocation5 + $0x194] sm:$0xf]
        %v1438 = vld [vmem:[#allocation5 + $0x198] sm:$0xf]
        %v1439 = vld [vmem:[#allocation5 + $0x19c] sm:$0xf]
        %v1440 = vld [vmem:[#allocation5 + $0x1a0] sm:$0xf]
        %v1441 = vld [vmem:[#allocation5 + $0x1a4] sm:$0xf]
        %v1442 = vld [vmem:[#allocation5 + $0x1a8] sm:$0xf]
        %v1443 = vld [vmem:[#allocation5 + $0x1ac] sm:$0xf]
        %v1444 = vld [vmem:[#allocation5 + $0x1b0] sm:$0xf]
        %v1445 = vld [vmem:[#allocation5 + $0x1b4] sm:$0xf]
        %v1446 = vld [vmem:[#allocation5 + $0x1b8] sm:$0xf]
        %v1447 = vld [vmem:[#allocation5 + $0x1bc] sm:$0xf]
        %v1448 = vld [vmem:[#allocation5 + $0x1c0] sm:$0xf]
        %v1449 = vld [vmem:[#allocation5 + $0x1c4] sm:$0xf]
        %v1450 = vld [vmem:[#allocation5 + $0x1c8] sm:$0xf]
        %v1451 = vld [vmem:[#allocation5 + $0x1cc] sm:$0xf]
        %v1452 = vld [vmem:[#allocation5 + $0x1d0] sm:$0xf]
        %v1453 = vld [vmem:[#allocation5 + $0x1d4] sm:$0xf]
        %v1454 = vld [vmem:[#allocation5 + $0x1d8] sm:$0xf]
        %v1455 = vld [vmem:[#allocation5 + $0x1dc] sm:$0xf]
        %v1456 = vld [vmem:[#allocation5 + $0x1e0] sm:$0xf]
        %v1457 = vld [vmem:[#allocation5 + $0x1e4] sm:$0xf]
        %v1458 = vld [vmem:[#allocation5 + $0x1e8] sm:$0xf]
        %v1459 = vld [vmem:[#allocation5 + $0x1ec] sm:$0xf]
        %v1460 = vld [vmem:[#allocation5 + $0x1f0] sm:$0xf]
        %v1461 = vld [vmem:[#allocation5 + $0x1f4] sm:$0xf]
        %v1462 = vld [vmem:[#allocation5 + $0x1f8] sm:$0xf]
        %v1463 = vld [vmem:[#allocation5 + $0x1fc] sm:$0xf]
        %v1464 = vld [vmem:[#allocation5 + $0x200] sm:$0xf]
        %v1465 = vld [vmem:[#allocation5 + $0x204] sm:$0xf]
        %v1466 = vld [vmem:[#allocation5 + $0x208] sm:$0xf]
        %v1467 = vld [vmem:[#allocation5 + $0x20c] sm:$0xf]
        %v1468 = vld [vmem:[#allocation5 + $0x210] sm:$0xf]
        %v1469 = vld [vmem:[#allocation5 + $0x214] sm:$0xf]
        %v1470 = vld [vmem:[#allocation5 + $0x218] sm:$0xf]
        %v1471 = vld [vmem:[#allocation5 + $0x21c] sm:$0xf]
        %v1472 = vld [vmem:[#allocation5 + $0x220] sm:$0xf]
        %v1473 = vld [vmem:[#allocation5 + $0x224] sm:$0xf]
        %v1474 = vld [vmem:[#allocation5 + $0x228] sm:$0xf]
        %v1475 = vld [vmem:[#allocation5 + $0x22c] sm:$0xf]
        %v1476 = vld [vmem:[#allocation5 + $0x230] sm:$0xf]
        %v1477 = vld [vmem:[#allocation5 + $0x234] sm:$0xf]
        %v1478 = vld [vmem:[#allocation5 + $0x238] sm:$0xf]
        %v1479 = vld [vmem:[#allocation5 + $0x23c] sm:$0xf]
        %v1624 = vunpack.c.l.b16 %v1336
        %v1625 = vunpack.c.l.b16 %v1337
        %v1626 = vunpack.c.l.b16 %v1338
        %v1627 = vunpack.c.l.b16 %v1339
        %v1628 = vunpack.c.l.b16 %v1340
        %v1629 = vunpack.c.l.b16 %v1341
        %v1630 = vunpack.c.l.b16 %v1342
        %v1631 = vunpack.c.l.b16 %v1343
        %v1632 = vunpack.c.l.b16 %v1344
        %v1633 = vunpack.c.l.b16 %v1345
        %v1634 = vunpack.c.l.b16 %v1346
        %v1635 = vunpack.c.l.b16 %v1347
        %v1636 = vunpack.c.l.b16 %v1348
        %v1637 = vunpack.c.l.b16 %v1349
        %v1638 = vunpack.c.l.b16 %v1350
        %v1639 = vunpack.c.l.b16 %v1351
        %v1640 = vunpack.c.l.b16 %v1352
        %v1641 = vunpack.c.l.b16 %v1353
        %v1642 = vunpack.c.l.b16 %v1354
        %v1643 = vunpack.c.l.b16 %v1355
        %v1644 = vunpack.c.l.b16 %v1356
        %v1645 = vunpack.c.l.b16 %v1357
        %v1646 = vunpack.c.l.b16 %v1358
        %v1647 = vunpack.c.l.b16 %v1359
        %v1648 = vunpack.c.l.b16 %v1360
        %v1649 = vunpack.c.l.b16 %v1361
        %v1650 = vunpack.c.l.b16 %v1362
        %v1651 = vunpack.c.l.b16 %v1363
        %v1652 = vunpack.c.l.b16 %v1364
        %v1653 = vunpack.c.l.b16 %v1365
        %v1654 = vunpack.c.l.b16 %v1366
        %v1655 = vunpack.c.l.b16 %v1367
        %v1656 = vunpack.c.l.b16 %v1368
        %v1657 = vunpack.c.l.b16 %v1369
        %v1658 = vunpack.c.l.b16 %v1370
        %v1659 = vunpack.c.l.b16 %v1371
        %v1660 = vunpack.c.l.b16 %v1372
        %v1661 = vunpack.c.l.b16 %v1373
        %v1662 = vunpack.c.l.b16 %v1374
        %v1663 = vunpack.c.l.b16 %v1375
        %v1664 = vunpack.c.l.b16 %v1376
        %v1665 = vunpack.c.l.b16 %v1377
        %v1666 = vunpack.c.l.b16 %v1378
        %v1667 = vunpack.c.l.b16 %v1379
        %v1668 = vunpack.c.l.b16 %v1380
        %v1669 = vunpack.c.l.b16 %v1381
        %v1670 = vunpack.c.l.b16 %v1382
        %v1671 = vunpack.c.l.b16 %v1383
        %v1672 = vunpack.c.l.b16 %v1384
        %v1673 = vunpack.c.l.b16 %v1385
        %v1674 = vunpack.c.l.b16 %v1386
        %v1675 = vunpack.c.l.b16 %v1387
        %v1676 = vunpack.c.l.b16 %v1388
        %v1677 = vunpack.c.l.b16 %v1389
        %v1678 = vunpack.c.l.b16 %v1390
        %v1679 = vunpack.c.l.b16 %v1391
        %v1680 = vunpack.c.l.b16 %v1392
        %v1681 = vunpack.c.l.b16 %v1393
        %v1682 = vunpack.c.l.b16 %v1394
        %v1683 = vunpack.c.l.b16 %v1395
        %v1684 = vunpack.c.l.b16 %v1396
        %v1685 = vunpack.c.l.b16 %v1397
        %v1686 = vunpack.c.l.b16 %v1398
        %v1687 = vunpack.c.l.b16 %v1399
        %v1688 = vunpack.c.l.b16 %v1400
        %v1689 = vunpack.c.l.b16 %v1401
        %v1690 = vunpack.c.l.b16 %v1402
        %v1691 = vunpack.c.l.b16 %v1403
        %v1692 = vunpack.c.l.b16 %v1404
        %v1693 = vunpack.c.l.b16 %v1405
        %v1694 = vunpack.c.l.b16 %v1406
        %v1695 = vunpack.c.l.b16 %v1407
        %v1696 = vunpack.c.l.b16 %v1408
        %v1697 = vunpack.c.l.b16 %v1409
        %v1698 = vunpack.c.l.b16 %v1410
        %v1699 = vunpack.c.l.b16 %v1411
        %v1700 = vunpack.c.l.b16 %v1412
        %v1701 = vunpack.c.l.b16 %v1413
        %v1702 = vunpack.c.l.b16 %v1414
        %v1703 = vunpack.c.l.b16 %v1415
        %v1704 = vunpack.c.l.b16 %v1416
        %v1705 = vunpack.c.l.b16 %v1417
        %v1706 = vunpack.c.l.b16 %v1418
        %v1707 = vunpack.c.l.b16 %v1419
        %v1708 = vunpack.c.l.b16 %v1420
        %v1709 = vunpack.c.l.b16 %v1421
        %v1710 = vunpack.c.l.b16 %v1422
        %v1711 = vunpack.c.l.b16 %v1423
        %v1712 = vunpack.c.l.b16 %v1424
        %v1713 = vunpack.c.l.b16 %v1425
        %v1714 = vunpack.c.l.b16 %v1426
        %v1715 = vunpack.c.l.b16 %v1427
        %v1716 = vunpack.c.l.b16 %v1428
        %v1717 = vunpack.c.l.b16 %v1429
        %v1718 = vunpack.c.l.b16 %v1430
        %v1719 = vunpack.c.l.b16 %v1431
        %v1720 = vunpack.c.l.b16 %v1432
        %v1721 = vunpack.c.l.b16 %v1433
        %v1722 = vunpack.c.l.b16 %v1434
        %v1723 = vunpack.c.l.b16 %v1435
        %v1724 = vunpack.c.l.b16 %v1436
        %v1725 = vunpack.c.l.b16 %v1437
        %v1726 = vunpack.c.l.b16 %v1438
        %v1727 = vunpack.c.l.b16 %v1439
        %v1728 = vunpack.c.l.b16 %v1440
        %v1729 = vunpack.c.l.b16 %v1441
        %v1730 = vunpack.c.l.b16 %v1442
        %v1731 = vunpack.c.l.b16 %v1443
        %v1732 = vunpack.c.l.b16 %v1444
        %v1733 = vunpack.c.l.b16 %v1445
        %v1734 = vunpack.c.l.b16 %v1446
        %v1735 = vunpack.c.l.b16 %v1447
        %v1736 = vunpack.c.l.b16 %v1448
        %v1737 = vunpack.c.l.b16 %v1449
        %v1738 = vunpack.c.l.b16 %v1450
        %v1739 = vunpack.c.l.b16 %v1451
        %v1740 = vunpack.c.l.b16 %v1452
        %v1741 = vunpack.c.l.b16 %v1453
        %v1742 = vunpack.c.l.b16 %v1454
        %v1743 = vunpack.c.l.b16 %v1455
        %v1744 = vunpack.c.l.b16 %v1456
        %v1745 = vunpack.c.l.b16 %v1457
        %v1746 = vunpack.c.l.b16 %v1458
        %v1747 = vunpack.c.l.b16 %v1459
        %v1748 = vunpack.c.l.b16 %v1460
        %v1749 = vunpack.c.l.b16 %v1461
        %v1750 = vunpack.c.l.b16 %v1462
        %v1751 = vunpack.c.l.b16 %v1463
        %v1752 = vunpack.c.l.b16 %v1464
        %v1753 = vunpack.c.l.b16 %v1465
        %v1754 = vunpack.c.l.b16 %v1466
        %v1755 = vunpack.c.l.b16 %v1467
        %v1756 = vunpack.c.l.b16 %v1468
        %v1757 = vunpack.c.l.b16 %v1469
        %v1758 = vunpack.c.l.b16 %v1470
        %v1759 = vunpack.c.l.b16 %v1471
        %v1760 = vunpack.c.l.b16 %v1472
        %v1761 = vunpack.c.l.b16 %v1473
        %v1762 = vunpack.c.l.b16 %v1474
        %v1763 = vunpack.c.l.b16 %v1475
        %v1764 = vunpack.c.l.b16 %v1476
        %v1765 = vunpack.c.l.b16 %v1477
        %v1766 = vunpack.c.l.b16 %v1478
        %v1767 = vunpack.c.l.b16 %v1479
        %v1768 = vpack.c.b16 %v1625, %v1624
        %v1769 = vpack.c.b16 %v1627, %v1626
        %v1770 = vpack.c.b16 %v1629, %v1628
        %v1771 = vpack.c.b16 %v1631, %v1630
        %v1772 = vpack.c.b16 %v1633, %v1632
        %v1773 = vpack.c.b16 %v1635, %v1634
        %v1774 = vpack.c.b16 %v1637, %v1636
        %v1775 = vpack.c.b16 %v1639, %v1638
        %v1776 = vpack.c.b16 %v1641, %v1640
        %v1777 = vpack.c.b16 %v1643, %v1642
        %v1778 = vpack.c.b16 %v1645, %v1644
        %v1779 = vpack.c.b16 %v1647, %v1646
        %v1780 = vpack.c.b16 %v1649, %v1648
        %v1781 = vpack.c.b16 %v1651, %v1650
        %v1782 = vpack.c.b16 %v1653, %v1652
        %v1783 = vpack.c.b16 %v1655, %v1654
        %v1784 = vpack.c.b16 %v1657, %v1656
        %v1785 = vpack.c.b16 %v1659, %v1658
        %v1786 = vpack.c.b16 %v1661, %v1660
        %v1787 = vpack.c.b16 %v1663, %v1662
        %v1788 = vpack.c.b16 %v1665, %v1664
        %v1789 = vpack.c.b16 %v1667, %v1666
        %v1790 = vpack.c.b16 %v1669, %v1668
        %v1791 = vpack.c.b16 %v1671, %v1670
        %v1792 = vpack.c.b16 %v1673, %v1672
        %v1793 = vpack.c.b16 %v1675, %v1674
        %v1794 = vpack.c.b16 %v1677, %v1676
        %v1795 = vpack.c.b16 %v1679, %v1678
        %v1796 = vpack.c.b16 %v1681, %v1680
        %v1797 = vpack.c.b16 %v1683, %v1682
        %v1798 = vpack.c.b16 %v1685, %v1684
        %v1799 = vpack.c.b16 %v1687, %v1686
        %v1800 = vpack.c.b16 %v1689, %v1688
        %v1801 = vpack.c.b16 %v1691, %v1690
        %v1802 = vpack.c.b16 %v1693, %v1692
        %v1803 = vpack.c.b16 %v1695, %v1694
        %v1804 = vpack.c.b16 %v1697, %v1696
        %v1805 = vpack.c.b16 %v1699, %v1698
        %v1806 = vpack.c.b16 %v1701, %v1700
        %v1807 = vpack.c.b16 %v1703, %v1702
        %v1808 = vpack.c.b16 %v1705, %v1704
        %v1809 = vpack.c.b16 %v1707, %v1706
        %v1810 = vpack.c.b16 %v1709, %v1708
        %v1811 = vpack.c.b16 %v1711, %v1710
        %v1812 = vpack.c.b16 %v1713, %v1712
        %v1813 = vpack.c.b16 %v1715, %v1714
        %v1814 = vpack.c.b16 %v1717, %v1716
        %v1815 = vpack.c.b16 %v1719, %v1718
        %v1816 = vpack.c.b16 %v1721, %v1720
        %v1817 = vpack.c.b16 %v1723, %v1722
        %v1818 = vpack.c.b16 %v1725, %v1724
        %v1819 = vpack.c.b16 %v1727, %v1726
        %v1820 = vpack.c.b16 %v1729, %v1728
        %v1821 = vpack.c.b16 %v1731, %v1730
        %v1822 = vpack.c.b16 %v1733, %v1732
        %v1823 = vpack.c.b16 %v1735, %v1734
        %v1824 = vpack.c.b16 %v1737, %v1736
        %v1825 = vpack.c.b16 %v1739, %v1738
        %v1826 = vpack.c.b16 %v1741, %v1740
        %v1827 = vpack.c.b16 %v1743, %v1742
        %v1828 = vpack.c.b16 %v1745, %v1744
        %v1829 = vpack.c.b16 %v1747, %v1746
        %v1830 = vpack.c.b16 %v1749, %v1748
        %v1831 = vpack.c.b16 %v1751, %v1750
        %v1832 = vpack.c.b16 %v1753, %v1752
        %v1833 = vpack.c.b16 %v1755, %v1754
        %v1834 = vpack.c.b16 %v1757, %v1756
        %v1835 = vpack.c.b16 %v1759, %v1758
        %v1836 = vpack.c.b16 %v1761, %v1760
        %v1837 = vpack.c.b16 %v1763, %v1762
        %v1838 = vpack.c.b16 %v1765, %v1764
        %v1839 = vpack.c.b16 %v1767, %v1766
        %1912 = vmatpush.bf16.msra.mxu0 %v1775
        %1913 = vmatpush.bf16.msra.mxu0 %v1774
        %1914 = vmatpush.bf16.msra.mxu0 %v1773
        %1915 = vmatpush.bf16.msra.mxu0 %v1772
        %1916 = vmatpush.bf16.msra.mxu0 %v1771
        %1917 = vmatpush.bf16.msra.mxu0 %v1770
        %1918 = vmatpush.bf16.msra.mxu0 %v1769
        %1919 = vmatpush.bf16.msra.mxu0 %v1768
        %1920 = vmatmul.bf16.gmra.mxu0 %v1264
        %v1921 = vpop.f32.mrf.mxu0
        %v1922 = vadd.f32 0.0, %v1921
        %v1923 = vpop.f32.mrf.mxu0
        %v1924 = vadd.f32 0.0, %v1923
        %1925 = vmatmul.bf16.gmra.mxu0 %v1273
        %v1926 = vpop.f32.mrf.mxu0
        %v1927 = vadd.f32 0.0, %v1926
        %v1928 = vpop.f32.mrf.mxu0
        %v1929 = vadd.f32 0.0, %v1928
        %1930 = vmatmul.bf16.gmra.mxu0 %v1282
        %v1931 = vpop.f32.mrf.mxu0
        %v1932 = vadd.f32 0.0, %v1931
        %v1933 = vpop.f32.mrf.mxu0
        %v1934 = vadd.f32 0.0, %v1933
        %1935 = vmatmul.bf16.gmra.mxu0 %v1291
        %v1936 = vpop.f32.mrf.mxu0
        %v1937 = vadd.f32 0.0, %v1936
        %v1938 = vpop.f32.mrf.mxu0
        %v1939 = vadd.f32 0.0, %v1938
        %1940 = vmatmul.bf16.gmra.mxu0 %v1300
        %v1941 = vpop.f32.mrf.mxu0
        %v1942 = vadd.f32 0.0, %v1941
        %v1943 = vpop.f32.mrf.mxu0
        %v1944 = vadd.f32 0.0, %v1943
        %1945 = vmatmul.bf16.gmra.mxu0 %v1309
        %v1946 = vpop.f32.mrf.mxu0
        %v1947 = vadd.f32 0.0, %v1946
        %v1948 = vpop.f32.mrf.mxu0
        %v1949 = vadd.f32 0.0, %v1948
        %1950 = vmatmul.bf16.gmra.mxu0 %v1318
        %v1951 = vpop.f32.mrf.mxu0
        %v1952 = vadd.f32 0.0, %v1951
        %v1953 = vpop.f32.mrf.mxu0
        %v1954 = vadd.f32 0.0, %v1953
        %1955 = vmatmul.bf16.gmra.mxu0 %v1327
        %v1956 = vpop.f32.mrf.mxu0
        %v1957 = vadd.f32 0.0, %v1956
        %v1958 = vpop.f32.mrf.mxu0
        %v1959 = vadd.f32 0.0, %v1958
        %1960 = vdwg.mxu0
        %1961 = vmatpush.bf16.msra.mxu0 %v1783
        %1962 = vmatpush.bf16.msra.mxu0 %v1782
        %1963 = vmatpush.bf16.msra.mxu0 %v1781
        %1964 = vmatpush.bf16.msra.mxu0 %v1780
        %1965 = vmatpush.bf16.msra.mxu0 %v1779
        %1966 = vmatpush.bf16.msra.mxu0 %v1778
        %1967 = vmatpush.bf16.msra.mxu0 %v1777
        %1968 = vmatpush.bf16.msra.mxu0 %v1776
        %1969 = vmatmul.bf16.gmra.mxu0 %v1265
        %v1970 = vpop.f32.mrf.mxu0
        %v1971 = vadd.f32 %v1922, %v1970
        %v1972 = vpop.f32.mrf.mxu0
        %v1973 = vadd.f32 %v1924, %v1972
        %1974 = vmatmul.bf16.gmra.mxu0 %v1274
        %v1975 = vpop.f32.mrf.mxu0
        %v1976 = vadd.f32 %v1927, %v1975
        %v1977 = vpop.f32.mrf.mxu0
        %v1978 = vadd.f32 %v1929, %v1977
        %1979 = vmatmul.bf16.gmra.mxu0 %v1283
        %v1980 = vpop.f32.mrf.mxu0
        %v1981 = vadd.f32 %v1932, %v1980
        %v1982 = vpop.f32.mrf.mxu0
        %v1983 = vadd.f32 %v1934, %v1982
        %1984 = vmatmul.bf16.gmra.mxu0 %v1292
        %v1985 = vpop.f32.mrf.mxu0
        %v1986 = vadd.f32 %v1937, %v1985
        %v1987 = vpop.f32.mrf.mxu0
        %v1988 = vadd.f32 %v1939, %v1987
        %1989 = vmatmul.bf16.gmra.mxu0 %v1301
        %v1990 = vpop.f32.mrf.mxu0
        %v1991 = vadd.f32 %v1942, %v1990
        %v1992 = vpop.f32.mrf.mxu0
        %v1993 = vadd.f32 %v1944, %v1992
        %1994 = vmatmul.bf16.gmra.mxu0 %v1310
        %v1995 = vpop.f32.mrf.mxu0
        %v1996 = vadd.f32 %v1947, %v1995
        %v1997 = vpop.f32.mrf.mxu0
        %v1998 = vadd.f32 %v1949, %v1997
        %1999 = vmatmul.bf16.gmra.mxu0 %v1319
        %v2000 = vpop.f32.mrf.mxu0
        %v2001 = vadd.f32 %v1952, %v2000
        %v2002 = vpop.f32.mrf.mxu0
        %v2003 = vadd.f32 %v1954, %v2002
        %2004 = vmatmul.bf16.gmra.mxu0 %v1328
        %v2005 = vpop.f32.mrf.mxu0
        %v2006 = vadd.f32 %v1957, %v2005
        %v2007 = vpop.f32.mrf.mxu0
        %v2008 = vadd.f32 %v1959, %v2007
        %2009 = vdwg.mxu0
        %2010 = vmatpush.bf16.msra.mxu0 %v1791
        %2011 = vmatpush.bf16.msra.mxu0 %v1790
        %2012 = vmatpush.bf16.msra.mxu0 %v1789
        %2013 = vmatpush.bf16.msra.mxu0 %v1788
        %2014 = vmatpush.bf16.msra.mxu0 %v1787
        %2015 = vmatpush.bf16.msra.mxu0 %v1786
        %2016 = vmatpush.bf16.msra.mxu0 %v1785
        %2017 = vmatpush.bf16.msra.mxu0 %v1784
        %2018 = vmatmul.bf16.gmra.mxu0 %v1266
        %v2019 = vpop.f32.mrf.mxu0
        %v2020 = vadd.f32 %v1971, %v2019
        %v2021 = vpop.f32.mrf.mxu0
        %v2022 = vadd.f32 %v1973, %v2021
        %2023 = vmatmul.bf16.gmra.mxu0 %v1275
        %v2024 = vpop.f32.mrf.mxu0
        %v2025 = vadd.f32 %v1976, %v2024
        %v2026 = vpop.f32.mrf.mxu0
        %v2027 = vadd.f32 %v1978, %v2026
        %2028 = vmatmul.bf16.gmra.mxu0 %v1284
        %v2029 = vpop.f32.mrf.mxu0
        %v2030 = vadd.f32 %v1981, %v2029
        %v2031 = vpop.f32.mrf.mxu0
        %v2032 = vadd.f32 %v1983, %v2031
        %2033 = vmatmul.bf16.gmra.mxu0 %v1293
        %v2034 = vpop.f32.mrf.mxu0
        %v2035 = vadd.f32 %v1986, %v2034
        %v2036 = vpop.f32.mrf.mxu0
        %v2037 = vadd.f32 %v1988, %v2036
        %2038 = vmatmul.bf16.gmra.mxu0 %v1302
        %v2039 = vpop.f32.mrf.mxu0
        %v2040 = vadd.f32 %v1991, %v2039
        %v2041 = vpop.f32.mrf.mxu0
        %v2042 = vadd.f32 %v1993, %v2041
        %2043 = vmatmul.bf16.gmra.mxu0 %v1311
        %v2044 = vpop.f32.mrf.mxu0
        %v2045 = vadd.f32 %v1996, %v2044
        %v2046 = vpop.f32.mrf.mxu0
        %v2047 = vadd.f32 %v1998, %v2046
        %2048 = vmatmul.bf16.gmra.mxu0 %v1320
        %v2049 = vpop.f32.mrf.mxu0
        %v2050 = vadd.f32 %v2001, %v2049
        %v2051 = vpop.f32.mrf.mxu0
        %v2052 = vadd.f32 %v2003, %v2051
        %2053 = vmatmul.bf16.gmra.mxu0 %v1329
        %v2054 = vpop.f32.mrf.mxu0
        %v2055 = vadd.f32 %v2006, %v2054
        %v2056 = vpop.f32.mrf.mxu0
        %v2057 = vadd.f32 %v2008, %v2056
        %2058 = vdwg.mxu0
        %2059 = vmatpush.bf16.msra.mxu0 %v1799
        %2060 = vmatpush.bf16.msra.mxu0 %v1798
        %2061 = vmatpush.bf16.msra.mxu0 %v1797
        %2062 = vmatpush.bf16.msra.mxu0 %v1796
        %2063 = vmatpush.bf16.msra.mxu0 %v1795
        %2064 = vmatpush.bf16.msra.mxu0 %v1794
        %2065 = vmatpush.bf16.msra.mxu0 %v1793
        %2066 = vmatpush.bf16.msra.mxu0 %v1792
        %2067 = vmatmul.bf16.gmra.mxu0 %v1267
        %v2068 = vpop.f32.mrf.mxu0
        %v2069 = vadd.f32 %v2020, %v2068
        %v2070 = vpop.f32.mrf.mxu0
        %v2071 = vadd.f32 %v2022, %v2070
        %2072 = vmatmul.bf16.gmra.mxu0 %v1276
        %v2073 = vpop.f32.mrf.mxu0
        %v2074 = vadd.f32 %v2025, %v2073
        %v2075 = vpop.f32.mrf.mxu0
        %v2076 = vadd.f32 %v2027, %v2075
        %2077 = vmatmul.bf16.gmra.mxu0 %v1285
        %v2078 = vpop.f32.mrf.mxu0
        %v2079 = vadd.f32 %v2030, %v2078
        %v2080 = vpop.f32.mrf.mxu0
        %v2081 = vadd.f32 %v2032, %v2080
        %2082 = vmatmul.bf16.gmra.mxu0 %v1294
        %v2083 = vpop.f32.mrf.mxu0
        %v2084 = vadd.f32 %v2035, %v2083
        %v2085 = vpop.f32.mrf.mxu0
        %v2086 = vadd.f32 %v2037, %v2085
        %2087 = vmatmul.bf16.gmra.mxu0 %v1303
        %v2088 = vpop.f32.mrf.mxu0
        %v2089 = vadd.f32 %v2040, %v2088
        %v2090 = vpop.f32.mrf.mxu0
        %v2091 = vadd.f32 %v2042, %v2090
        %2092 = vmatmul.bf16.gmra.mxu0 %v1312
        %v2093 = vpop.f32.mrf.mxu0
        %v2094 = vadd.f32 %v2045, %v2093
        %v2095 = vpop.f32.mrf.mxu0
        %v2096 = vadd.f32 %v2047, %v2095
        %2097 = vmatmul.bf16.gmra.mxu0 %v1321
        %v2098 = vpop.f32.mrf.mxu0
        %v2099 = vadd.f32 %v2050, %v2098
        %v2100 = vpop.f32.mrf.mxu0
        %v2101 = vadd.f32 %v2052, %v2100
        %2102 = vmatmul.bf16.gmra.mxu0 %v1330
        %v2103 = vpop.f32.mrf.mxu0
        %v2104 = vadd.f32 %v2055, %v2103
        %v2105 = vpop.f32.mrf.mxu0
        %v2106 = vadd.f32 %v2057, %v2105
        %2107 = vdwg.mxu0
        %2108 = vmatpush.bf16.msra.mxu0 %v1807
        %2109 = vmatpush.bf16.msra.mxu0 %v1806
        %2110 = vmatpush.bf16.msra.mxu0 %v1805
        %2111 = vmatpush.bf16.msra.mxu0 %v1804
        %2112 = vmatpush.bf16.msra.mxu0 %v1803
        %2113 = vmatpush.bf16.msra.mxu0 %v1802
        %2114 = vmatpush.bf16.msra.mxu0 %v1801
        %2115 = vmatpush.bf16.msra.mxu0 %v1800
        %2116 = vmatmul.bf16.gmra.mxu0 %v1268
        %v2117 = vpop.f32.mrf.mxu0
        %v2118 = vadd.f32 %v2069, %v2117
        %v2119 = vpop.f32.mrf.mxu0
        %v2120 = vadd.f32 %v2071, %v2119
        %2121 = vmatmul.bf16.gmra.mxu0 %v1277
        %v2122 = vpop.f32.mrf.mxu0
        %v2123 = vadd.f32 %v2074, %v2122
        %v2124 = vpop.f32.mrf.mxu0
        %v2125 = vadd.f32 %v2076, %v2124
        %2126 = vmatmul.bf16.gmra.mxu0 %v1286
        %v2127 = vpop.f32.mrf.mxu0
        %v2128 = vadd.f32 %v2079, %v2127
        %v2129 = vpop.f32.mrf.mxu0
        %v2130 = vadd.f32 %v2081, %v2129
        %2131 = vmatmul.bf16.gmra.mxu0 %v1295
        %v2132 = vpop.f32.mrf.mxu0
        %v2133 = vadd.f32 %v2084, %v2132
        %v2134 = vpop.f32.mrf.mxu0
        %v2135 = vadd.f32 %v2086, %v2134
        %2136 = vmatmul.bf16.gmra.mxu0 %v1304
        %v2137 = vpop.f32.mrf.mxu0
        %v2138 = vadd.f32 %v2089, %v2137
        %v2139 = vpop.f32.mrf.mxu0
        %v2140 = vadd.f32 %v2091, %v2139
        %2141 = vmatmul.bf16.gmra.mxu0 %v1313
        %v2142 = vpop.f32.mrf.mxu0
        %v2143 = vadd.f32 %v2094, %v2142
        %v2144 = vpop.f32.mrf.mxu0
        %v2145 = vadd.f32 %v2096, %v2144
        %2146 = vmatmul.bf16.gmra.mxu0 %v1322
        %v2147 = vpop.f32.mrf.mxu0
        %v2148 = vadd.f32 %v2099, %v2147
        %v2149 = vpop.f32.mrf.mxu0
        %v2150 = vadd.f32 %v2101, %v2149
        %2151 = vmatmul.bf16.gmra.mxu0 %v1331
        %v2152 = vpop.f32.mrf.mxu0
        %v2153 = vadd.f32 %v2104, %v2152
        %v2154 = vpop.f32.mrf.mxu0
        %v2155 = vadd.f32 %v2106, %v2154
        %2156 = vdwg.mxu0
        %2157 = vmatpush.bf16.msra.mxu0 %v1815
        %2158 = vmatpush.bf16.msra.mxu0 %v1814
        %2159 = vmatpush.bf16.msra.mxu0 %v1813
        %2160 = vmatpush.bf16.msra.mxu0 %v1812
        %2161 = vmatpush.bf16.msra.mxu0 %v1811
        %2162 = vmatpush.bf16.msra.mxu0 %v1810
        %2163 = vmatpush.bf16.msra.mxu0 %v1809
        %2164 = vmatpush.bf16.msra.mxu0 %v1808
        %2165 = vmatmul.bf16.gmra.mxu0 %v1269
        %v2166 = vpop.f32.mrf.mxu0
        %v2167 = vadd.f32 %v2118, %v2166
        %v2168 = vpop.f32.mrf.mxu0
        %v2169 = vadd.f32 %v2120, %v2168
        %2170 = vmatmul.bf16.gmra.mxu0 %v1278
        %v2171 = vpop.f32.mrf.mxu0
        %v2172 = vadd.f32 %v2123, %v2171
        %v2173 = vpop.f32.mrf.mxu0
        %v2174 = vadd.f32 %v2125, %v2173
        %2175 = vmatmul.bf16.gmra.mxu0 %v1287
        %v2176 = vpop.f32.mrf.mxu0
        %v2177 = vadd.f32 %v2128, %v2176
        %v2178 = vpop.f32.mrf.mxu0
        %v2179 = vadd.f32 %v2130, %v2178
        %2180 = vmatmul.bf16.gmra.mxu0 %v1296
        %v2181 = vpop.f32.mrf.mxu0
        %v2182 = vadd.f32 %v2133, %v2181
        %v2183 = vpop.f32.mrf.mxu0
        %v2184 = vadd.f32 %v2135, %v2183
        %2185 = vmatmul.bf16.gmra.mxu0 %v1305
        %v2186 = vpop.f32.mrf.mxu0
        %v2187 = vadd.f32 %v2138, %v2186
        %v2188 = vpop.f32.mrf.mxu0
        %v2189 = vadd.f32 %v2140, %v2188
        %2190 = vmatmul.bf16.gmra.mxu0 %v1314
        %v2191 = vpop.f32.mrf.mxu0
        %v2192 = vadd.f32 %v2143, %v2191
        %v2193 = vpop.f32.mrf.mxu0
        %v2194 = vadd.f32 %v2145, %v2193
        %2195 = vmatmul.bf16.gmra.mxu0 %v1323
        %v2196 = vpop.f32.mrf.mxu0
        %v2197 = vadd.f32 %v2148, %v2196
        %v2198 = vpop.f32.mrf.mxu0
        %v2199 = vadd.f32 %v2150, %v2198
        %2200 = vmatmul.bf16.gmra.mxu0 %v1332
        %v2201 = vpop.f32.mrf.mxu0
        %v2202 = vadd.f32 %v2153, %v2201
        %v2203 = vpop.f32.mrf.mxu0
        %v2204 = vadd.f32 %v2155, %v2203
        %2205 = vdwg.mxu0
        %2206 = vmatpush.bf16.msra.mxu0 %v1823
        %2207 = vmatpush.bf16.msra.mxu0 %v1822
        %2208 = vmatpush.bf16.msra.mxu0 %v1821
        %2209 = vmatpush.bf16.msra.mxu0 %v1820
        %2210 = vmatpush.bf16.msra.mxu0 %v1819
        %2211 = vmatpush.bf16.msra.mxu0 %v1818
        %2212 = vmatpush.bf16.msra.mxu0 %v1817
        %2213 = vmatpush.bf16.msra.mxu0 %v1816
        %2214 = vmatmul.bf16.gmra.mxu0 %v1270
        %v2215 = vpop.f32.mrf.mxu0
        %v2216 = vadd.f32 %v2167, %v2215
        %v2217 = vpop.f32.mrf.mxu0
        %v2218 = vadd.f32 %v2169, %v2217
        %2219 = vmatmul.bf16.gmra.mxu0 %v1279
        %v2220 = vpop.f32.mrf.mxu0
        %v2221 = vadd.f32 %v2172, %v2220
        %v2222 = vpop.f32.mrf.mxu0
        %v2223 = vadd.f32 %v2174, %v2222
        %2224 = vmatmul.bf16.gmra.mxu0 %v1288
        %v2225 = vpop.f32.mrf.mxu0
        %v2226 = vadd.f32 %v2177, %v2225
        %v2227 = vpop.f32.mrf.mxu0
        %v2228 = vadd.f32 %v2179, %v2227
        %2229 = vmatmul.bf16.gmra.mxu0 %v1297
        %v2230 = vpop.f32.mrf.mxu0
        %v2231 = vadd.f32 %v2182, %v2230
        %v2232 = vpop.f32.mrf.mxu0
        %v2233 = vadd.f32 %v2184, %v2232
        %2234 = vmatmul.bf16.gmra.mxu0 %v1306
        %v2235 = vpop.f32.mrf.mxu0
        %v2236 = vadd.f32 %v2187, %v2235
        %v2237 = vpop.f32.mrf.mxu0
        %v2238 = vadd.f32 %v2189, %v2237
        %2239 = vmatmul.bf16.gmra.mxu0 %v1315
        %v2240 = vpop.f32.mrf.mxu0
        %v2241 = vadd.f32 %v2192, %v2240
        %v2242 = vpop.f32.mrf.mxu0
        %v2243 = vadd.f32 %v2194, %v2242
        %2244 = vmatmul.bf16.gmra.mxu0 %v1324
        %v2245 = vpop.f32.mrf.mxu0
        %v2246 = vadd.f32 %v2197, %v2245
        %v2247 = vpop.f32.mrf.mxu0
        %v2248 = vadd.f32 %v2199, %v2247
        %2249 = vmatmul.bf16.gmra.mxu0 %v1333
        %v2250 = vpop.f32.mrf.mxu0
        %v2251 = vadd.f32 %v2202, %v2250
        %v2252 = vpop.f32.mrf.mxu0
        %v2253 = vadd.f32 %v2204, %v2252
        %2254 = vdwg.mxu0
        %2255 = vmatpush.bf16.msra.mxu0 %v1831
        %2256 = vmatpush.bf16.msra.mxu0 %v1830
        %2257 = vmatpush.bf16.msra.mxu0 %v1829
        %2258 = vmatpush.bf16.msra.mxu0 %v1828
        %2259 = vmatpush.bf16.msra.mxu0 %v1827
        %2260 = vmatpush.bf16.msra.mxu0 %v1826
        %2261 = vmatpush.bf16.msra.mxu0 %v1825
        %2262 = vmatpush.bf16.msra.mxu0 %v1824
        %2263 = vmatmul.bf16.gmra.mxu0 %v1271
        %v2264 = vpop.f32.mrf.mxu0
        %v2265 = vadd.f32 %v2216, %v2264
        %v2266 = vpop.f32.mrf.mxu0
        %v2267 = vadd.f32 %v2218, %v2266
        %2268 = vmatmul.bf16.gmra.mxu0 %v1280
        %v2269 = vpop.f32.mrf.mxu0
        %v2270 = vadd.f32 %v2221, %v2269
        %v2271 = vpop.f32.mrf.mxu0
        %v2272 = vadd.f32 %v2223, %v2271
        %2273 = vmatmul.bf16.gmra.mxu0 %v1289
        %v2274 = vpop.f32.mrf.mxu0
        %v2275 = vadd.f32 %v2226, %v2274
        %v2276 = vpop.f32.mrf.mxu0
        %v2277 = vadd.f32 %v2228, %v2276
        %2278 = vmatmul.bf16.gmra.mxu0 %v1298
        %v2279 = vpop.f32.mrf.mxu0
        %v2280 = vadd.f32 %v2231, %v2279
        %v2281 = vpop.f32.mrf.mxu0
        %v2282 = vadd.f32 %v2233, %v2281
        %2283 = vmatmul.bf16.gmra.mxu0 %v1307
        %v2284 = vpop.f32.mrf.mxu0
        %v2285 = vadd.f32 %v2236, %v2284
        %v2286 = vpop.f32.mrf.mxu0
        %v2287 = vadd.f32 %v2238, %v2286
        %2288 = vmatmul.bf16.gmra.mxu0 %v1316
        %v2289 = vpop.f32.mrf.mxu0
        %v2290 = vadd.f32 %v2241, %v2289
        %v2291 = vpop.f32.mrf.mxu0
        %v2292 = vadd.f32 %v2243, %v2291
        %2293 = vmatmul.bf16.gmra.mxu0 %v1325
        %v2294 = vpop.f32.mrf.mxu0
        %v2295 = vadd.f32 %v2246, %v2294
        %v2296 = vpop.f32.mrf.mxu0
        %v2297 = vadd.f32 %v2248, %v2296
        %2298 = vmatmul.bf16.gmra.mxu0 %v1334
        %v2299 = vpop.f32.mrf.mxu0
        %v2300 = vadd.f32 %v2251, %v2299
        %v2301 = vpop.f32.mrf.mxu0
        %v2302 = vadd.f32 %v2253, %v2301
        %2303 = vdwg.mxu0
        %2304 = vmatpush.bf16.msra.mxu0 %v1839
        %2305 = vmatpush.bf16.msra.mxu0 %v1838
        %2306 = vmatpush.bf16.msra.mxu0 %v1837
        %2307 = vmatpush.bf16.msra.mxu0 %v1836
        %2308 = vmatpush.bf16.msra.mxu0 %v1835
        %2309 = vmatpush.bf16.msra.mxu0 %v1834
        %2310 = vmatpush.bf16.msra.mxu0 %v1833
        %2311 = vmatpush.bf16.msra.mxu0 %v1832
        %2312 = vmatmul.bf16.gmra.mxu0 %v1272
        %v2313 = vpop.f32.mrf.mxu0
        %v2314 = vadd.f32 %v2265, %v2313
        %v2315 = vpop.f32.mrf.mxu0
        %v2316 = vadd.f32 %v2267, %v2315
        %2317 = vmatmul.bf16.gmra.mxu0 %v1281
        %v2318 = vpop.f32.mrf.mxu0
        %v2319 = vadd.f32 %v2270, %v2318
        %v2320 = vpop.f32.mrf.mxu0
        %v2321 = vadd.f32 %v2272, %v2320
        %2322 = vmatmul.bf16.gmra.mxu0 %v1290
        %v2323 = vpop.f32.mrf.mxu0
        %v2324 = vadd.f32 %v2275, %v2323
        %v2325 = vpop.f32.mrf.mxu0
        %v2326 = vadd.f32 %v2277, %v2325
        %2327 = vmatmul.bf16.gmra.mxu0 %v1299
        %v2328 = vpop.f32.mrf.mxu0
        %v2329 = vadd.f32 %v2280, %v2328
        %v2330 = vpop.f32.mrf.mxu0
        %v2331 = vadd.f32 %v2282, %v2330
        %2332 = vmatmul.bf16.gmra.mxu0 %v1308
        %v2333 = vpop.f32.mrf.mxu0
        %v2334 = vadd.f32 %v2285, %v2333
        %v2335 = vpop.f32.mrf.mxu0
        %v2336 = vadd.f32 %v2287, %v2335
        %2337 = vmatmul.bf16.gmra.mxu0 %v1317
        %v2338 = vpop.f32.mrf.mxu0
        %v2339 = vadd.f32 %v2290, %v2338
        %v2340 = vpop.f32.mrf.mxu0
        %v2341 = vadd.f32 %v2292, %v2340
        %2342 = vmatmul.bf16.gmra.mxu0 %v1326
        %v2343 = vpop.f32.mrf.mxu0
        %v2344 = vadd.f32 %v2295, %v2343
        %v2345 = vpop.f32.mrf.mxu0
        %v2346 = vadd.f32 %v2297, %v2345
        %2347 = vmatmul.bf16.gmra.mxu0 %v1335
        %v2348 = vpop.f32.mrf.mxu0
        %v2349 = vadd.f32 %v2300, %v2348
        %v2350 = vpop.f32.mrf.mxu0
        %v2351 = vadd.f32 %v2302, %v2350
        %2352 = vdwg.mxu0
        %v2353 = vpack.c.bf16 %v2316, %v2314
        %v2354 = vpack.c.bf16 %v2321, %v2319
        %v2355 = vpack.c.bf16 %v2326, %v2324
        %v2356 = vpack.c.bf16 %v2331, %v2329
        %v2357 = vpack.c.bf16 %v2336, %v2334
        %v2358 = vpack.c.bf16 %v2341, %v2339
        %v2359 = vpack.c.bf16 %v2346, %v2344
        %v2360 = vpack.c.bf16 %v2351, %v2349
        %v2361 = vld [vmem:[%s5] sm:$0xf]
        %v2362 = vld [vmem:[%s5 + $0x4] sm:$0xf]
        %v2363 = vld [vmem:[%s5 + $0x8] sm:$0xf]
        %v2364 = vld [vmem:[%s5 + $0xc] sm:$0xf]
        %v2365 = vld [vmem:[%s5 + $0x10] sm:$0xf]
        %v2366 = vld [vmem:[%s5 + $0x14] sm:$0xf]
        %v2367 = vld [vmem:[%s5 + $0x18] sm:$0xf]
        %v2368 = vld [vmem:[%s5 + $0x1c] sm:$0xf]
        %v2369 = vld [vmem:[%s5 + $0x20] sm:$0xf]
        %v2370 = vld [vmem:[%s5 + $0x24] sm:$0xf]
        %v2371 = vld [vmem:[%s5 + $0x28] sm:$0xf]
        %v2372 = vld [vmem:[%s5 + $0x2c] sm:$0xf]
        %v2373 = vld [vmem:[%s5 + $0x30] sm:$0xf]
        %v2374 = vld [vmem:[%s5 + $0x34] sm:$0xf]
        %v2375 = vld [vmem:[%s5 + $0x38] sm:$0xf]
        %v2376 = vld [vmem:[%s5 + $0x3c] sm:$0xf]
        %v2393 = vunpack.c.l.b16 %v2361
        %v2394 = vunpack.c.l.b16 %v2362
        %v2395 = vunpack.c.l.b16 %v2363
        %v2396 = vunpack.c.l.b16 %v2364
        %v2397 = vunpack.c.l.b16 %v2365
        %v2398 = vunpack.c.l.b16 %v2366
        %v2399 = vunpack.c.l.b16 %v2367
        %v2400 = vunpack.c.l.b16 %v2368
        %v2401 = vunpack.c.l.b16 %v2369
        %v2402 = vunpack.c.l.b16 %v2370
        %v2403 = vunpack.c.l.b16 %v2371
        %v2404 = vunpack.c.l.b16 %v2372
        %v2405 = vunpack.c.l.b16 %v2373
        %v2406 = vunpack.c.l.b16 %v2374
        %v2407 = vunpack.c.l.b16 %v2375
        %v2408 = vunpack.c.l.b16 %v2376
        %v2409 = vpack.c.b16 %v2394, %v2393
        %v2410 = vpack.c.b16 %v2396, %v2395
        %v2411 = vpack.c.b16 %v2398, %v2397
        %v2412 = vpack.c.b16 %v2400, %v2399
        %v2413 = vpack.c.b16 %v2402, %v2401
        %v2414 = vpack.c.b16 %v2404, %v2403
        %v2415 = vpack.c.b16 %v2406, %v2405
        %v2416 = vpack.c.b16 %v2408, %v2407
        %2425 = vmatpush.bf16.msra.mxu0 %v2416
        %2426 = vmatpush.bf16.msra.mxu0 %v2415
        %2427 = vmatpush.bf16.msra.mxu0 %v2414
        %2428 = vmatpush.bf16.msra.mxu0 %v2413
        %2429 = vmatpush.bf16.msra.mxu0 %v2412
        %2430 = vmatpush.bf16.msra.mxu0 %v2411
        %2431 = vmatpush.bf16.msra.mxu0 %v2410
        %2432 = vmatpush.bf16.msra.mxu0 %v2409
        %2433 = vmatmul.bf16.gmra.mxu0 %v820
        %v2434 = vpop.f32.mrf.mxu0
        %v2435 = vadd.f32 0.0, %v2434
        %v2436 = vpop.f32.mrf.mxu0
        %v2437 = vadd.f32 0.0, %v2436
        %2438 = vmatmul.bf16.gmra.mxu0 %v821
        %v2439 = vpop.f32.mrf.mxu0
        %v2440 = vadd.f32 0.0, %v2439
        %v2441 = vpop.f32.mrf.mxu0
        %v2442 = vadd.f32 0.0, %v2441
        %2443 = vdwg.mxu0
        %2444 = vmatpush.bf16.msra.mxu0 %v2360
        %2445 = vmatpush.bf16.msra.mxu0 %v2359
        %2446 = vmatpush.bf16.msra.mxu0 %v2358
        %2447 = vmatpush.bf16.msra.mxu0 %v2357
        %2448 = vmatpush.bf16.msra.mxu0 %v2356
        %2449 = vmatpush.bf16.msra.mxu0 %v2355
        %2450 = vmatpush.bf16.msra.mxu0 %v2354
        %2451 = vmatpush.bf16.msra.mxu0 %v2353
        %2452 = vmatmul.bf16.gmra.mxu0 %v734
        %v2453 = vpop.f32.mrf.mxu0
        %v2454 = vadd.f32 %v2435, %v2453
        %v2455 = vpop.f32.mrf.mxu0
        %v2456 = vadd.f32 %v2437, %v2455
        %2457 = vmatmul.bf16.gmra.mxu0 %v735
        %v2458 = vpop.f32.mrf.mxu0
        %v2459 = vadd.f32 %v2440, %v2458
        %v2460 = vpop.f32.mrf.mxu0
        %v2461 = vadd.f32 %v2442, %v2460
        %2462 = vdwg.mxu0
        %v2463 = vld [vmem:[%s6] sm:$0x1]
        %v2465 = vperm.slane %v2463, 0
        %v2467 = vadd.f32 %v2454, %v2465
        %v2468 = vadd.f32 %v2456, %v2465
        %v2469 = vadd.f32 %v2459, %v2465
        %v2470 = vadd.f32 %v2461, %v2465
        %v2471 = vmax.f32 %v2467, 0.0
        %v2472 = vmax.f32 %v2468, 0.0
        %v2473 = vmax.f32 %v2469, 0.0
        %v2474 = vmax.f32 %v2470, 0.0
        %v2475 = vpack.c.bf16 %v2472, %v2471
        %v2476 = vpack.c.bf16 %v2474, %v2473
        %2477 = vmatpush.bf16.msra.mxu0 0
        %2478 = vmatpush.bf16.msra.mxu0 0
        %2479 = vmatpush.bf16.msra.mxu0 0
        %2480 = vmatpush.bf16.msra.mxu0 0
        %2481 = vmatpush.bf16.msra.mxu0 0
        %2482 = vmatpush.bf16.msra.mxu0 0
        %2483 = vmatpush.bf16.msra.mxu0 %v2476
        %2484 = vmatpush.bf16.msra.mxu0 %v2475
        %2485 = vmatmul.bf16.gmra.mxu0 %v824
        %v2486 = vpop.f32.mrf.mxu0
        %v2487 = vadd.f32 0.0, %v2486
        %v2488 = vpop.f32.mrf.mxu0
        %v2489 = vadd.f32 0.0, %v2488
        %2490 = vmatmul.bf16.gmra.mxu0 %v827
        %v2491 = vpop.f32.mrf.mxu0
        %v2492 = vadd.f32 0.0, %v2491
        %v2493 = vpop.f32.mrf.mxu0
        %v2494 = vadd.f32 0.0, %v2493
        %2495 = vmatmul.bf16.gmra.mxu0 %v830
        %v2496 = vpop.f32.mrf.mxu0
        %v2497 = vadd.f32 0.0, %v2496
        %v2498 = vpop.f32.mrf.mxu0
        %v2499 = vadd.f32 0.0, %v2498
        %2500 = vmatmul.bf16.gmra.mxu0 %v833
        %v2501 = vpop.f32.mrf.mxu0
        %v2502 = vadd.f32 0.0, %v2501
        %v2503 = vpop.f32.mrf.mxu0
        %v2504 = vadd.f32 0.0, %v2503
        %2505 = vmatmul.bf16.gmra.mxu0 %v836
        %v2506 = vpop.f32.mrf.mxu0
        %v2507 = vadd.f32 0.0, %v2506
        %v2508 = vpop.f32.mrf.mxu0
        %v2509 = vadd.f32 0.0, %v2508
        %2510 = vmatmul.bf16.gmra.mxu0 %v839
        %v2511 = vpop.f32.mrf.mxu0
        %v2512 = vadd.f32 0.0, %v2511
        %v2513 = vpop.f32.mrf.mxu0
        %v2514 = vadd.f32 0.0, %v2513
        %2515 = vmatmul.bf16.gmra.mxu0 %v842
        %v2516 = vpop.f32.mrf.mxu0
        %v2517 = vadd.f32 0.0, %v2516
        %v2518 = vpop.f32.mrf.mxu0
        %v2519 = vadd.f32 0.0, %v2518
        %2520 = vmatmul.bf16.gmra.mxu0 %v845
        %v2521 = vpop.f32.mrf.mxu0
        %v2522 = vadd.f32 0.0, %v2521
        %v2523 = vpop.f32.mrf.mxu0
        %v2524 = vadd.f32 0.0, %v2523
        %2525 = vdwg.mxu0
        %v2526 = vpack.c.bf16 %v2487, %v2487
        %v2527 = vpack.c.bf16 %v2489, %v2489
        %v2528 = vpack.c.bf16 %v2492, %v2492
        %v2529 = vpack.c.bf16 %v2494, %v2494
        %v2530 = vpack.c.bf16 %v2497, %v2497
        %v2531 = vpack.c.bf16 %v2499, %v2499
        %v2532 = vpack.c.bf16 %v2502, %v2502
        %v2533 = vpack.c.bf16 %v2504, %v2504
        %v2534 = vpack.c.bf16 %v2507, %v2507
        %v2535 = vpack.c.bf16 %v2509, %v2509
        %v2536 = vpack.c.bf16 %v2512, %v2512
        %v2537 = vpack.c.bf16 %v2514, %v2514
        %v2538 = vpack.c.bf16 %v2517, %v2517
        %v2539 = vpack.c.bf16 %v2519, %v2519
        %v2540 = vpack.c.bf16 %v2522, %v2522
        %v2541 = vpack.c.bf16 %v2524, %v2524
        %v2558 = vunpack.c.l.b16 %v2526
        %v2559 = vunpack.c.l.b16 %v2527
        %v2560 = vunpack.c.l.b16 %v2528
        %v2561 = vunpack.c.l.b16 %v2529
        %v2562 = vunpack.c.l.b16 %v2530
        %v2563 = vunpack.c.l.b16 %v2531
        %v2564 = vunpack.c.l.b16 %v2532
        %v2565 = vunpack.c.l.b16 %v2533
        %v2566 = vunpack.c.l.b16 %v2534
        %v2567 = vunpack.c.l.b16 %v2535
        %v2568 = vunpack.c.l.b16 %v2536
        %v2569 = vunpack.c.l.b16 %v2537
        %v2570 = vunpack.c.l.b16 %v2538
        %v2571 = vunpack.c.l.b16 %v2539
        %v2572 = vunpack.c.l.b16 %v2540
        %v2573 = vunpack.c.l.b16 %v2541
        %v2574 = vpack.c.b16 %v2559, %v2558
        %v2575 = vpack.c.b16 %v2561, %v2560
        %v2576 = vpack.c.b16 %v2563, %v2562
        %v2577 = vpack.c.b16 %v2565, %v2564
        %v2578 = vpack.c.b16 %v2567, %v2566
        %v2579 = vpack.c.b16 %v2569, %v2568
        %v2580 = vpack.c.b16 %v2571, %v2570
        %v2581 = vpack.c.b16 %v2573, %v2572
        %v2590 = vunpack.c.l.bf16 %v2574
        %v2591 = vunpack.c.h.bf16 %v2574
        %v2592 = vunpack.c.l.bf16 %v2575
        %v2593 = vunpack.c.h.bf16 %v2575
        %v2594 = vunpack.c.l.bf16 %v2576
        %v2595 = vunpack.c.h.bf16 %v2576
        %v2596 = vunpack.c.l.bf16 %v2577
        %v2597 = vunpack.c.h.bf16 %v2577
        %v2598 = vunpack.c.l.bf16 %v2578
        %v2599 = vunpack.c.h.bf16 %v2578
        %v2600 = vunpack.c.l.bf16 %v2579
        %v2601 = vunpack.c.h.bf16 %v2579
        %v2602 = vunpack.c.l.bf16 %v2580
        %v2603 = vunpack.c.h.bf16 %v2580
        %v2604 = vunpack.c.l.bf16 %v2581
        %v2605 = vunpack.c.h.bf16 %v2581
        %v2606 = vmul.f32 %v2590, %v976
        %v2607 = vmul.f32 %v2590, %v977
        %v2608 = vmul.f32 %v2590, %v978
        %v2609 = vmul.f32 %v2590, %v979
        %v2610 = vmul.f32 %v2590, %v980
        %v2611 = vmul.f32 %v2590, %v981
        %v2612 = vmul.f32 %v2590, %v982
        %v2613 = vmul.f32 %v2590, %v983
        %v2614 = vmul.f32 %v2590, %v984
        %v2615 = vmul.f32 %v2591, %v985
        %v2616 = vmul.f32 %v2591, %v986
        %v2617 = vmul.f32 %v2591, %v987
        %v2618 = vmul.f32 %v2591, %v988
        %v2619 = vmul.f32 %v2591, %v989
        %v2620 = vmul.f32 %v2591, %v990
        %v2621 = vmul.f32 %v2591, %v991
        %v2622 = vmul.f32 %v2591, %v992
        %v2623 = vmul.f32 %v2591, %v993
        %v2624 = vmul.f32 %v2592, %v994
        %v2625 = vmul.f32 %v2592, %v995
        %v2626 = vmul.f32 %v2592, %v996
        %v2627 = vmul.f32 %v2592, %v997
        %v2628 = vmul.f32 %v2592, %v998
        %v2629 = vmul.f32 %v2592, %v999
        %v2630 = vmul.f32 %v2592, %v1000
        %v2631 = vmul.f32 %v2592, %v1001
        %v2632 = vmul.f32 %v2592, %v1002
        %v2633 = vmul.f32 %v2593, %v1003
        %v2634 = vmul.f32 %v2593, %v1004
        %v2635 = vmul.f32 %v2593, %v1005
        %v2636 = vmul.f32 %v2593, %v1006
        %v2637 = vmul.f32 %v2593, %v1007
        %v2638 = vmul.f32 %v2593, %v1008
        %v2639 = vmul.f32 %v2593, %v1009
        %v2640 = vmul.f32 %v2593, %v1010
        %v2641 = vmul.f32 %v2593, %v1011
        %v2642 = vmul.f32 %v2594, %v1012
        %v2643 = vmul.f32 %v2594, %v1013
        %v2644 = vmul.f32 %v2594, %v1014
        %v2645 = vmul.f32 %v2594, %v1015
        %v2646 = vmul.f32 %v2594, %v1016
        %v2647 = vmul.f32 %v2594, %v1017
        %v2648 = vmul.f32 %v2594, %v1018
        %v2649 = vmul.f32 %v2594, %v1019
        %v2650 = vmul.f32 %v2594, %v1020
        %v2651 = vmul.f32 %v2595, %v1021
        %v2652 = vmul.f32 %v2595, %v1022
        %v2653 = vmul.f32 %v2595, %v1023
        %v2654 = vmul.f32 %v2595, %v1024
        %v2655 = vmul.f32 %v2595, %v1025
        %v2656 = vmul.f32 %v2595, %v1026
        %v2657 = vmul.f32 %v2595, %v1027
        %v2658 = vmul.f32 %v2595, %v1028
        %v2659 = vmul.f32 %v2595, %v1029
        %v2660 = vmul.f32 %v2596, %v1030
        %v2661 = vmul.f32 %v2596, %v1031
        %v2662 = vmul.f32 %v2596, %v1032
        %v2663 = vmul.f32 %v2596, %v1033
        %v2664 = vmul.f32 %v2596, %v1034
        %v2665 = vmul.f32 %v2596, %v1035
        %v2666 = vmul.f32 %v2596, %v1036
        %v2667 = vmul.f32 %v2596, %v1037
        %v2668 = vmul.f32 %v2596, %v1038
        %v2669 = vmul.f32 %v2597, %v1039
        %v2670 = vmul.f32 %v2597, %v1040
        %v2671 = vmul.f32 %v2597, %v1041
        %v2672 = vmul.f32 %v2597, %v1042
        %v2673 = vmul.f32 %v2597, %v1043
        %v2674 = vmul.f32 %v2597, %v1044
        %v2675 = vmul.f32 %v2597, %v1045
        %v2676 = vmul.f32 %v2597, %v1046
        %v2677 = vmul.f32 %v2597, %v1047
        %v2678 = vmul.f32 %v2598, %v1048
        %v2679 = vmul.f32 %v2598, %v1049
        %v2680 = vmul.f32 %v2598, %v1050
        %v2681 = vmul.f32 %v2598, %v1051
        %v2682 = vmul.f32 %v2598, %v1052
        %v2683 = vmul.f32 %v2598, %v1053
        %v2684 = vmul.f32 %v2598, %v1054
        %v2685 = vmul.f32 %v2598, %v1055
        %v2686 = vmul.f32 %v2598, %v1056
        %v2687 = vmul.f32 %v2599, %v1057
        %v2688 = vmul.f32 %v2599, %v1058
        %v2689 = vmul.f32 %v2599, %v1059
        %v2690 = vmul.f32 %v2599, %v1060
        %v2691 = vmul.f32 %v2599, %v1061
        %v2692 = vmul.f32 %v2599, %v1062
        %v2693 = vmul.f32 %v2599, %v1063
        %v2694 = vmul.f32 %v2599, %v1064
        %v2695 = vmul.f32 %v2599, %v1065
        %v2696 = vmul.f32 %v2600, %v1066
        %v2697 = vmul.f32 %v2600, %v1067
        %v2698 = vmul.f32 %v2600, %v1068
        %v2699 = vmul.f32 %v2600, %v1069
        %v2700 = vmul.f32 %v2600, %v1070
        %v2701 = vmul.f32 %v2600, %v1071
        %v2702 = vmul.f32 %v2600, %v1072
        %v2703 = vmul.f32 %v2600, %v1073
        %v2704 = vmul.f32 %v2600, %v1074
        %v2705 = vmul.f32 %v2601, %v1075
        %v2706 = vmul.f32 %v2601, %v1076
        %v2707 = vmul.f32 %v2601, %v1077
        %v2708 = vmul.f32 %v2601, %v1078
        %v2709 = vmul.f32 %v2601, %v1079
        %v2710 = vmul.f32 %v2601, %v1080
        %v2711 = vmul.f32 %v2601, %v1081
        %v2712 = vmul.f32 %v2601, %v1082
        %v2713 = vmul.f32 %v2601, %v1083
        %v2714 = vmul.f32 %v2602, %v1084
        %v2715 = vmul.f32 %v2602, %v1085
        %v2716 = vmul.f32 %v2602, %v1086
        %v2717 = vmul.f32 %v2602, %v1087
        %v2718 = vmul.f32 %v2602, %v1088
        %v2719 = vmul.f32 %v2602, %v1089
        %v2720 = vmul.f32 %v2602, %v1090
        %v2721 = vmul.f32 %v2602, %v1091
        %v2722 = vmul.f32 %v2602, %v1092
        %v2723 = vmul.f32 %v2603, %v1093
        %v2724 = vmul.f32 %v2603, %v1094
        %v2725 = vmul.f32 %v2603, %v1095
        %v2726 = vmul.f32 %v2603, %v1096
        %v2727 = vmul.f32 %v2603, %v1097
        %v2728 = vmul.f32 %v2603, %v1098
        %v2729 = vmul.f32 %v2603, %v1099
        %v2730 = vmul.f32 %v2603, %v1100
        %v2731 = vmul.f32 %v2603, %v1101
        %v2732 = vmul.f32 %v2604, %v1102
        %v2733 = vmul.f32 %v2604, %v1103
        %v2734 = vmul.f32 %v2604, %v1104
        %v2735 = vmul.f32 %v2604, %v1105
        %v2736 = vmul.f32 %v2604, %v1106
        %v2737 = vmul.f32 %v2604, %v1107
        %v2738 = vmul.f32 %v2604, %v1108
        %v2739 = vmul.f32 %v2604, %v1109
        %v2740 = vmul.f32 %v2604, %v1110
        %v2741 = vmul.f32 %v2605, %v1111
        %v2742 = vmul.f32 %v2605, %v1112
        %v2743 = vmul.f32 %v2605, %v1113
        %v2744 = vmul.f32 %v2605, %v1114
        %v2745 = vmul.f32 %v2605, %v1115
        %v2746 = vmul.f32 %v2605, %v1116
        %v2747 = vmul.f32 %v2605, %v1117
        %v2748 = vmul.f32 %v2605, %v1118
        %v2749 = vmul.f32 %v2605, %v1119
        %v2750 = vpack.c.bf16 %v2615, %v2606
        %v2751 = vpack.c.bf16 %v2616, %v2607
        %v2752 = vpack.c.bf16 %v2617, %v2608
        %v2753 = vpack.c.bf16 %v2618, %v2609
        %v2754 = vpack.c.bf16 %v2619, %v2610
        %v2755 = vpack.c.bf16 %v2620, %v2611
        %v2756 = vpack.c.bf16 %v2621, %v2612
        %v2757 = vpack.c.bf16 %v2622, %v2613
        %v2758 = vpack.c.bf16 %v2623, %v2614
        %v2759 = vpack.c.bf16 %v2633, %v2624
        %v2760 = vpack.c.bf16 %v2634, %v2625
        %v2761 = vpack.c.bf16 %v2635, %v2626
        %v2762 = vpack.c.bf16 %v2636, %v2627
        %v2763 = vpack.c.bf16 %v2637, %v2628
        %v2764 = vpack.c.bf16 %v2638, %v2629
        %v2765 = vpack.c.bf16 %v2639, %v2630
        %v2766 = vpack.c.bf16 %v2640, %v2631
        %v2767 = vpack.c.bf16 %v2641, %v2632
        %v2768 = vpack.c.bf16 %v2651, %v2642
        %v2769 = vpack.c.bf16 %v2652, %v2643
        %v2770 = vpack.c.bf16 %v2653, %v2644
        %v2771 = vpack.c.bf16 %v2654, %v2645
        %v2772 = vpack.c.bf16 %v2655, %v2646
        %v2773 = vpack.c.bf16 %v2656, %v2647
        %v2774 = vpack.c.bf16 %v2657, %v2648
        %v2775 = vpack.c.bf16 %v2658, %v2649
        %v2776 = vpack.c.bf16 %v2659, %v2650
        %v2777 = vpack.c.bf16 %v2669, %v2660
        %v2778 = vpack.c.bf16 %v2670, %v2661
        %v2779 = vpack.c.bf16 %v2671, %v2662
        %v2780 = vpack.c.bf16 %v2672, %v2663
        %v2781 = vpack.c.bf16 %v2673, %v2664
        %v2782 = vpack.c.bf16 %v2674, %v2665
        %v2783 = vpack.c.bf16 %v2675, %v2666
        %v2784 = vpack.c.bf16 %v2676, %v2667
        %v2785 = vpack.c.bf16 %v2677, %v2668
        %v2786 = vpack.c.bf16 %v2687, %v2678
        %v2787 = vpack.c.bf16 %v2688, %v2679
        %v2788 = vpack.c.bf16 %v2689, %v2680
        %v2789 = vpack.c.bf16 %v2690, %v2681
        %v2790 = vpack.c.bf16 %v2691, %v2682
        %v2791 = vpack.c.bf16 %v2692, %v2683
        %v2792 = vpack.c.bf16 %v2693, %v2684
        %v2793 = vpack.c.bf16 %v2694, %v2685
        %v2794 = vpack.c.bf16 %v2695, %v2686
        %v2795 = vpack.c.bf16 %v2705, %v2696
        %v2796 = vpack.c.bf16 %v2706, %v2697
        %v2797 = vpack.c.bf16 %v2707, %v2698
        %v2798 = vpack.c.bf16 %v2708, %v2699
        %v2799 = vpack.c.bf16 %v2709, %v2700
        %v2800 = vpack.c.bf16 %v2710, %v2701
        %v2801 = vpack.c.bf16 %v2711, %v2702
        %v2802 = vpack.c.bf16 %v2712, %v2703
        %v2803 = vpack.c.bf16 %v2713, %v2704
        %v2804 = vpack.c.bf16 %v2723, %v2714
        %v2805 = vpack.c.bf16 %v2724, %v2715
        %v2806 = vpack.c.bf16 %v2725, %v2716
        %v2807 = vpack.c.bf16 %v2726, %v2717
        %v2808 = vpack.c.bf16 %v2727, %v2718
        %v2809 = vpack.c.bf16 %v2728, %v2719
        %v2810 = vpack.c.bf16 %v2729, %v2720
        %v2811 = vpack.c.bf16 %v2730, %v2721
        %v2812 = vpack.c.bf16 %v2731, %v2722
        %v2813 = vpack.c.bf16 %v2741, %v2732
        %v2814 = vpack.c.bf16 %v2742, %v2733
        %v2815 = vpack.c.bf16 %v2743, %v2734
        %v2816 = vpack.c.bf16 %v2744, %v2735
        %v2817 = vpack.c.bf16 %v2745, %v2736
        %v2818 = vpack.c.bf16 %v2746, %v2737
        %v2819 = vpack.c.bf16 %v2747, %v2738
        %v2820 = vpack.c.bf16 %v2748, %v2739
        %v2821 = vpack.c.bf16 %v2749, %v2740
        %v2822 = vld [vmem:[#allocation7] sm:$0xf]
        %v2823 = vld [vmem:[#allocation7 + $0x4] sm:$0xf]
        %v2824 = vld [vmem:[#allocation7 + $0x8] sm:$0xf]
        %v2825 = vld [vmem:[#allocation7 + $0xc] sm:$0xf]
        %v2826 = vld [vmem:[#allocation7 + $0x10] sm:$0xf]
        %v2827 = vld [vmem:[#allocation7 + $0x14] sm:$0xf]
        %v2828 = vld [vmem:[#allocation7 + $0x18] sm:$0xf]
        %v2829 = vld [vmem:[#allocation7 + $0x1c] sm:$0xf]
        %v2830 = vld [vmem:[#allocation7 + $0x20] sm:$0xf]
        %v2831 = vld [vmem:[#allocation7 + $0x24] sm:$0xf]
        %v2832 = vld [vmem:[#allocation7 + $0x28] sm:$0xf]
        %v2833 = vld [vmem:[#allocation7 + $0x2c] sm:$0xf]
        %v2834 = vld [vmem:[#allocation7 + $0x30] sm:$0xf]
        %v2835 = vld [vmem:[#allocation7 + $0x34] sm:$0xf]
        %v2836 = vld [vmem:[#allocation7 + $0x38] sm:$0xf]
        %v2837 = vld [vmem:[#allocation7 + $0x3c] sm:$0xf]
        %v2838 = vld [vmem:[#allocation7 + $0x40] sm:$0xf]
        %v2839 = vld [vmem:[#allocation7 + $0x44] sm:$0xf]
        %v2840 = vld [vmem:[#allocation7 + $0x48] sm:$0xf]
        %v2841 = vld [vmem:[#allocation7 + $0x4c] sm:$0xf]
        %v2842 = vld [vmem:[#allocation7 + $0x50] sm:$0xf]
        %v2843 = vld [vmem:[#allocation7 + $0x54] sm:$0xf]
        %v2844 = vld [vmem:[#allocation7 + $0x58] sm:$0xf]
        %v2845 = vld [vmem:[#allocation7 + $0x5c] sm:$0xf]
        %v2846 = vld [vmem:[#allocation7 + $0x60] sm:$0xf]
        %v2847 = vld [vmem:[#allocation7 + $0x64] sm:$0xf]
        %v2848 = vld [vmem:[#allocation7 + $0x68] sm:$0xf]
        %v2849 = vld [vmem:[#allocation7 + $0x6c] sm:$0xf]
        %v2850 = vld [vmem:[#allocation7 + $0x70] sm:$0xf]
        %v2851 = vld [vmem:[#allocation7 + $0x74] sm:$0xf]
        %v2852 = vld [vmem:[#allocation7 + $0x78] sm:$0xf]
        %v2853 = vld [vmem:[#allocation7 + $0x7c] sm:$0xf]
        %v2854 = vld [vmem:[#allocation7 + $0x80] sm:$0xf]
        %v2855 = vld [vmem:[#allocation7 + $0x84] sm:$0xf]
        %v2856 = vld [vmem:[#allocation7 + $0x88] sm:$0xf]
        %v2857 = vld [vmem:[#allocation7 + $0x8c] sm:$0xf]
        %v2858 = vld [vmem:[#allocation7 + $0x90] sm:$0xf]
        %v2859 = vld [vmem:[#allocation7 + $0x94] sm:$0xf]
        %v2860 = vld [vmem:[#allocation7 + $0x98] sm:$0xf]
        %v2861 = vld [vmem:[#allocation7 + $0x9c] sm:$0xf]
        %v2862 = vld [vmem:[#allocation7 + $0xa0] sm:$0xf]
        %v2863 = vld [vmem:[#allocation7 + $0xa4] sm:$0xf]
        %v2864 = vld [vmem:[#allocation7 + $0xa8] sm:$0xf]
        %v2865 = vld [vmem:[#allocation7 + $0xac] sm:$0xf]
        %v2866 = vld [vmem:[#allocation7 + $0xb0] sm:$0xf]
        %v2867 = vld [vmem:[#allocation7 + $0xb4] sm:$0xf]
        %v2868 = vld [vmem:[#allocation7 + $0xb8] sm:$0xf]
        %v2869 = vld [vmem:[#allocation7 + $0xbc] sm:$0xf]
        %v2870 = vld [vmem:[#allocation7 + $0xc0] sm:$0xf]
        %v2871 = vld [vmem:[#allocation7 + $0xc4] sm:$0xf]
        %v2872 = vld [vmem:[#allocation7 + $0xc8] sm:$0xf]
        %v2873 = vld [vmem:[#allocation7 + $0xcc] sm:$0xf]
        %v2874 = vld [vmem:[#allocation7 + $0xd0] sm:$0xf]
        %v2875 = vld [vmem:[#allocation7 + $0xd4] sm:$0xf]
        %v2876 = vld [vmem:[#allocation7 + $0xd8] sm:$0xf]
        %v2877 = vld [vmem:[#allocation7 + $0xdc] sm:$0xf]
        %v2878 = vld [vmem:[#allocation7 + $0xe0] sm:$0xf]
        %v2879 = vld [vmem:[#allocation7 + $0xe4] sm:$0xf]
        %v2880 = vld [vmem:[#allocation7 + $0xe8] sm:$0xf]
        %v2881 = vld [vmem:[#allocation7 + $0xec] sm:$0xf]
        %v2882 = vld [vmem:[#allocation7 + $0xf0] sm:$0xf]
        %v2883 = vld [vmem:[#allocation7 + $0xf4] sm:$0xf]
        %v2884 = vld [vmem:[#allocation7 + $0xf8] sm:$0xf]
        %v2885 = vld [vmem:[#allocation7 + $0xfc] sm:$0xf]
        %v2886 = vld [vmem:[#allocation7 + $0x100] sm:$0xf]
        %v2887 = vld [vmem:[#allocation7 + $0x104] sm:$0xf]
        %v2888 = vld [vmem:[#allocation7 + $0x108] sm:$0xf]
        %v2889 = vld [vmem:[#allocation7 + $0x10c] sm:$0xf]
        %v2890 = vld [vmem:[#allocation7 + $0x110] sm:$0xf]
        %v2891 = vld [vmem:[#allocation7 + $0x114] sm:$0xf]
        %v2892 = vld [vmem:[#allocation7 + $0x118] sm:$0xf]
        %v2893 = vld [vmem:[#allocation7 + $0x11c] sm:$0xf]
        %v2894 = vld [vmem:[#allocation7 + $0x120] sm:$0xf]
        %v2895 = vld [vmem:[#allocation7 + $0x124] sm:$0xf]
        %v2896 = vld [vmem:[#allocation7 + $0x128] sm:$0xf]
        %v2897 = vld [vmem:[#allocation7 + $0x12c] sm:$0xf]
        %v2898 = vld [vmem:[#allocation7 + $0x130] sm:$0xf]
        %v2899 = vld [vmem:[#allocation7 + $0x134] sm:$0xf]
        %v2900 = vld [vmem:[#allocation7 + $0x138] sm:$0xf]
        %v2901 = vld [vmem:[#allocation7 + $0x13c] sm:$0xf]
        %v2902 = vld [vmem:[#allocation7 + $0x140] sm:$0xf]
        %v2903 = vld [vmem:[#allocation7 + $0x144] sm:$0xf]
        %v2904 = vld [vmem:[#allocation7 + $0x148] sm:$0xf]
        %v2905 = vld [vmem:[#allocation7 + $0x14c] sm:$0xf]
        %v2906 = vld [vmem:[#allocation7 + $0x150] sm:$0xf]
        %v2907 = vld [vmem:[#allocation7 + $0x154] sm:$0xf]
        %v2908 = vld [vmem:[#allocation7 + $0x158] sm:$0xf]
        %v2909 = vld [vmem:[#allocation7 + $0x15c] sm:$0xf]
        %v2910 = vld [vmem:[#allocation7 + $0x160] sm:$0xf]
        %v2911 = vld [vmem:[#allocation7 + $0x164] sm:$0xf]
        %v2912 = vld [vmem:[#allocation7 + $0x168] sm:$0xf]
        %v2913 = vld [vmem:[#allocation7 + $0x16c] sm:$0xf]
        %v2914 = vld [vmem:[#allocation7 + $0x170] sm:$0xf]
        %v2915 = vld [vmem:[#allocation7 + $0x174] sm:$0xf]
        %v2916 = vld [vmem:[#allocation7 + $0x178] sm:$0xf]
        %v2917 = vld [vmem:[#allocation7 + $0x17c] sm:$0xf]
        %v2918 = vld [vmem:[#allocation7 + $0x180] sm:$0xf]
        %v2919 = vld [vmem:[#allocation7 + $0x184] sm:$0xf]
        %v2920 = vld [vmem:[#allocation7 + $0x188] sm:$0xf]
        %v2921 = vld [vmem:[#allocation7 + $0x18c] sm:$0xf]
        %v2922 = vld [vmem:[#allocation7 + $0x190] sm:$0xf]
        %v2923 = vld [vmem:[#allocation7 + $0x194] sm:$0xf]
        %v2924 = vld [vmem:[#allocation7 + $0x198] sm:$0xf]
        %v2925 = vld [vmem:[#allocation7 + $0x19c] sm:$0xf]
        %v2926 = vld [vmem:[#allocation7 + $0x1a0] sm:$0xf]
        %v2927 = vld [vmem:[#allocation7 + $0x1a4] sm:$0xf]
        %v2928 = vld [vmem:[#allocation7 + $0x1a8] sm:$0xf]
        %v2929 = vld [vmem:[#allocation7 + $0x1ac] sm:$0xf]
        %v2930 = vld [vmem:[#allocation7 + $0x1b0] sm:$0xf]
        %v2931 = vld [vmem:[#allocation7 + $0x1b4] sm:$0xf]
        %v2932 = vld [vmem:[#allocation7 + $0x1b8] sm:$0xf]
        %v2933 = vld [vmem:[#allocation7 + $0x1bc] sm:$0xf]
        %v2934 = vld [vmem:[#allocation7 + $0x1c0] sm:$0xf]
        %v2935 = vld [vmem:[#allocation7 + $0x1c4] sm:$0xf]
        %v2936 = vld [vmem:[#allocation7 + $0x1c8] sm:$0xf]
        %v2937 = vld [vmem:[#allocation7 + $0x1cc] sm:$0xf]
        %v2938 = vld [vmem:[#allocation7 + $0x1d0] sm:$0xf]
        %v2939 = vld [vmem:[#allocation7 + $0x1d4] sm:$0xf]
        %v2940 = vld [vmem:[#allocation7 + $0x1d8] sm:$0xf]
        %v2941 = vld [vmem:[#allocation7 + $0x1dc] sm:$0xf]
        %v2942 = vld [vmem:[#allocation7 + $0x1e0] sm:$0xf]
        %v2943 = vld [vmem:[#allocation7 + $0x1e4] sm:$0xf]
        %v2944 = vld [vmem:[#allocation7 + $0x1e8] sm:$0xf]
        %v2945 = vld [vmem:[#allocation7 + $0x1ec] sm:$0xf]
        %v2946 = vld [vmem:[#allocation7 + $0x1f0] sm:$0xf]
        %v2947 = vld [vmem:[#allocation7 + $0x1f4] sm:$0xf]
        %v2948 = vld [vmem:[#allocation7 + $0x1f8] sm:$0xf]
        %v2949 = vld [vmem:[#allocation7 + $0x1fc] sm:$0xf]
        %v2950 = vld [vmem:[#allocation7 + $0x200] sm:$0xf]
        %v2951 = vld [vmem:[#allocation7 + $0x204] sm:$0xf]
        %v2952 = vld [vmem:[#allocation7 + $0x208] sm:$0xf]
        %v2953 = vld [vmem:[#allocation7 + $0x20c] sm:$0xf]
        %v2954 = vld [vmem:[#allocation7 + $0x210] sm:$0xf]
        %v2955 = vld [vmem:[#allocation7 + $0x214] sm:$0xf]
        %v2956 = vld [vmem:[#allocation7 + $0x218] sm:$0xf]
        %v2957 = vld [vmem:[#allocation7 + $0x21c] sm:$0xf]
        %v2958 = vld [vmem:[#allocation7 + $0x220] sm:$0xf]
        %v2959 = vld [vmem:[#allocation7 + $0x224] sm:$0xf]
        %v2960 = vld [vmem:[#allocation7 + $0x228] sm:$0xf]
        %v2961 = vld [vmem:[#allocation7 + $0x22c] sm:$0xf]
        %v2962 = vld [vmem:[#allocation7 + $0x230] sm:$0xf]
        %v2963 = vld [vmem:[#allocation7 + $0x234] sm:$0xf]
        %v2964 = vld [vmem:[#allocation7 + $0x238] sm:$0xf]
        %v2965 = vld [vmem:[#allocation7 + $0x23c] sm:$0xf]
        %v3110 = vunpack.c.l.b16 %v2822
        %v3111 = vunpack.c.l.b16 %v2823
        %v3112 = vunpack.c.l.b16 %v2824
        %v3113 = vunpack.c.l.b16 %v2825
        %v3114 = vunpack.c.l.b16 %v2826
        %v3115 = vunpack.c.l.b16 %v2827
        %v3116 = vunpack.c.l.b16 %v2828
        %v3117 = vunpack.c.l.b16 %v2829
        %v3118 = vunpack.c.l.b16 %v2830
        %v3119 = vunpack.c.l.b16 %v2831
        %v3120 = vunpack.c.l.b16 %v2832
        %v3121 = vunpack.c.l.b16 %v2833
        %v3122 = vunpack.c.l.b16 %v2834
        %v3123 = vunpack.c.l.b16 %v2835
        %v3124 = vunpack.c.l.b16 %v2836
        %v3125 = vunpack.c.l.b16 %v2837
        %v3126 = vunpack.c.l.b16 %v2838
        %v3127 = vunpack.c.l.b16 %v2839
        %v3128 = vunpack.c.l.b16 %v2840
        %v3129 = vunpack.c.l.b16 %v2841
        %v3130 = vunpack.c.l.b16 %v2842
        %v3131 = vunpack.c.l.b16 %v2843
        %v3132 = vunpack.c.l.b16 %v2844
        %v3133 = vunpack.c.l.b16 %v2845
        %v3134 = vunpack.c.l.b16 %v2846
        %v3135 = vunpack.c.l.b16 %v2847
        %v3136 = vunpack.c.l.b16 %v2848
        %v3137 = vunpack.c.l.b16 %v2849
        %v3138 = vunpack.c.l.b16 %v2850
        %v3139 = vunpack.c.l.b16 %v2851
        %v3140 = vunpack.c.l.b16 %v2852
        %v3141 = vunpack.c.l.b16 %v2853
        %v3142 = vunpack.c.l.b16 %v2854
        %v3143 = vunpack.c.l.b16 %v2855
        %v3144 = vunpack.c.l.b16 %v2856
        %v3145 = vunpack.c.l.b16 %v2857
        %v3146 = vunpack.c.l.b16 %v2858
        %v3147 = vunpack.c.l.b16 %v2859
        %v3148 = vunpack.c.l.b16 %v2860
        %v3149 = vunpack.c.l.b16 %v2861
        %v3150 = vunpack.c.l.b16 %v2862
        %v3151 = vunpack.c.l.b16 %v2863
        %v3152 = vunpack.c.l.b16 %v2864
        %v3153 = vunpack.c.l.b16 %v2865
        %v3154 = vunpack.c.l.b16 %v2866
        %v3155 = vunpack.c.l.b16 %v2867
        %v3156 = vunpack.c.l.b16 %v2868
        %v3157 = vunpack.c.l.b16 %v2869
        %v3158 = vunpack.c.l.b16 %v2870
        %v3159 = vunpack.c.l.b16 %v2871
        %v3160 = vunpack.c.l.b16 %v2872
        %v3161 = vunpack.c.l.b16 %v2873
        %v3162 = vunpack.c.l.b16 %v2874
        %v3163 = vunpack.c.l.b16 %v2875
        %v3164 = vunpack.c.l.b16 %v2876
        %v3165 = vunpack.c.l.b16 %v2877
        %v3166 = vunpack.c.l.b16 %v2878
        %v3167 = vunpack.c.l.b16 %v2879
        %v3168 = vunpack.c.l.b16 %v2880
        %v3169 = vunpack.c.l.b16 %v2881
        %v3170 = vunpack.c.l.b16 %v2882
        %v3171 = vunpack.c.l.b16 %v2883
        %v3172 = vunpack.c.l.b16 %v2884
        %v3173 = vunpack.c.l.b16 %v2885
        %v3174 = vunpack.c.l.b16 %v2886
        %v3175 = vunpack.c.l.b16 %v2887
        %v3176 = vunpack.c.l.b16 %v2888
        %v3177 = vunpack.c.l.b16 %v2889
        %v3178 = vunpack.c.l.b16 %v2890
        %v3179 = vunpack.c.l.b16 %v2891
        %v3180 = vunpack.c.l.b16 %v2892
        %v3181 = vunpack.c.l.b16 %v2893
        %v3182 = vunpack.c.l.b16 %v2894
        %v3183 = vunpack.c.l.b16 %v2895
        %v3184 = vunpack.c.l.b16 %v2896
        %v3185 = vunpack.c.l.b16 %v2897
        %v3186 = vunpack.c.l.b16 %v2898
        %v3187 = vunpack.c.l.b16 %v2899
        %v3188 = vunpack.c.l.b16 %v2900
        %v3189 = vunpack.c.l.b16 %v2901
        %v3190 = vunpack.c.l.b16 %v2902
        %v3191 = vunpack.c.l.b16 %v2903
        %v3192 = vunpack.c.l.b16 %v2904
        %v3193 = vunpack.c.l.b16 %v2905
        %v3194 = vunpack.c.l.b16 %v2906
        %v3195 = vunpack.c.l.b16 %v2907
        %v3196 = vunpack.c.l.b16 %v2908
        %v3197 = vunpack.c.l.b16 %v2909
        %v3198 = vunpack.c.l.b16 %v2910
        %v3199 = vunpack.c.l.b16 %v2911
        %v3200 = vunpack.c.l.b16 %v2912
        %v3201 = vunpack.c.l.b16 %v2913
        %v3202 = vunpack.c.l.b16 %v2914
        %v3203 = vunpack.c.l.b16 %v2915
        %v3204 = vunpack.c.l.b16 %v2916
        %v3205 = vunpack.c.l.b16 %v2917
        %v3206 = vunpack.c.l.b16 %v2918
        %v3207 = vunpack.c.l.b16 %v2919
        %v3208 = vunpack.c.l.b16 %v2920
        %v3209 = vunpack.c.l.b16 %v2921
        %v3210 = vunpack.c.l.b16 %v2922
        %v3211 = vunpack.c.l.b16 %v2923
        %v3212 = vunpack.c.l.b16 %v2924
        %v3213 = vunpack.c.l.b16 %v2925
        %v3214 = vunpack.c.l.b16 %v2926
        %v3215 = vunpack.c.l.b16 %v2927
        %v3216 = vunpack.c.l.b16 %v2928
        %v3217 = vunpack.c.l.b16 %v2929
        %v3218 = vunpack.c.l.b16 %v2930
        %v3219 = vunpack.c.l.b16 %v2931
        %v3220 = vunpack.c.l.b16 %v2932
        %v3221 = vunpack.c.l.b16 %v2933
        %v3222 = vunpack.c.l.b16 %v2934
        %v3223 = vunpack.c.l.b16 %v2935
        %v3224 = vunpack.c.l.b16 %v2936
        %v3225 = vunpack.c.l.b16 %v2937
        %v3226 = vunpack.c.l.b16 %v2938
        %v3227 = vunpack.c.l.b16 %v2939
        %v3228 = vunpack.c.l.b16 %v2940
        %v3229 = vunpack.c.l.b16 %v2941
        %v3230 = vunpack.c.l.b16 %v2942
        %v3231 = vunpack.c.l.b16 %v2943
        %v3232 = vunpack.c.l.b16 %v2944
        %v3233 = vunpack.c.l.b16 %v2945
        %v3234 = vunpack.c.l.b16 %v2946
        %v3235 = vunpack.c.l.b16 %v2947
        %v3236 = vunpack.c.l.b16 %v2948
        %v3237 = vunpack.c.l.b16 %v2949
        %v3238 = vunpack.c.l.b16 %v2950
        %v3239 = vunpack.c.l.b16 %v2951
        %v3240 = vunpack.c.l.b16 %v2952
        %v3241 = vunpack.c.l.b16 %v2953
        %v3242 = vunpack.c.l.b16 %v2954
        %v3243 = vunpack.c.l.b16 %v2955
        %v3244 = vunpack.c.l.b16 %v2956
        %v3245 = vunpack.c.l.b16 %v2957
        %v3246 = vunpack.c.l.b16 %v2958
        %v3247 = vunpack.c.l.b16 %v2959
        %v3248 = vunpack.c.l.b16 %v2960
        %v3249 = vunpack.c.l.b16 %v2961
        %v3250 = vunpack.c.l.b16 %v2962
        %v3251 = vunpack.c.l.b16 %v2963
        %v3252 = vunpack.c.l.b16 %v2964
        %v3253 = vunpack.c.l.b16 %v2965
        %v3254 = vpack.c.b16 %v3111, %v3110
        %v3255 = vpack.c.b16 %v3113, %v3112
        %v3256 = vpack.c.b16 %v3115, %v3114
        %v3257 = vpack.c.b16 %v3117, %v3116
        %v3258 = vpack.c.b16 %v3119, %v3118
        %v3259 = vpack.c.b16 %v3121, %v3120
        %v3260 = vpack.c.b16 %v3123, %v3122
        %v3261 = vpack.c.b16 %v3125, %v3124
        %v3262 = vpack.c.b16 %v3127, %v3126
        %v3263 = vpack.c.b16 %v3129, %v3128
        %v3264 = vpack.c.b16 %v3131, %v3130
        %v3265 = vpack.c.b16 %v3133, %v3132
        %v3266 = vpack.c.b16 %v3135, %v3134
        %v3267 = vpack.c.b16 %v3137, %v3136
        %v3268 = vpack.c.b16 %v3139, %v3138
        %v3269 = vpack.c.b16 %v3141, %v3140
        %v3270 = vpack.c.b16 %v3143, %v3142
        %v3271 = vpack.c.b16 %v3145, %v3144
        %v3272 = vpack.c.b16 %v3147, %v3146
        %v3273 = vpack.c.b16 %v3149, %v3148
        %v3274 = vpack.c.b16 %v3151, %v3150
        %v3275 = vpack.c.b16 %v3153, %v3152
        %v3276 = vpack.c.b16 %v3155, %v3154
        %v3277 = vpack.c.b16 %v3157, %v3156
        %v3278 = vpack.c.b16 %v3159, %v3158
        %v3279 = vpack.c.b16 %v3161, %v3160
        %v3280 = vpack.c.b16 %v3163, %v3162
        %v3281 = vpack.c.b16 %v3165, %v3164
        %v3282 = vpack.c.b16 %v3167, %v3166
        %v3283 = vpack.c.b16 %v3169, %v3168
        %v3284 = vpack.c.b16 %v3171, %v3170
        %v3285 = vpack.c.b16 %v3173, %v3172
        %v3286 = vpack.c.b16 %v3175, %v3174
        %v3287 = vpack.c.b16 %v3177, %v3176
        %v3288 = vpack.c.b16 %v3179, %v3178
        %v3289 = vpack.c.b16 %v3181, %v3180
        %v3290 = vpack.c.b16 %v3183, %v3182
        %v3291 = vpack.c.b16 %v3185, %v3184
        %v3292 = vpack.c.b16 %v3187, %v3186
        %v3293 = vpack.c.b16 %v3189, %v3188
        %v3294 = vpack.c.b16 %v3191, %v3190
        %v3295 = vpack.c.b16 %v3193, %v3192
        %v3296 = vpack.c.b16 %v3195, %v3194
        %v3297 = vpack.c.b16 %v3197, %v3196
        %v3298 = vpack.c.b16 %v3199, %v3198
        %v3299 = vpack.c.b16 %v3201, %v3200
        %v3300 = vpack.c.b16 %v3203, %v3202
        %v3301 = vpack.c.b16 %v3205, %v3204
        %v3302 = vpack.c.b16 %v3207, %v3206
        %v3303 = vpack.c.b16 %v3209, %v3208
        %v3304 = vpack.c.b16 %v3211, %v3210
        %v3305 = vpack.c.b16 %v3213, %v3212
        %v3306 = vpack.c.b16 %v3215, %v3214
        %v3307 = vpack.c.b16 %v3217, %v3216
        %v3308 = vpack.c.b16 %v3219, %v3218
        %v3309 = vpack.c.b16 %v3221, %v3220
        %v3310 = vpack.c.b16 %v3223, %v3222
        %v3311 = vpack.c.b16 %v3225, %v3224
        %v3312 = vpack.c.b16 %v3227, %v3226
        %v3313 = vpack.c.b16 %v3229, %v3228
        %v3314 = vpack.c.b16 %v3231, %v3230
        %v3315 = vpack.c.b16 %v3233, %v3232
        %v3316 = vpack.c.b16 %v3235, %v3234
        %v3317 = vpack.c.b16 %v3237, %v3236
        %v3318 = vpack.c.b16 %v3239, %v3238
        %v3319 = vpack.c.b16 %v3241, %v3240
        %v3320 = vpack.c.b16 %v3243, %v3242
        %v3321 = vpack.c.b16 %v3245, %v3244
        %v3322 = vpack.c.b16 %v3247, %v3246
        %v3323 = vpack.c.b16 %v3249, %v3248
        %v3324 = vpack.c.b16 %v3251, %v3250
        %v3325 = vpack.c.b16 %v3253, %v3252
        %3398 = vmatpush.bf16.msra.mxu0 %v3261
        %3399 = vmatpush.bf16.msra.mxu0 %v3260
        %3400 = vmatpush.bf16.msra.mxu0 %v3259
        %3401 = vmatpush.bf16.msra.mxu0 %v3258
        %3402 = vmatpush.bf16.msra.mxu0 %v3257
        %3403 = vmatpush.bf16.msra.mxu0 %v3256
        %3404 = vmatpush.bf16.msra.mxu0 %v3255
        %3405 = vmatpush.bf16.msra.mxu0 %v3254
        %3406 = vmatmul.bf16.gmra.mxu0 %v2750
        %v3407 = vpop.f32.mrf.mxu0
        %v3408 = vadd.f32 0.0, %v3407
        %v3409 = vpop.f32.mrf.mxu0
        %v3410 = vadd.f32 0.0, %v3409
        %3411 = vmatmul.bf16.gmra.mxu0 %v2759
        %v3412 = vpop.f32.mrf.mxu0
        %v3413 = vadd.f32 0.0, %v3412
        %v3414 = vpop.f32.mrf.mxu0
        %v3415 = vadd.f32 0.0, %v3414
        %3416 = vmatmul.bf16.gmra.mxu0 %v2768
        %v3417 = vpop.f32.mrf.mxu0
        %v3418 = vadd.f32 0.0, %v3417
        %v3419 = vpop.f32.mrf.mxu0
        %v3420 = vadd.f32 0.0, %v3419
        %3421 = vmatmul.bf16.gmra.mxu0 %v2777
        %v3422 = vpop.f32.mrf.mxu0
        %v3423 = vadd.f32 0.0, %v3422
        %v3424 = vpop.f32.mrf.mxu0
        %v3425 = vadd.f32 0.0, %v3424
        %3426 = vmatmul.bf16.gmra.mxu0 %v2786
        %v3427 = vpop.f32.mrf.mxu0
        %v3428 = vadd.f32 0.0, %v3427
        %v3429 = vpop.f32.mrf.mxu0
        %v3430 = vadd.f32 0.0, %v3429
        %3431 = vmatmul.bf16.gmra.mxu0 %v2795
        %v3432 = vpop.f32.mrf.mxu0
        %v3433 = vadd.f32 0.0, %v3432
        %v3434 = vpop.f32.mrf.mxu0
        %v3435 = vadd.f32 0.0, %v3434
        %3436 = vmatmul.bf16.gmra.mxu0 %v2804
        %v3437 = vpop.f32.mrf.mxu0
        %v3438 = vadd.f32 0.0, %v3437
        %v3439 = vpop.f32.mrf.mxu0
        %v3440 = vadd.f32 0.0, %v3439
        %3441 = vmatmul.bf16.gmra.mxu0 %v2813
        %v3442 = vpop.f32.mrf.mxu0
        %v3443 = vadd.f32 0.0, %v3442
        %v3444 = vpop.f32.mrf.mxu0
        %v3445 = vadd.f32 0.0, %v3444
        %3446 = vdwg.mxu0
        %3447 = vmatpush.bf16.msra.mxu0 %v3269
        %3448 = vmatpush.bf16.msra.mxu0 %v3268
        %3449 = vmatpush.bf16.msra.mxu0 %v3267
        %3450 = vmatpush.bf16.msra.mxu0 %v3266
        %3451 = vmatpush.bf16.msra.mxu0 %v3265
        %3452 = vmatpush.bf16.msra.mxu0 %v3264
        %3453 = vmatpush.bf16.msra.mxu0 %v3263
        %3454 = vmatpush.bf16.msra.mxu0 %v3262
        %3455 = vmatmul.bf16.gmra.mxu0 %v2751
        %v3456 = vpop.f32.mrf.mxu0
        %v3457 = vadd.f32 %v3408, %v3456
        %v3458 = vpop.f32.mrf.mxu0
        %v3459 = vadd.f32 %v3410, %v3458
        %3460 = vmatmul.bf16.gmra.mxu0 %v2760
        %v3461 = vpop.f32.mrf.mxu0
        %v3462 = vadd.f32 %v3413, %v3461
        %v3463 = vpop.f32.mrf.mxu0
        %v3464 = vadd.f32 %v3415, %v3463
        %3465 = vmatmul.bf16.gmra.mxu0 %v2769
        %v3466 = vpop.f32.mrf.mxu0
        %v3467 = vadd.f32 %v3418, %v3466
        %v3468 = vpop.f32.mrf.mxu0
        %v3469 = vadd.f32 %v3420, %v3468
        %3470 = vmatmul.bf16.gmra.mxu0 %v2778
        %v3471 = vpop.f32.mrf.mxu0
        %v3472 = vadd.f32 %v3423, %v3471
        %v3473 = vpop.f32.mrf.mxu0
        %v3474 = vadd.f32 %v3425, %v3473
        %3475 = vmatmul.bf16.gmra.mxu0 %v2787
        %v3476 = vpop.f32.mrf.mxu0
        %v3477 = vadd.f32 %v3428, %v3476
        %v3478 = vpop.f32.mrf.mxu0
        %v3479 = vadd.f32 %v3430, %v3478
        %3480 = vmatmul.bf16.gmra.mxu0 %v2796
        %v3481 = vpop.f32.mrf.mxu0
        %v3482 = vadd.f32 %v3433, %v3481
        %v3483 = vpop.f32.mrf.mxu0
        %v3484 = vadd.f32 %v3435, %v3483
        %3485 = vmatmul.bf16.gmra.mxu0 %v2805
        %v3486 = vpop.f32.mrf.mxu0
        %v3487 = vadd.f32 %v3438, %v3486
        %v3488 = vpop.f32.mrf.mxu0
        %v3489 = vadd.f32 %v3440, %v3488
        %3490 = vmatmul.bf16.gmra.mxu0 %v2814
        %v3491 = vpop.f32.mrf.mxu0
        %v3492 = vadd.f32 %v3443, %v3491
        %v3493 = vpop.f32.mrf.mxu0
        %v3494 = vadd.f32 %v3445, %v3493
        %3495 = vdwg.mxu0
        %3496 = vmatpush.bf16.msra.mxu0 %v3277
        %3497 = vmatpush.bf16.msra.mxu0 %v3276
        %3498 = vmatpush.bf16.msra.mxu0 %v3275
        %3499 = vmatpush.bf16.msra.mxu0 %v3274
        %3500 = vmatpush.bf16.msra.mxu0 %v3273
        %3501 = vmatpush.bf16.msra.mxu0 %v3272
        %3502 = vmatpush.bf16.msra.mxu0 %v3271
        %3503 = vmatpush.bf16.msra.mxu0 %v3270
        %3504 = vmatmul.bf16.gmra.mxu0 %v2752
        %v3505 = vpop.f32.mrf.mxu0
        %v3506 = vadd.f32 %v3457, %v3505
        %v3507 = vpop.f32.mrf.mxu0
        %v3508 = vadd.f32 %v3459, %v3507
        %3509 = vmatmul.bf16.gmra.mxu0 %v2761
        %v3510 = vpop.f32.mrf.mxu0
        %v3511 = vadd.f32 %v3462, %v3510
        %v3512 = vpop.f32.mrf.mxu0
        %v3513 = vadd.f32 %v3464, %v3512
        %3514 = vmatmul.bf16.gmra.mxu0 %v2770
        %v3515 = vpop.f32.mrf.mxu0
        %v3516 = vadd.f32 %v3467, %v3515
        %v3517 = vpop.f32.mrf.mxu0
        %v3518 = vadd.f32 %v3469, %v3517
        %3519 = vmatmul.bf16.gmra.mxu0 %v2779
        %v3520 = vpop.f32.mrf.mxu0
        %v3521 = vadd.f32 %v3472, %v3520
        %v3522 = vpop.f32.mrf.mxu0
        %v3523 = vadd.f32 %v3474, %v3522
        %3524 = vmatmul.bf16.gmra.mxu0 %v2788
        %v3525 = vpop.f32.mrf.mxu0
        %v3526 = vadd.f32 %v3477, %v3525
        %v3527 = vpop.f32.mrf.mxu0
        %v3528 = vadd.f32 %v3479, %v3527
        %3529 = vmatmul.bf16.gmra.mxu0 %v2797
        %v3530 = vpop.f32.mrf.mxu0
        %v3531 = vadd.f32 %v3482, %v3530
        %v3532 = vpop.f32.mrf.mxu0
        %v3533 = vadd.f32 %v3484, %v3532
        %3534 = vmatmul.bf16.gmra.mxu0 %v2806
        %v3535 = vpop.f32.mrf.mxu0
        %v3536 = vadd.f32 %v3487, %v3535
        %v3537 = vpop.f32.mrf.mxu0
        %v3538 = vadd.f32 %v3489, %v3537
        %3539 = vmatmul.bf16.gmra.mxu0 %v2815
        %v3540 = vpop.f32.mrf.mxu0
        %v3541 = vadd.f32 %v3492, %v3540
        %v3542 = vpop.f32.mrf.mxu0
        %v3543 = vadd.f32 %v3494, %v3542
        %3544 = vdwg.mxu0
        %3545 = vmatpush.bf16.msra.mxu0 %v3285
        %3546 = vmatpush.bf16.msra.mxu0 %v3284
        %3547 = vmatpush.bf16.msra.mxu0 %v3283
        %3548 = vmatpush.bf16.msra.mxu0 %v3282
        %3549 = vmatpush.bf16.msra.mxu0 %v3281
        %3550 = vmatpush.bf16.msra.mxu0 %v3280
        %3551 = vmatpush.bf16.msra.mxu0 %v3279
        %3552 = vmatpush.bf16.msra.mxu0 %v3278
        %3553 = vmatmul.bf16.gmra.mxu0 %v2753
        %v3554 = vpop.f32.mrf.mxu0
        %v3555 = vadd.f32 %v3506, %v3554
        %v3556 = vpop.f32.mrf.mxu0
        %v3557 = vadd.f32 %v3508, %v3556
        %3558 = vmatmul.bf16.gmra.mxu0 %v2762
        %v3559 = vpop.f32.mrf.mxu0
        %v3560 = vadd.f32 %v3511, %v3559
        %v3561 = vpop.f32.mrf.mxu0
        %v3562 = vadd.f32 %v3513, %v3561
        %3563 = vmatmul.bf16.gmra.mxu0 %v2771
        %v3564 = vpop.f32.mrf.mxu0
        %v3565 = vadd.f32 %v3516, %v3564
        %v3566 = vpop.f32.mrf.mxu0
        %v3567 = vadd.f32 %v3518, %v3566
        %3568 = vmatmul.bf16.gmra.mxu0 %v2780
        %v3569 = vpop.f32.mrf.mxu0
        %v3570 = vadd.f32 %v3521, %v3569
        %v3571 = vpop.f32.mrf.mxu0
        %v3572 = vadd.f32 %v3523, %v3571
        %3573 = vmatmul.bf16.gmra.mxu0 %v2789
        %v3574 = vpop.f32.mrf.mxu0
        %v3575 = vadd.f32 %v3526, %v3574
        %v3576 = vpop.f32.mrf.mxu0
        %v3577 = vadd.f32 %v3528, %v3576
        %3578 = vmatmul.bf16.gmra.mxu0 %v2798
        %v3579 = vpop.f32.mrf.mxu0
        %v3580 = vadd.f32 %v3531, %v3579
        %v3581 = vpop.f32.mrf.mxu0
        %v3582 = vadd.f32 %v3533, %v3581
        %3583 = vmatmul.bf16.gmra.mxu0 %v2807
        %v3584 = vpop.f32.mrf.mxu0
        %v3585 = vadd.f32 %v3536, %v3584
        %v3586 = vpop.f32.mrf.mxu0
        %v3587 = vadd.f32 %v3538, %v3586
        %3588 = vmatmul.bf16.gmra.mxu0 %v2816
        %v3589 = vpop.f32.mrf.mxu0
        %v3590 = vadd.f32 %v3541, %v3589
        %v3591 = vpop.f32.mrf.mxu0
        %v3592 = vadd.f32 %v3543, %v3591
        %3593 = vdwg.mxu0
        %3594 = vmatpush.bf16.msra.mxu0 %v3293
        %3595 = vmatpush.bf16.msra.mxu0 %v3292
        %3596 = vmatpush.bf16.msra.mxu0 %v3291
        %3597 = vmatpush.bf16.msra.mxu0 %v3290
        %3598 = vmatpush.bf16.msra.mxu0 %v3289
        %3599 = vmatpush.bf16.msra.mxu0 %v3288
        %3600 = vmatpush.bf16.msra.mxu0 %v3287
        %3601 = vmatpush.bf16.msra.mxu0 %v3286
        %3602 = vmatmul.bf16.gmra.mxu0 %v2754
        %v3603 = vpop.f32.mrf.mxu0
        %v3604 = vadd.f32 %v3555, %v3603
        %v3605 = vpop.f32.mrf.mxu0
        %v3606 = vadd.f32 %v3557, %v3605
        %3607 = vmatmul.bf16.gmra.mxu0 %v2763
        %v3608 = vpop.f32.mrf.mxu0
        %v3609 = vadd.f32 %v3560, %v3608
        %v3610 = vpop.f32.mrf.mxu0
        %v3611 = vadd.f32 %v3562, %v3610
        %3612 = vmatmul.bf16.gmra.mxu0 %v2772
        %v3613 = vpop.f32.mrf.mxu0
        %v3614 = vadd.f32 %v3565, %v3613
        %v3615 = vpop.f32.mrf.mxu0
        %v3616 = vadd.f32 %v3567, %v3615
        %3617 = vmatmul.bf16.gmra.mxu0 %v2781
        %v3618 = vpop.f32.mrf.mxu0
        %v3619 = vadd.f32 %v3570, %v3618
        %v3620 = vpop.f32.mrf.mxu0
        %v3621 = vadd.f32 %v3572, %v3620
        %3622 = vmatmul.bf16.gmra.mxu0 %v2790
        %v3623 = vpop.f32.mrf.mxu0
        %v3624 = vadd.f32 %v3575, %v3623
        %v3625 = vpop.f32.mrf.mxu0
        %v3626 = vadd.f32 %v3577, %v3625
        %3627 = vmatmul.bf16.gmra.mxu0 %v2799
        %v3628 = vpop.f32.mrf.mxu0
        %v3629 = vadd.f32 %v3580, %v3628
        %v3630 = vpop.f32.mrf.mxu0
        %v3631 = vadd.f32 %v3582, %v3630
        %3632 = vmatmul.bf16.gmra.mxu0 %v2808
        %v3633 = vpop.f32.mrf.mxu0
        %v3634 = vadd.f32 %v3585, %v3633
        %v3635 = vpop.f32.mrf.mxu0
        %v3636 = vadd.f32 %v3587, %v3635
        %3637 = vmatmul.bf16.gmra.mxu0 %v2817
        %v3638 = vpop.f32.mrf.mxu0
        %v3639 = vadd.f32 %v3590, %v3638
        %v3640 = vpop.f32.mrf.mxu0
        %v3641 = vadd.f32 %v3592, %v3640
        %3642 = vdwg.mxu0
        %3643 = vmatpush.bf16.msra.mxu0 %v3301
        %3644 = vmatpush.bf16.msra.mxu0 %v3300
        %3645 = vmatpush.bf16.msra.mxu0 %v3299
        %3646 = vmatpush.bf16.msra.mxu0 %v3298
        %3647 = vmatpush.bf16.msra.mxu0 %v3297
        %3648 = vmatpush.bf16.msra.mxu0 %v3296
        %3649 = vmatpush.bf16.msra.mxu0 %v3295
        %3650 = vmatpush.bf16.msra.mxu0 %v3294
        %3651 = vmatmul.bf16.gmra.mxu0 %v2755
        %v3652 = vpop.f32.mrf.mxu0
        %v3653 = vadd.f32 %v3604, %v3652
        %v3654 = vpop.f32.mrf.mxu0
        %v3655 = vadd.f32 %v3606, %v3654
        %3656 = vmatmul.bf16.gmra.mxu0 %v2764
        %v3657 = vpop.f32.mrf.mxu0
        %v3658 = vadd.f32 %v3609, %v3657
        %v3659 = vpop.f32.mrf.mxu0
        %v3660 = vadd.f32 %v3611, %v3659
        %3661 = vmatmul.bf16.gmra.mxu0 %v2773
        %v3662 = vpop.f32.mrf.mxu0
        %v3663 = vadd.f32 %v3614, %v3662
        %v3664 = vpop.f32.mrf.mxu0
        %v3665 = vadd.f32 %v3616, %v3664
        %3666 = vmatmul.bf16.gmra.mxu0 %v2782
        %v3667 = vpop.f32.mrf.mxu0
        %v3668 = vadd.f32 %v3619, %v3667
        %v3669 = vpop.f32.mrf.mxu0
        %v3670 = vadd.f32 %v3621, %v3669
        %3671 = vmatmul.bf16.gmra.mxu0 %v2791
        %v3672 = vpop.f32.mrf.mxu0
        %v3673 = vadd.f32 %v3624, %v3672
        %v3674 = vpop.f32.mrf.mxu0
        %v3675 = vadd.f32 %v3626, %v3674
        %3676 = vmatmul.bf16.gmra.mxu0 %v2800
        %v3677 = vpop.f32.mrf.mxu0
        %v3678 = vadd.f32 %v3629, %v3677
        %v3679 = vpop.f32.mrf.mxu0
        %v3680 = vadd.f32 %v3631, %v3679
        %3681 = vmatmul.bf16.gmra.mxu0 %v2809
        %v3682 = vpop.f32.mrf.mxu0
        %v3683 = vadd.f32 %v3634, %v3682
        %v3684 = vpop.f32.mrf.mxu0
        %v3685 = vadd.f32 %v3636, %v3684
        %3686 = vmatmul.bf16.gmra.mxu0 %v2818
        %v3687 = vpop.f32.mrf.mxu0
        %v3688 = vadd.f32 %v3639, %v3687
        %v3689 = vpop.f32.mrf.mxu0
        %v3690 = vadd.f32 %v3641, %v3689
        %3691 = vdwg.mxu0
        %3692 = vmatpush.bf16.msra.mxu0 %v3309
        %3693 = vmatpush.bf16.msra.mxu0 %v3308
        %3694 = vmatpush.bf16.msra.mxu0 %v3307
        %3695 = vmatpush.bf16.msra.mxu0 %v3306
        %3696 = vmatpush.bf16.msra.mxu0 %v3305
        %3697 = vmatpush.bf16.msra.mxu0 %v3304
        %3698 = vmatpush.bf16.msra.mxu0 %v3303
        %3699 = vmatpush.bf16.msra.mxu0 %v3302
        %3700 = vmatmul.bf16.gmra.mxu0 %v2756
        %v3701 = vpop.f32.mrf.mxu0
        %v3702 = vadd.f32 %v3653, %v3701
        %v3703 = vpop.f32.mrf.mxu0
        %v3704 = vadd.f32 %v3655, %v3703
        %3705 = vmatmul.bf16.gmra.mxu0 %v2765
        %v3706 = vpop.f32.mrf.mxu0
        %v3707 = vadd.f32 %v3658, %v3706
        %v3708 = vpop.f32.mrf.mxu0
        %v3709 = vadd.f32 %v3660, %v3708
        %3710 = vmatmul.bf16.gmra.mxu0 %v2774
        %v3711 = vpop.f32.mrf.mxu0
        %v3712 = vadd.f32 %v3663, %v3711
        %v3713 = vpop.f32.mrf.mxu0
        %v3714 = vadd.f32 %v3665, %v3713
        %3715 = vmatmul.bf16.gmra.mxu0 %v2783
        %v3716 = vpop.f32.mrf.mxu0
        %v3717 = vadd.f32 %v3668, %v3716
        %v3718 = vpop.f32.mrf.mxu0
        %v3719 = vadd.f32 %v3670, %v3718
        %3720 = vmatmul.bf16.gmra.mxu0 %v2792
        %v3721 = vpop.f32.mrf.mxu0
        %v3722 = vadd.f32 %v3673, %v3721
        %v3723 = vpop.f32.mrf.mxu0
        %v3724 = vadd.f32 %v3675, %v3723
        %3725 = vmatmul.bf16.gmra.mxu0 %v2801
        %v3726 = vpop.f32.mrf.mxu0
        %v3727 = vadd.f32 %v3678, %v3726
        %v3728 = vpop.f32.mrf.mxu0
        %v3729 = vadd.f32 %v3680, %v3728
        %3730 = vmatmul.bf16.gmra.mxu0 %v2810
        %v3731 = vpop.f32.mrf.mxu0
        %v3732 = vadd.f32 %v3683, %v3731
        %v3733 = vpop.f32.mrf.mxu0
        %v3734 = vadd.f32 %v3685, %v3733
        %3735 = vmatmul.bf16.gmra.mxu0 %v2819
        %v3736 = vpop.f32.mrf.mxu0
        %v3737 = vadd.f32 %v3688, %v3736
        %v3738 = vpop.f32.mrf.mxu0
        %v3739 = vadd.f32 %v3690, %v3738
        %3740 = vdwg.mxu0
        %3741 = vmatpush.bf16.msra.mxu0 %v3317
        %3742 = vmatpush.bf16.msra.mxu0 %v3316
        %3743 = vmatpush.bf16.msra.mxu0 %v3315
        %3744 = vmatpush.bf16.msra.mxu0 %v3314
        %3745 = vmatpush.bf16.msra.mxu0 %v3313
        %3746 = vmatpush.bf16.msra.mxu0 %v3312
        %3747 = vmatpush.bf16.msra.mxu0 %v3311
        %3748 = vmatpush.bf16.msra.mxu0 %v3310
        %3749 = vmatmul.bf16.gmra.mxu0 %v2757
        %v3750 = vpop.f32.mrf.mxu0
        %v3751 = vadd.f32 %v3702, %v3750
        %v3752 = vpop.f32.mrf.mxu0
        %v3753 = vadd.f32 %v3704, %v3752
        %3754 = vmatmul.bf16.gmra.mxu0 %v2766
        %v3755 = vpop.f32.mrf.mxu0
        %v3756 = vadd.f32 %v3707, %v3755
        %v3757 = vpop.f32.mrf.mxu0
        %v3758 = vadd.f32 %v3709, %v3757
        %3759 = vmatmul.bf16.gmra.mxu0 %v2775
        %v3760 = vpop.f32.mrf.mxu0
        %v3761 = vadd.f32 %v3712, %v3760
        %v3762 = vpop.f32.mrf.mxu0
        %v3763 = vadd.f32 %v3714, %v3762
        %3764 = vmatmul.bf16.gmra.mxu0 %v2784
        %v3765 = vpop.f32.mrf.mxu0
        %v3766 = vadd.f32 %v3717, %v3765
        %v3767 = vpop.f32.mrf.mxu0
        %v3768 = vadd.f32 %v3719, %v3767
        %3769 = vmatmul.bf16.gmra.mxu0 %v2793
        %v3770 = vpop.f32.mrf.mxu0
        %v3771 = vadd.f32 %v3722, %v3770
        %v3772 = vpop.f32.mrf.mxu0
        %v3773 = vadd.f32 %v3724, %v3772
        %3774 = vmatmul.bf16.gmra.mxu0 %v2802
        %v3775 = vpop.f32.mrf.mxu0
        %v3776 = vadd.f32 %v3727, %v3775
        %v3777 = vpop.f32.mrf.mxu0
        %v3778 = vadd.f32 %v3729, %v3777
        %3779 = vmatmul.bf16.gmra.mxu0 %v2811
        %v3780 = vpop.f32.mrf.mxu0
        %v3781 = vadd.f32 %v3732, %v3780
        %v3782 = vpop.f32.mrf.mxu0
        %v3783 = vadd.f32 %v3734, %v3782
        %3784 = vmatmul.bf16.gmra.mxu0 %v2820
        %v3785 = vpop.f32.mrf.mxu0
        %v3786 = vadd.f32 %v3737, %v3785
        %v3787 = vpop.f32.mrf.mxu0
        %v3788 = vadd.f32 %v3739, %v3787
        %3789 = vdwg.mxu0
        %3790 = vmatpush.bf16.msra.mxu0 %v3325
        %3791 = vmatpush.bf16.msra.mxu0 %v3324
        %3792 = vmatpush.bf16.msra.mxu0 %v3323
        %3793 = vmatpush.bf16.msra.mxu0 %v3322
        %3794 = vmatpush.bf16.msra.mxu0 %v3321
        %3795 = vmatpush.bf16.msra.mxu0 %v3320
        %3796 = vmatpush.bf16.msra.mxu0 %v3319
        %3797 = vmatpush.bf16.msra.mxu0 %v3318
        %3798 = vmatmul.bf16.gmra.mxu0 %v2758
        %v3799 = vpop.f32.mrf.mxu0
        %v3800 = vadd.f32 %v3751, %v3799
        %v3801 = vpop.f32.mrf.mxu0
        %v3802 = vadd.f32 %v3753, %v3801
        %3803 = vmatmul.bf16.gmra.mxu0 %v2767
        %v3804 = vpop.f32.mrf.mxu0
        %v3805 = vadd.f32 %v3756, %v3804
        %v3806 = vpop.f32.mrf.mxu0
        %v3807 = vadd.f32 %v3758, %v3806
        %3808 = vmatmul.bf16.gmra.mxu0 %v2776
        %v3809 = vpop.f32.mrf.mxu0
        %v3810 = vadd.f32 %v3761, %v3809
        %v3811 = vpop.f32.mrf.mxu0
        %v3812 = vadd.f32 %v3763, %v3811
        %3813 = vmatmul.bf16.gmra.mxu0 %v2785
        %v3814 = vpop.f32.mrf.mxu0
        %v3815 = vadd.f32 %v3766, %v3814
        %v3816 = vpop.f32.mrf.mxu0
        %v3817 = vadd.f32 %v3768, %v3816
        %3818 = vmatmul.bf16.gmra.mxu0 %v2794
        %v3819 = vpop.f32.mrf.mxu0
        %v3820 = vadd.f32 %v3771, %v3819
        %v3821 = vpop.f32.mrf.mxu0
        %v3822 = vadd.f32 %v3773, %v3821
        %3823 = vmatmul.bf16.gmra.mxu0 %v2803
        %v3824 = vpop.f32.mrf.mxu0
        %v3825 = vadd.f32 %v3776, %v3824
        %v3826 = vpop.f32.mrf.mxu0
        %v3827 = vadd.f32 %v3778, %v3826
        %3828 = vmatmul.bf16.gmra.mxu0 %v2812
        %v3829 = vpop.f32.mrf.mxu0
        %v3830 = vadd.f32 %v3781, %v3829
        %v3831 = vpop.f32.mrf.mxu0
        %v3832 = vadd.f32 %v3783, %v3831
        %3833 = vmatmul.bf16.gmra.mxu0 %v2821
        %v3834 = vpop.f32.mrf.mxu0
        %v3835 = vadd.f32 %v3786, %v3834
        %v3836 = vpop.f32.mrf.mxu0
        %v3837 = vadd.f32 %v3788, %v3836
        %3838 = vdwg.mxu0
        %v3839 = vpack.c.bf16 %v3802, %v3800
        %v3840 = vpack.c.bf16 %v3807, %v3805
        %v3841 = vpack.c.bf16 %v3812, %v3810
        %v3842 = vpack.c.bf16 %v3817, %v3815
        %v3843 = vpack.c.bf16 %v3822, %v3820
        %v3844 = vpack.c.bf16 %v3827, %v3825
        %v3845 = vpack.c.bf16 %v3832, %v3830
        %v3846 = vpack.c.bf16 %v3837, %v3835
        %v3847 = vld [vmem:[%s8] sm:$0xf]
        %v3848 = vld [vmem:[%s8 + $0x4] sm:$0xf]
        %v3849 = vld [vmem:[%s8 + $0x8] sm:$0xf]
        %v3850 = vld [vmem:[%s8 + $0xc] sm:$0xf]
        %v3851 = vld [vmem:[%s8 + $0x10] sm:$0xf]
        %v3852 = vld [vmem:[%s8 + $0x14] sm:$0xf]
        %v3853 = vld [vmem:[%s8 + $0x18] sm:$0xf]
        %v3854 = vld [vmem:[%s8 + $0x1c] sm:$0xf]
        %v3855 = vld [vmem:[%s8 + $0x20] sm:$0xf]
        %v3856 = vld [vmem:[%s8 + $0x24] sm:$0xf]
        %v3857 = vld [vmem:[%s8 + $0x28] sm:$0xf]
        %v3858 = vld [vmem:[%s8 + $0x2c] sm:$0xf]
        %v3859 = vld [vmem:[%s8 + $0x30] sm:$0xf]
        %v3860 = vld [vmem:[%s8 + $0x34] sm:$0xf]
        %v3861 = vld [vmem:[%s8 + $0x38] sm:$0xf]
        %v3862 = vld [vmem:[%s8 + $0x3c] sm:$0xf]
        %v3879 = vunpack.c.l.b16 %v3847
        %v3880 = vunpack.c.l.b16 %v3848
        %v3881 = vunpack.c.l.b16 %v3849
        %v3882 = vunpack.c.l.b16 %v3850
        %v3883 = vunpack.c.l.b16 %v3851
        %v3884 = vunpack.c.l.b16 %v3852
        %v3885 = vunpack.c.l.b16 %v3853
        %v3886 = vunpack.c.l.b16 %v3854
        %v3887 = vunpack.c.l.b16 %v3855
        %v3888 = vunpack.c.l.b16 %v3856
        %v3889 = vunpack.c.l.b16 %v3857
        %v3890 = vunpack.c.l.b16 %v3858
        %v3891 = vunpack.c.l.b16 %v3859
        %v3892 = vunpack.c.l.b16 %v3860
        %v3893 = vunpack.c.l.b16 %v3861
        %v3894 = vunpack.c.l.b16 %v3862
        %v3895 = vpack.c.b16 %v3880, %v3879
        %v3896 = vpack.c.b16 %v3882, %v3881
        %v3897 = vpack.c.b16 %v3884, %v3883
        %v3898 = vpack.c.b16 %v3886, %v3885
        %v3899 = vpack.c.b16 %v3888, %v3887
        %v3900 = vpack.c.b16 %v3890, %v3889
        %v3901 = vpack.c.b16 %v3892, %v3891
        %v3902 = vpack.c.b16 %v3894, %v3893
        %3911 = vmatpush.bf16.msra.mxu0 %v3902
        %3912 = vmatpush.bf16.msra.mxu0 %v3901
        %3913 = vmatpush.bf16.msra.mxu0 %v3900
        %3914 = vmatpush.bf16.msra.mxu0 %v3899
        %3915 = vmatpush.bf16.msra.mxu0 %v3898
        %3916 = vmatpush.bf16.msra.mxu0 %v3897
        %3917 = vmatpush.bf16.msra.mxu0 %v3896
        %3918 = vmatpush.bf16.msra.mxu0 %v3895
        %3919 = vmatmul.bf16.gmra.mxu0 %v2475
        %v3920 = vpop.f32.mrf.mxu0
        %v3921 = vadd.f32 0.0, %v3920
        %v3922 = vpop.f32.mrf.mxu0
        %v3923 = vadd.f32 0.0, %v3922
        %3924 = vmatmul.bf16.gmra.mxu0 %v2476
        %v3925 = vpop.f32.mrf.mxu0
        %v3926 = vadd.f32 0.0, %v3925
        %v3927 = vpop.f32.mrf.mxu0
        %v3928 = vadd.f32 0.0, %v3927
        %3929 = vdwg.mxu0
        %3930 = vmatpush.bf16.msra.mxu0 %v3846
        %3931 = vmatpush.bf16.msra.mxu0 %v3845
        %3932 = vmatpush.bf16.msra.mxu0 %v3844
        %3933 = vmatpush.bf16.msra.mxu0 %v3843
        %3934 = vmatpush.bf16.msra.mxu0 %v3842
        %3935 = vmatpush.bf16.msra.mxu0 %v3841
        %3936 = vmatpush.bf16.msra.mxu0 %v3840
        %3937 = vmatpush.bf16.msra.mxu0 %v3839
        %3938 = vmatmul.bf16.gmra.mxu0 %v734
        %v3939 = vpop.f32.mrf.mxu0
        %v3940 = vadd.f32 %v3921, %v3939
        %v3941 = vpop.f32.mrf.mxu0
        %v3942 = vadd.f32 %v3923, %v3941
        %3943 = vmatmul.bf16.gmra.mxu0 %v735
        %v3944 = vpop.f32.mrf.mxu0
        %v3945 = vadd.f32 %v3926, %v3944
        %v3946 = vpop.f32.mrf.mxu0
        %v3947 = vadd.f32 %v3928, %v3946
        %3948 = vdwg.mxu0
        %v3949 = vld [vmem:[%s9] sm:$0x1]
        %v3951 = vperm.slane %v3949, 0
        %v3953 = vadd.f32 %v3940, %v3951
        %v3954 = vadd.f32 %v3942, %v3951
        %v3955 = vadd.f32 %v3945, %v3951
        %v3956 = vadd.f32 %v3947, %v3951
        %v3957 = vmax.f32 %v3953, 0.0
        %v3958 = vmax.f32 %v3954, 0.0
        %v3959 = vmax.f32 %v3955, 0.0
        %v3960 = vmax.f32 %v3956, 0.0
        %v3961 = vpack.c.bf16 %v3958, %v3957
        %v3962 = vpack.c.bf16 %v3960, %v3959
        %v3963 = vld [vmem:[%s10] sm:$0xf]
        %v3964 = vld [vmem:[%s10 + $0x4] sm:$0xf]
        %v3965 = vld [vmem:[%s10 + $0x8] sm:$0xf]
        %v3966 = vld [vmem:[%s10 + $0xc] sm:$0xf]
        %v3967 = vld [vmem:[%s10 + $0x10] sm:$0xf]
        %v3968 = vld [vmem:[%s10 + $0x14] sm:$0xf]
        %v3969 = vld [vmem:[%s10 + $0x18] sm:$0xf]
        %v3970 = vld [vmem:[%s10 + $0x1c] sm:$0xf]
        %v3971 = vld [vmem:[%s10 + $0x20] sm:$0xf]
        %v3972 = vld [vmem:[%s10 + $0x24] sm:$0xf]
        %v3973 = vld [vmem:[%s10 + $0x28] sm:$0xf]
        %v3974 = vld [vmem:[%s10 + $0x2c] sm:$0xf]
        %v3975 = vld [vmem:[%s10 + $0x30] sm:$0xf]
        %v3976 = vld [vmem:[%s10 + $0x34] sm:$0xf]
        %v3977 = vld [vmem:[%s10 + $0x38] sm:$0xf]
        %v3978 = vld [vmem:[%s10 + $0x3c] sm:$0xf]
        %v3979 = vld [vmem:[%s11] sm:$0x1]
        %v3981 = vperm.slane %v3979, 0
        %v3999 = vunpack.c.l.b16 %v3963
        %v4000 = vunpack.c.l.b16 %v3964
        %v4001 = vunpack.c.l.b16 %v3965
        %v4002 = vunpack.c.l.b16 %v3966
        %v4003 = vunpack.c.l.b16 %v3967
        %v4004 = vunpack.c.l.b16 %v3968
        %v4005 = vunpack.c.l.b16 %v3969
        %v4006 = vunpack.c.l.b16 %v3970
        %v4007 = vunpack.c.l.b16 %v3971
        %v4008 = vunpack.c.l.b16 %v3972
        %v4009 = vunpack.c.l.b16 %v3973
        %v4010 = vunpack.c.l.b16 %v3974
        %v4011 = vunpack.c.l.b16 %v3975
        %v4012 = vunpack.c.l.b16 %v3976
        %v4013 = vunpack.c.l.b16 %v3977
        %v4014 = vunpack.c.l.b16 %v3978
        %v4015 = vpack.c.b16 %v4000, %v3999
        %v4016 = vpack.c.b16 %v4002, %v4001
        %v4017 = vpack.c.b16 %v4004, %v4003
        %v4018 = vpack.c.b16 %v4006, %v4005
        %v4019 = vpack.c.b16 %v4008, %v4007
        %v4020 = vpack.c.b16 %v4010, %v4009
        %v4021 = vpack.c.b16 %v4012, %v4011
        %v4022 = vpack.c.b16 %v4014, %v4013
        %4031 = vmatpush.bf16.msra.mxu0 %v4022
        %4032 = vmatpush.bf16.msra.mxu0 %v4021
        %4033 = vmatpush.bf16.msra.mxu0 %v4020
        %4034 = vmatpush.bf16.msra.mxu0 %v4019
        %4035 = vmatpush.bf16.msra.mxu0 %v4018
        %4036 = vmatpush.bf16.msra.mxu0 %v4017
        %4037 = vmatpush.bf16.msra.mxu0 %v4016
        %4038 = vmatpush.bf16.msra.mxu0 %v4015
        %4039 = vmatmul.bf16.gmra.mxu0 %v3961
        %v4040 = vpop.f32.mrf.mxu0
        %v4041 = vadd.f32 %v3981, %v4040
        %v4042 = vpop.f32.mrf.mxu0
        %v4043 = vadd.f32 %v3981, %v4042
        %4044 = vmatmul.bf16.gmra.mxu0 %v3962
        %v4045 = vpop.f32.mrf.mxu0
        %v4046 = vadd.f32 %v3981, %v4045
        %v4047 = vpop.f32.mrf.mxu0
        %v4048 = vadd.f32 %v3981, %v4047
        %4049 = vdwg.mxu0
        %v4050 = vmax.f32 %v4041, 0.0
        %v4051 = vmax.f32 %v4043, 0.0
        %v4052 = vmax.f32 %v4046, 0.0
        %v4053 = vmax.f32 %v4048, 0.0
        %v4054 = vpack.c.bf16 %v4051, %v4050
        %v4055 = vpack.c.bf16 %v4053, %v4052
        %v4056 = vld [vmem:[#allocation8] sm:$0xf]
        %v4057 = vld [vmem:[#allocation8 + $0x4] sm:$0xf]
        %v4058 = vld [vmem:[#allocation8 + $0x8] sm:$0xf]
        %v4059 = vld [vmem:[#allocation8 + $0xc] sm:$0xf]
        %v4060 = vld [vmem:[#allocation8 + $0x10] sm:$0xf]
        %v4061 = vld [vmem:[#allocation8 + $0x14] sm:$0xf]
        %v4062 = vld [vmem:[#allocation8 + $0x18] sm:$0xf]
        %v4063 = vld [vmem:[#allocation8 + $0x1c] sm:$0xf]
        %v4064 = vld [vmem:[#allocation8 + $0x20] sm:$0xf]
        %v4065 = vld [vmem:[#allocation8 + $0x24] sm:$0xf]
        %v4066 = vld [vmem:[#allocation8 + $0x28] sm:$0xf]
        %v4067 = vld [vmem:[#allocation8 + $0x2c] sm:$0xf]
        %v4068 = vld [vmem:[#allocation8 + $0x30] sm:$0xf]
        %v4069 = vld [vmem:[#allocation8 + $0x34] sm:$0xf]
        %v4070 = vld [vmem:[#allocation8 + $0x38] sm:$0xf]
        %v4071 = vld [vmem:[#allocation8 + $0x3c] sm:$0xf]
        %v4072 = vld [vmem:[%s13] sm:$0x1]
        %v4074 = vperm.slane %v4072, 0
        %v4092 = vunpack.c.l.b16 %v4056
        %v4093 = vunpack.c.l.b16 %v4057
        %v4094 = vunpack.c.l.b16 %v4058
        %v4095 = vunpack.c.l.b16 %v4059
        %v4096 = vunpack.c.l.b16 %v4060
        %v4097 = vunpack.c.l.b16 %v4061
        %v4098 = vunpack.c.l.b16 %v4062
        %v4099 = vunpack.c.l.b16 %v4063
        %v4100 = vunpack.c.l.b16 %v4064
        %v4101 = vunpack.c.l.b16 %v4065
        %v4102 = vunpack.c.l.b16 %v4066
        %v4103 = vunpack.c.l.b16 %v4067
        %v4104 = vunpack.c.l.b16 %v4068
        %v4105 = vunpack.c.l.b16 %v4069
        %v4106 = vunpack.c.l.b16 %v4070
        %v4107 = vunpack.c.l.b16 %v4071
        %v4108 = vpack.c.b16 %v4093, %v4092
        %v4109 = vpack.c.b16 %v4095, %v4094
        %v4110 = vpack.c.b16 %v4097, %v4096
        %v4111 = vpack.c.b16 %v4099, %v4098
        %v4112 = vpack.c.b16 %v4101, %v4100
        %v4113 = vpack.c.b16 %v4103, %v4102
        %v4114 = vpack.c.b16 %v4105, %v4104
        %v4115 = vpack.c.b16 %v4107, %v4106
        %4124 = vmatpush.bf16.msra.mxu0 %v4115
        %4125 = vmatpush.bf16.msra.mxu0 %v4114
        %4126 = vmatpush.bf16.msra.mxu0 %v4113
        %4127 = vmatpush.bf16.msra.mxu0 %v4112
        %4128 = vmatpush.bf16.msra.mxu0 %v4111
        %4129 = vmatpush.bf16.msra.mxu0 %v4110
        %4130 = vmatpush.bf16.msra.mxu0 %v4109
        %4131 = vmatpush.bf16.msra.mxu0 %v4108
        %4132 = vmatmul.bf16.gmra.mxu0 %v4054
        %v4133 = vpop.f32.mrf.mxu0
        %v4134 = vadd.f32 %v4074, %v4133
        %v4135 = vpop.f32.mrf.mxu0
        %v4136 = vadd.f32 %v4074, %v4135
        %4137 = vmatmul.bf16.gmra.mxu0 %v4055
        %v4138 = vpop.f32.mrf.mxu0
        %v4139 = vadd.f32 %v4074, %v4138
        %v4140 = vpop.f32.mrf.mxu0
        %v4141 = vadd.f32 %v4074, %v4140
        %4142 = vdwg.mxu0
        %4143 = vst [vmem:[%s578] sm:$0xff] %v4134
        %4144 = vst [vmem:[%s578 + $0x8] sm:$0xff] %v4136
        %4145 = vst [vmem:[%s578 + $0x10] sm:$0xff] %v4139
        %4146 = vst [vmem:[%s578 + $0x18] sm:$0xff] %v4141
        %s4147 = sand.u32 %s355, 1
        %s4148 = scalar_lea.sflag [#allocation4], %s4147
        %s4149 = sand.u32 %s355, 1
        %s4150 = smul.addr %s4149, 32
        %s4151 = scalar_lea.vmem [#allocation10], %s4150
        // Predicated region
        $region93: #{tpu_custom_call.1} parent=75 // pred_check
          %p4152 = pneg %p365
        $region94: #{tpu_custom_call.1} parent=75 // pred_check_branch
          %4154 = sbr.rel (%p4152) target = $region96
        $region95: #{tpu_custom_call.1} parent=75 // pred_region
          %4156 = vsyncadd %s4148, 0
          %s4157 = smul.addr %s33, 4
          %s4158 = smul.addr %s4157, 8
          %s4159 = scalar_lea.hbm %s14, %s4158
          %s4160 = sshll.u32 %s4151, 4
          %s4161 = int_to_ptr.vmem [resolvable:$true] %s4160
          %s4162 = sshll.u32 %s4159, 4
          %s4163 = int_to_ptr.hbm [resolvable:$true] %s4162
          %4168 = dma.vmem_to_hbm [thread:$0]  %s4161, 512, %s4163, %s4148, 128, 128, 8
        $region96: #{tpu_custom_call.1} parent=75 // pred_fallthru
          _
      $region76: #{tpu_custom_call.1} parent=5 // pred_fallthru
        _
      %p4169 = scmp.le.s32.totalorder 2, %s28
      // Predicated region
      $region97: #{tpu_custom_call.1} parent=5 // pred_check
        %p4170 = pneg %p4169
      $region98: #{tpu_custom_call.1} parent=5 // pred_check_branch
        %4172 = sbr.rel (%p4170) target = $region100
      $region99: #{tpu_custom_call.1} parent=5 // pred_region
        %s4173 = ssub.s32 %s28, 2
        // Predicated region
        $region101: #{tpu_custom_call.1} parent=99 // pred_check
          %p4174 = pneg %p371
        $region102: #{tpu_custom_call.1} parent=99 // pred_check_branch
          %4176 = sbr.rel (%p4174) target = $region104
        $region103: #{tpu_custom_call.1} parent=99 // pred_region
          %s4177 = sand.u32 %s356, 1
          %s4178 = scalar_lea.sflag [#allocation4], %s4177
          %s4179 = sand.u32 %s356, 1
          %s4180 = smul.addr %s4179, 32
          %s4181 = scalar_lea.vmem [#allocation10], %s4180
          %4183 = dma.done %s4178, 512
        $region104: #{tpu_custom_call.1} parent=99 // pred_fallthru
          _
      $region100: #{tpu_custom_call.1} parent=5 // pred_fallthru
        _
    $region6: #{tpu_custom_call.1} parent=1 // loop_footer
      %s32 = sadd.s32 1, %s28
    $region7: #{tpu_custom_call.1} parent=1 // loop_footer_branch
      %27 = sbr.rel target = $region3
    $region8: #{tpu_custom_call.1} parent=1 // loop_exit
      _
    %4184 = vsyncpa [#allocation3], 1
    %s4185 = scalar_lea.sflag [#allocation3], 1
    %4186 = vsyncpa %s4185, 1
    %4187 = vsyncpa [#allocation6], 1
    %4188 = vsyncpa [#allocation9], 1
    %4189 = vsyncpa [#allocation4], 1
    %s4190 = scalar_lea.sflag [#allocation4], 1
    %4191 = vsyncpa %s4190, 1

</llo_original>
